<compile_context>
chip_gen: v7x
topology: tpu7x:2x2x1
jax: 0.10.0
libtpu: 0.0.40
codegen_flags: <defaults>
</compile_context>

<pallas_src>
import functools
import math

import jax
import jax.numpy as jnp
from jax.experimental import pallas as pl
from jax.experimental.pallas import tpu as pltpu


MATMUL_DTYPE = jnp.bfloat16   # MXU input dtype (accumulation is always float32)
ACT_DTYPE = jnp.bfloat16      # inter-layer activation storage dtype (halves HBM traffic)


# ----------------------------------------------------------------------------- hw-aware sizing

def _device_kind():
    try:
        return jax.devices()[0].device_kind.lower()
    except Exception:
        return ""


def _physical_vmem_bytes():
    try:
        return int(pltpu.get_tpu_info().vmem_capacity_bytes)
    except Exception:
        return 128 * 1024 * 1024


_PHYS_VMEM = _physical_vmem_bytes()
# v7x has 64 MiB physical VMEM -> cap the scoped limit at 48 MiB; v5e/v6e (128 MiB) -> 96 MiB.
_VMEM_LIMIT = min(96 * 1024 * 1024, _PHYS_VMEM * 3 // 4)
# v6e reaches ~85% of the HBM roofline with 512-row tiles; keep 256 on v5e/v7x.
_FFN_ROW_PREF = 512 if "v6" in _device_kind() else 256
_ATTN_Q_TILE = 256            # query-row block for the fused attention kernel


def _compiler_params(dim_sem):
    return pltpu.CompilerParams(
        dimension_semantics=dim_sem,
        vmem_limit_bytes=_VMEM_LIMIT,
    )


def _row_tile(m, pref):
    """Sublane-dim tile: full dim if small, else a fixed 8-aligned block.
    The grid uses pl.cdiv and BlockSpec handles the ragged last block."""
    return m if m <= pref else pref


def _col_tile(n, pref=512):
    """Lane-dim tile: full dim if small, else a 128-multiple block."""
    return n if n <= pref else pref


# ----------------------------------------------------------------------------- single-buffered weights

def _probe_kernel(x_ref, o_ref):
    o_ref[...] = x_ref[...]


def _buffered_single_supported():
    """pipeline_mode=pl.Buffered(1) halves resident VMEM for constant-index weight
    blocks; probe once so older runtimes fall back to default double buffering."""
    try:
        spec = pl.BlockSpec((8, 128), lambda i: (0, 0), pipeline_mode=pl.Buffered(1))
        out = pl.pallas_call(
            _probe_kernel,
            out_shape=jax.ShapeDtypeStruct((8, 128), jnp.float32),
            grid=(1,),
            in_specs=[spec],
            out_specs=pl.BlockSpec((8, 128), lambda i: (0, 0)),
        )(jnp.zeros((8, 128), jnp.float32))
        jax.block_until_ready(out)
        return True
    except Exception:
        return False


_SINGLE_BUFFER_OK = _buffered_single_supported()


def _const_index_map(n_block_dims, grid_rank):
    zeros = (0,) * n_block_dims
    if grid_rank == 1:
        return lambda i: zeros
    if grid_rank == 2:
        return lambda i, j: zeros
    return lambda *args: zeros


def _const_spec(shape, grid_rank):
    """BlockSpec for a weight/bias whose block is identical for every grid step."""
    index_map = _const_index_map(len(shape), grid_rank)
    if _SINGLE_BUFFER_OK:
        return pl.BlockSpec(shape, index_map, pipeline_mode=pl.Buffered(1))
    return pl.BlockSpec(shape, index_map)


# ----------------------------------------------------------------------------- kernels

def _mha_ln_kernel(*refs, heads, causal, compute_dtype):
    """Fused multi-head attention + output projection + residual + LayerNorm for one
    (batch, query-tile) grid step.

    Ref order: xq_tile, xkv_full [, key_mask], wqkv (E,3E), wo (E,E), bo, gamma, beta,
               out, k_scratch, v_scratch.
    K/V for the whole key/value sequence are projected once per batch element (at
    query-tile 0) into VMEM scratch and reused by the remaining query tiles.
    """
    idx = 0
    xq_ref = refs[idx]; idx += 1
    xkv_ref = refs[idx]; idx += 1
    mask_ref = None
    if not causal:
        mask_ref = refs[idx]; idx += 1
    wqkv_ref, wo_ref, bo_ref, g_ref, beta_ref, o_ref, k_scr, v_scr = refs[idx:]

    E = xq_ref.shape[-1]
    hd = E // heads
    qi = pl.program_id(1)

    @pl.when(qi == 0)
    def _():  # project K/V for the full key sequence once per batch element
        xkv = xkv_ref[0].astype(compute_dtype)                       # (Lkv, E)
        k_scr[...] = jnp.dot(xkv, wqkv_ref[:, E:2 * E],
                             preferred_element_type=jnp.float32).astype(compute_dtype)
        v_scr[...] = jnp.dot(xkv, wqkv_ref[:, 2 * E:3 * E],
                             preferred_element_type=jnp.float32).astype(compute_dtype)

    xq32 = xq_ref[0].astype(jnp.float32)                             # residual path (f32)
    # 1/sqrt(embed_size) softmax scale is folded into the Q columns of wqkv.
    q = jnp.dot(xq_ref[0].astype(compute_dtype), wqkv_ref[:, 0:E],
                preferred_element_type=jnp.float32)                  # (tq, E)
    k = k_scr[...]
    v = v_scr[...]
    tq = q.shape[0]
    Lk = k.shape[0]

    if causal:
        # causal mask generated in-kernel (never materialized in HBM)
        row = qi * tq + jax.lax.broadcasted_iota(jnp.int32, (tq, Lk), 0)
        col = jax.lax.broadcasted_iota(jnp.int32, (tq, Lk), 1)
        masked = col > row
    else:
        masked = mask_ref[0] == 0                                    # (1, Lk) key padding

    head_outs = []
    for h in range(heads):
        lo, hi = h * hd, (h + 1) * hd
        qh = q[:, lo:hi].astype(compute_dtype)
        kh = k[:, lo:hi]
        vh = v[:, lo:hi]
        # contract last axes of both -> no explicit K transpose
        e = jax.lax.dot_general(qh, kh, (((1,), (1,)), ((), ())),
                                preferred_element_type=jnp.float32)  # (tq, Lk) f32
        e = jnp.where(masked, jnp.float32(-1e20), e)                 # masked_fill (reference)
        e = e - jnp.max(e, axis=-1, keepdims=True)
        p = jnp.exp(e)
        inv = pl.reciprocal(jnp.sum(p, axis=-1, keepdims=True), approx=True)
        att = p * inv
        head_outs.append(jnp.dot(att.astype(compute_dtype), vh,
                                 preferred_element_type=jnp.float32))  # (tq, hd)

    concat = jnp.concatenate(head_outs, axis=-1)                     # (tq, E)
    proj = jnp.dot(concat.astype(compute_dtype), wo_ref[...],
                   preferred_element_type=jnp.float32) + bo_ref[...]

    # residual + LayerNorm (torch defaults: biased variance, eps=1e-5), f32 math
    y = proj + xq32
    mu = jnp.mean(y, axis=-1, keepdims=True)
    var = jnp.mean(jnp.square(y - mu), axis=-1, keepdims=True)
    o_ref[0] = ((y - mu) * jax.lax.rsqrt(var + 1e-5) * g_ref[...]
                + beta_ref[...]).astype(o_ref.dtype)


def _ffn_ln_kernel(x_ref, w1_ref, b1_ref, w2_ref, b2_ref, g_ref, beta_ref, o_ref,
                   *, compute_dtype):
    """Fused Linear -> ReLU -> Linear -> residual add -> LayerNorm (one M tile)."""
    x32 = x_ref[...].astype(jnp.float32)                             # residual (f32)
    h = jnp.dot(x_ref[...].astype(compute_dtype), w1_ref[...],
                preferred_element_type=jnp.float32) + b1_ref[...]
    h = jnp.maximum(h, 0.0)
    f = jnp.dot(h.astype(compute_dtype), w2_ref[...],
                preferred_element_type=jnp.float32) + b2_ref[...]
    y = f + x32
    mu = jnp.mean(y, axis=-1, keepdims=True)
    var = jnp.mean(jnp.square(y - mu), axis=-1, keepdims=True)
    o_ref[...] = ((y - mu) * jax.lax.rsqrt(var + 1e-5) * g_ref[...]
                  + beta_ref[...]).astype(o_ref.dtype)


def _linear_kernel(x_ref, w_ref, b_ref, o_ref, *, compute_dtype):
    """(tm, K) @ (K, tn) + bias, f32 accumulate."""
    o_ref[...] = (jnp.dot(x_ref[...].astype(compute_dtype), w_ref[...],
                          preferred_element_type=jnp.float32) + b_ref[...])


# ----------------------------------------------------------------------------- wrappers

def fused_attention_ln(xq, xkv, key_mask, wqkv_t, wo_t, bo, gamma, beta, *, heads, causal):
    """Attention + out-projection + residual + LayerNorm, grid over (batch, q tiles).

    xq:       (B, Lq, E) queries (also the residual input), bf16.
    xkv:      (B, Lkv, E) key/value source (pass xq itself for self-attention).
    key_mask: (B, 1, Lkv) int32 key-padding mask, or None when causal.
    wqkv_t:   (E, 3E) packed [Q|K|V] weights (transposed, scale folded into Q, bf16).
    """
    B, Lq, E = xq.shape
    Lkv = xkv.shape[1]
    tq = _row_tile(Lq, _ATTN_Q_TILE)
    nq = pl.cdiv(Lq, tq)

    inputs = [xq, xkv]
    in_specs = [
        pl.BlockSpec((1, tq, E), lambda b, qi: (b, qi, 0)),
        pl.BlockSpec((1, Lkv, E), lambda b, qi: (b, 0, 0)),
    ]
    if not causal:
        inputs.append(key_mask)
        in_specs.append(pl.BlockSpec((1, 1, Lkv), lambda b, qi: (b, 0, 0)))
    inputs += [wqkv_t, wo_t, bo, gamma, beta]
    in_specs += [
        _const_spec((E, 3 * E), 2),
        _const_spec((E, E), 2),
        _const_spec((1, E), 2),
        _const_spec((1, E), 2),
        _const_spec((1, E), 2),
    ]

    kernel = functools.partial(_mha_ln_kernel, heads=heads, causal=causal,
                               compute_dtype=MATMUL_DTYPE)
    return pl.pallas_call(
        kernel,
        out_shape=jax.ShapeDtypeStruct((B, Lq, E), ACT_DTYPE),
        grid=(B, nq),
        in_specs=in_specs,
        out_specs=pl.BlockSpec((1, tq, E), lambda b, qi: (b, qi, 0)),
        scratch_shapes=[pltpu.VMEM((Lkv, E), MATMUL_DTYPE),
                        pltpu.VMEM((Lkv, E), MATMUL_DTYPE)],
        # qi must stay "arbitrary": K/V scratch computed at qi==0 is reused by later tiles.
        compiler_params=_compiler_params(("parallel", "arbitrary")),
    )(*inputs)


def fused_ffn_ln(x, w1_t, b1, w2_t, b2, gamma, beta):
    """LayerNorm(FFN(x) + x); tiled over rows of the flattened activation."""
    B, L, E = x.shape
    H = w1_t.shape[1]
    M = B * L
    x2 = x.reshape(M, E)
    tm = _row_tile(M, _FFN_ROW_PREF)
    out = pl.pallas_call(
        functools.partial(_ffn_ln_kernel, compute_dtype=MATMUL_DTYPE),
        out_shape=jax.ShapeDtypeStruct((M, E), ACT_DTYPE),
        grid=(pl.cdiv(M, tm),),
        in_specs=[
            pl.BlockSpec((tm, E), lambda i: (i, 0)),
            _const_spec((E, H), 1),
            _const_spec((1, H), 1),
            _const_spec((H, E), 1),
            _const_spec((1, E), 1),
            _const_spec((1, E), 1),
            _const_spec((1, E), 1),
        ],
        out_specs=pl.BlockSpec((tm, E), lambda i: (i, 0)),
        compiler_params=_compiler_params(("parallel",)),
    )(x2, w1_t, b1, w2_t, b2, gamma, beta)
    return out.reshape(B, L, E)


def pallas_linear(x2d, w_t, b_row):
    """Tiled linear: x2d (M, K) @ w_t (K, N) + b_row (1, N), grid over (M, N).
    N is padded to a multiple of 128 at prepare_params time (lane-dense stores)."""
    M, K = x2d.shape
    N = w_t.shape[1]
    tm = _row_tile(M, _FFN_ROW_PREF)
    tn = _col_tile(N)
    return pl.pallas_call(
        functools.partial(_linear_kernel, compute_dtype=MATMUL_DTYPE),
        out_shape=jax.ShapeDtypeStruct((M, N), jnp.float32),
        grid=(pl.cdiv(M, tm), pl.cdiv(N, tn)),
        in_specs=[
            pl.BlockSpec((tm, K), lambda i, j: (i, 0)),
            pl.BlockSpec((K, tn), lambda i, j: (0, j)),
            pl.BlockSpec((1, tn), lambda i, j: (0, j)),
        ],
        out_specs=pl.BlockSpec((tm, tn), lambda i, j: (i, j)),
        compiler_params=_compiler_params(("parallel", "parallel")),
    )(x2d, w_t, b_row)


# ----------------------------------------------------------------------------- model pieces

def transformer_block_fwd(p, kv_input, query, key_mask, heads):
    """TransformerBlock: attention + norm1 (fused) then FFN + norm2 (fused)."""
    a = p["attn"]
    x1 = fused_attention_ln(query, kv_input, key_mask,
                            a["wqkv_t"], a["wo_t"], a["bo"], p["g1"], p["b1"],
                            heads=heads, causal=False)
    return fused_ffn_ln(x1, p["w1_t"], p["bb1"], p["w2_t"], p["bb2"], p["g2"], p["b2"])


def encoder_fwd(p, src, src_key_mask, heads):
    Ls = src.shape[1]
    x = (p["word_emb"][src] + p["pos_emb"][:Ls][None, :, :]).astype(ACT_DTYPE)
    out = x
    for lp in p["layers"]:
        # Faithful to the torch reference: every encoder layer consumes the ORIGINAL x
        # and only the last layer's output is returned.
        out = transformer_block_fwd(lp, x, x, src_key_mask, heads)
    return out


def decoder_fwd(p, target, enc_out, src_key_mask, heads, tgt_vocab):
    B, Lt = target.shape
    x = (p["word_emb"][target] + p["pos_emb"][:Lt][None, :, :]).astype(ACT_DTYPE)
    for lp in p["layers"]:
        m = lp["mattn"]
        # masked self-attention + decoder-block norm (causal mask built in-kernel)
        query = fused_attention_ln(x, x, None,
                                   m["wqkv_t"], m["wo_t"], m["bo"], lp["g"], lp["b"],
                                   heads=heads, causal=True)
        # cross-attention transformer block: value=key=enc_out, queries=query
        x = transformer_block_fwd(lp["tblock"], enc_out, query, src_key_mask, heads)
    logits = pallas_linear(x.reshape(B * Lt, x.shape[-1]), p["wout_t"], p["bout"])
    return logits[:, :tgt_vocab].reshape(B, Lt, tgt_vocab)


def transformer_fwd(params, src, target, src_pad_idx, heads, tgt_vocab):
    # compact key-padding mask: (B, 1, Ls) int32, reused across heads/queries
    src_key_mask = (src != src_pad_idx).astype(jnp.int32)[:, None, :]
    enc_out = encoder_fwd(params["encoder"], src, src_key_mask, heads)
    return decoder_fwd(params["decoder"], target, enc_out, src_key_mask, heads, tgt_vocab)


# ----------------------------------------------------------------------------- init (torch layout) + prep

def _init_attention(key, E, scale=0.02):
    ks = jax.random.split(key, 5)
    return {
        "Wv": jax.random.normal(ks[0], (E, E), jnp.float32) * scale,
        "Wk": jax.random.normal(ks[1], (E, E), jnp.float32) * scale,
        "Wq": jax.random.normal(ks[2], (E, E), jnp.float32) * scale,
        "Wo": jax.random.normal(ks[3], (E, E), jnp.float32) * scale,
        "bo": jax.random.normal(ks[4], (E,), jnp.float32) * scale,
    }


def _init_tblock(key, E, F, scale=0.02):
    ks = jax.random.split(key, 5)
    return {
        "attn": _init_attention(ks[0], E),
        "g1": jnp.ones((E,), jnp.float32), "b1": jnp.zeros((E,), jnp.float32),
        "g2": jnp.ones((E,), jnp.float32), "b2": jnp.zeros((E,), jnp.float32),
        "W1": jax.random.normal(ks[1], (F * E, E), jnp.float32) * scale,   # torch (out, in)
        "bb1": jax.random.normal(ks[2], (F * E,), jnp.float32) * scale,
        "W2": jax.random.normal(ks[3], (E, F * E), jnp.float32) * scale,
        "bb2": jax.random.normal(ks[4], (E,), jnp.float32) * scale,
    }


def _init_decoder_block(key, E, F):
    ks = jax.random.split(key, 2)
    return {
        "mattn": _init_attention(ks[0], E),
        "g": jnp.ones((E,), jnp.float32), "b": jnp.zeros((E,), jnp.float32),
        "tblock": _init_tblock(ks[1], E, F),
    }


def init_transformer(key, src_vocab, tgt_vocab, E, heads, F, num_layers, max_length, scale=0.02):
    k_enc, k_dec = jax.random.split(key)
    ke = jax.random.split(k_enc, num_layers + 2)
    kd = jax.random.split(k_dec, num_layers + 4)
    encoder = {
        "word_emb": jax.random.normal(ke[0], (src_vocab, E), jnp.float32) * scale,
        "pos_emb": jax.random.normal(ke[1], (max_length, E), jnp.float32) * scale,
        "layers": [_init_tblock(ke[2 + i], E, F) for i in range(num_layers)],
    }
    decoder = {
        "word_emb": jax.random.normal(kd[0], (tgt_vocab, E), jnp.float32) * scale,
        "pos_emb": jax.random.normal(kd[1], (max_length, E), jnp.float32) * scale,
        "layers": [_init_decoder_block(kd[4 + i], E, F) for i in range(num_layers)],
        "Wout": jax.random.normal(kd[2], (tgt_vocab, E), jnp.float32) * scale,
        "bout": jax.random.normal(kd[3], (tgt_vocab,), jnp.float32) * scale,
    }
    return {"encoder": encoder, "decoder": decoder}


def prepare_params(p):
    """Torch-layout params -> kernel-ready layout: transpose, fuse QKV (with the
    1/sqrt(E) softmax scale folded into Q), cast weights to bf16 once, reshape
    biases/norm params to (1, E) rows, pad the vocab projection to 128 lanes."""
    def prep_attn(a):
        E = a["Wq"].shape[0]
        scale = 1.0 / math.sqrt(E)                     # torch: energy / sqrt(embed_size)
        wqkv_t = jnp.concatenate([a["Wq"].T * scale, a["Wk"].T, a["Wv"].T], axis=1)
        return {
            "wqkv_t": wqkv_t.astype(MATMUL_DTYPE),
            "wo_t": a["Wo"].T.astype(MATMUL_DTYPE),
            "bo": a["bo"][None, :],
        }

    def prep_block(b):
        return {
            "attn": prep_attn(b["attn"]),
            "g1": b["g1"][None, :], "b1": b["b1"][None, :],
            "g2": b["g2"][None, :], "b2": b["b2"][None, :],
            "w1_t": b["W1"].T.astype(MATMUL_DTYPE), "bb1": b["bb1"][None, :],
            "w2_t": b["W2"].T.astype(MATMUL_DTYPE), "bb2": b["bb2"][None, :],
        }

    enc = {
        "word_emb": p["encoder"]["word_emb"],
        "pos_emb": p["encoder"]["pos_emb"],
        "layers": [prep_block(l) for l in p["encoder"]["layers"]],
    }

    V = p["decoder"]["Wout"].shape[0]
    Vpad = ((V + 127) // 128) * 128                    # lane-dense vocab projection
    wout_t = jnp.pad(p["decoder"]["Wout"].T, ((0, 0), (0, Vpad - V)))
    bout = jnp.pad(p["decoder"]["bout"], (0, Vpad - V))[None, :]
    dec = {
        "word_emb": p["decoder"]["word_emb"],
        "pos_emb": p["decoder"]["pos_emb"],
        "layers": [
            {"mattn": prep_attn(l["mattn"]), "g": l["g"][None, :], "b": l["b"][None, :],
             "tblock": prep_block(l["tblock"])}
            for l in p["decoder"]["layers"]
        ],
        "wout_t": wout_t.astype(MATMUL_DTYPE),
        "bout": bout,
    }
    return {"encoder": enc, "decoder": dec}


# ----------------------------------------------------------------------------- main

if __name__ == "__main__":
    # small config consistent with the module
    SRC_VOCAB, TGT_VOCAB = 50, 60
    SRC_PAD_IDX = 0
    EMBED, HEADS, FEXP, NLAYERS, MAXLEN = 32, 4, 4, 2, 16
    B, LS, LT = 2, 8, 8

    root = jax.random.PRNGKey(0)
    k_params, k_src, k_tgt = jax.random.split(root, 3)

    raw_params = init_transformer(k_params, SRC_VOCAB, TGT_VOCAB, EMBED, HEADS,
                                  FEXP, NLAYERS, MAXLEN)
    params = prepare_params(raw_params)

    src = jax.random.randint(k_src, (B, LS), 1, SRC_VOCAB, dtype=jnp.int32)
    src = src.at[0, -2:].set(SRC_PAD_IDX)  # exercise the padding mask
    target = jax.random.randint(k_tgt, (B, LT), 1, TGT_VOCAB, dtype=jnp.int32)

    fwd = jax.jit(lambda p, s, t: transformer_fwd(p, s, t, SRC_PAD_IDX, HEADS, TGT_VOCAB))
    out = jax.block_until_ready(fwd(params, src, target))

    assert out.shape == (B, LT, TGT_VOCAB), out.shape
    assert bool(jnp.all(jnp.isfinite(out)))
    print("KERNEL_OK")
</pallas_src>

<mosaic_0001>
module attributes {stable_mosaic.version = 11 : i64} {
  func.func @_probe_kernel(%arg0: i32, %arg1: memref<8x128xf32, #tpu.memory_space<vmem>>, %arg2: memref<8x128xf32, #tpu.memory_space<vmem>>) attributes {dimension_semantics = [#tpu.dimension_semantics<arbitrary>], iteration_bounds = array<i64: 1>, scalar_prefetch = 0 : i64, scratch_operands = 0 : i64, tpu.core_type = #tpu.core_type<tc>, window_params = [{pipeline_mode = #tpu.pipeline_mode<synchronous>, transform_indices = @transform_0, window_bounds = array<i64: 8, 128>}, {pipeline_mode = #tpu.pipeline_mode<synchronous>, transform_indices = @transform_1, window_bounds = array<i64: 8, 128>}]} {
    %c0 = arith.constant 0 : index
    %c0_0 = arith.constant 0 : index
    %0 = vector.load %arg1[%c0, %c0_0] : memref<8x128xf32, #tpu.memory_space<vmem>>, vector<8x128xf32>
    %c0_1 = arith.constant 0 : index
    %c0_2 = arith.constant 0 : index
    %1 = vector.load %arg2[%c0_1, %c0_2] : memref<8x128xf32, #tpu.memory_space<vmem>>, vector<8x128xf32>
    tpu.vector_store %arg2[%c0_1, %c0_2], %0 {strides = array<i32>} : memref<8x128xf32, #tpu.memory_space<vmem>>, vector<8x128xf32>,
    return
  }
  func.func @transform_0(%arg0: i32) -> (i32, i32) {
    %c0_i32 = arith.constant 0 : i32
    %c0_i32_0 = arith.constant 0 : i32
    %c0_i32_1 = arith.constant 0 : i32
    return %c0_i32, %c0_i32_0 : i32, i32
  }
  func.func @transform_1(%arg0: i32) -> (i32, i32) {
    %c0_i32 = arith.constant 0 : i32
    %c0_i32_0 = arith.constant 0 : i32
    %c0_i32_1 = arith.constant 0 : i32
    return %c0_i32, %c0_i32_0 : i32, i32
  }
}

module attributes {stable_mosaic.version = 11 : i64} {
  func.func @_linear_kernel(%arg0: i32, %arg1: i32, %arg2: memref<16x32xbf16, #tpu.memory_space<vmem>>, %arg3: memref<32x128xbf16, #tpu.memory_space<vmem>>, %arg4: memref<1x128xf32, #tpu.memory_space<vmem>>, %arg5: memref<16x128xf32, #tpu.memory_space<vmem>>) attributes {dimension_semantics = [#tpu.dimension_semantics<parallel>, #tpu.dimension_semantics<parallel>], iteration_bounds = array<i64: 1, 1>, scalar_prefetch = 0 : i64, scratch_operands = 0 : i64, tpu.core_type = #tpu.core_type<tc>, window_params = [{transform_indices = @transform_0, window_bounds = array<i64: 16, 32>}, {transform_indices = @transform_1, window_bounds = array<i64: 32, 128>}, {transform_indices = @transform_2, window_bounds = array<i64: 1, 128>}, {transform_indices = @transform_3, window_bounds = array<i64: 16, 128>}]} {
    %c0 = arith.constant 0 : index
    %c0_0 = arith.constant 0 : index
    %0 = vector.load %arg2[%c0, %c0_0] : memref<16x32xbf16, #tpu.memory_space<vmem>>, vector<16x32xbf16>
    %c0_1 = arith.constant 0 : index
    %c0_2 = arith.constant 0 : index
    %1 = vector.load %arg3[%c0_1, %c0_2] : memref<32x128xbf16, #tpu.memory_space<vmem>>, vector<32x128xbf16>
    %cst = arith.constant dense<0.000000e+00> : vector<16x128xf32>
    %2 = tpu.matmul %0, %1, %cst {dimension_numbers = #tpu.dot_dimension_numbers<[1], [0], [0], [1], [0, 0, 1, 1], [], []>} : vector<16x32xbf16>, vector<32x128xbf16>, vector<16x128xf32> -> vector<16x128xf32>
    %c0_3 = arith.constant 0 : index
    %c0_4 = arith.constant 0 : index
    %3 = vector.load %arg4[%c0_3, %c0_4] : memref<1x128xf32, #tpu.memory_space<vmem>>, vector<1x128xf32>
    %4 = vector.broadcast %3 : vector<1x128xf32> to vector<16x128xf32>
    %5 = arith.addf %2, %4 : vector<16x128xf32>
    %c0_5 = arith.constant 0 : index
    %c0_6 = arith.constant 0 : index
    %6 = vector.load %arg5[%c0_5, %c0_6] : memref<16x128xf32, #tpu.memory_space<vmem>>, vector<16x128xf32>
    tpu.vector_store %arg5[%c0_5, %c0_6], %5 {strides = array<i32>} : memref<16x128xf32, #tpu.memory_space<vmem>>, vector<16x128xf32>,
    return
  }
  func.func @transform_0(%arg0: i32, %arg1: i32) -> (i32, i32) {
    %c0_i32 = arith.constant 0 : i32
    %c0_i32_0 = arith.constant 0 : i32
    return %arg0, %c0_i32 : i32, i32
  }
  func.func @transform_1(%arg0: i32, %arg1: i32) -> (i32, i32) {
    %c0_i32 = arith.constant 0 : i32
    %c0_i32_0 = arith.constant 0 : i32
    return %c0_i32, %arg1 : i32, i32
  }
  func.func @transform_2(%arg0: i32, %arg1: i32) -> (i32, i32) {
    %c0_i32 = arith.constant 0 : i32
    %c0_i32_0 = arith.constant 0 : i32
    return %c0_i32, %arg1 : i32, i32
  }
  func.func @transform_3(%arg0: i32, %arg1: i32) -> (i32, i32) {
    %c0_i32 = arith.constant 0 : i32
    return %arg0, %arg1 : i32, i32
  }
}

module attributes {stable_mosaic.version = 11 : i64} {
  func.func @_mha_ln_kernel(%arg0: i32, %arg1: i32, %arg2: memref<1x8x32xbf16, #tpu.memory_space<vmem>>, %arg3: memref<1x8x32xbf16, #tpu.memory_space<vmem>>, %arg4: memref<32x96xbf16, #tpu.memory_space<vmem>>, %arg5: memref<32x32xbf16, #tpu.memory_space<vmem>>, %arg6: memref<1x32xf32, #tpu.memory_space<vmem>>, %arg7: memref<1x32xf32, #tpu.memory_space<vmem>>, %arg8: memref<1x32xf32, #tpu.memory_space<vmem>>, %arg9: memref<1x8x32xbf16, #tpu.memory_space<vmem>>, %arg10: memref<8x32xbf16, #tpu.memory_space<vmem>>, %arg11: memref<8x32xbf16, #tpu.memory_space<vmem>>) attributes {dimension_semantics = [#tpu.dimension_semantics<parallel>, #tpu.dimension_semantics<arbitrary>], iteration_bounds = array<i64: 2, 1>, scalar_prefetch = 0 : i64, scratch_operands = 2 : i64, tpu.core_type = #tpu.core_type<tc>, window_params = [{transform_indices = @transform_0, window_bounds = array<i64: 1, 8, 32>}, {transform_indices = @transform_1, window_bounds = array<i64: 1, 8, 32>}, {pipeline_mode = #tpu.pipeline_mode<synchronous>, transform_indices = @transform_2, window_bounds = array<i64: 32, 96>}, {pipeline_mode = #tpu.pipeline_mode<synchronous>, transform_indices = @transform_3, window_bounds = array<i64: 32, 32>}, {pipeline_mode = #tpu.pipeline_mode<synchronous>, transform_indices = @transform_4, window_bounds = array<i64: 1, 32>}, {pipeline_mode = #tpu.pipeline_mode<synchronous>, transform_indices = @transform_5, window_bounds = array<i64: 1, 32>}, {pipeline_mode = #tpu.pipeline_mode<synchronous>, transform_indices = @transform_6, window_bounds = array<i64: 1, 32>}, {transform_indices = @transform_7, window_bounds = array<i64: 1, 8, 32>}]} {
    %c0_i32 = arith.constant 0 : i32
    %0 = arith.cmpi eq, %arg1, %c0_i32 : i32
    %1 = arith.extui %0 : i1 to i32
    %c0_i32_0 = arith.constant 0 : i32
    %2 = arith.cmpi ne, %1, %c0_i32_0 : i32
    scf.if %2 {
      %c0_49 = arith.constant 0 : index
      %c0_50 = arith.constant 0 : index
      %c0_51 = arith.constant 0 : index
      %130 = vector.load %arg3[%c0_49, %c0_50, %c0_51] : memref<1x8x32xbf16, #tpu.memory_space<vmem>>, vector<1x8x32xbf16>
      %131 = vector.shape_cast %130 : vector<1x8x32xbf16> to vector<8x32xbf16>
      %c0_52 = arith.constant 0 : index
      %c32 = arith.constant 32 : index
      %132 = vector.load %arg4[%c0_52, %c32] : memref<32x96xbf16, #tpu.memory_space<vmem>>, vector<32x32xbf16>
      %cst_53 = arith.constant dense<0.000000e+00> : vector<8x32xf32>
      %133 = tpu.matmul %131, %132, %cst_53 {dimension_numbers = #tpu.dot_dimension_numbers<[1], [0], [0], [1], [0, 0, 1, 1], [], []>} : vector<8x32xbf16>, vector<32x32xbf16>, vector<8x32xf32> -> vector<8x32xf32>
      %134 = arith.truncf %133 : vector<8x32xf32> to vector<8x32xbf16>
      %c0_54 = arith.constant 0 : index
      %c0_55 = arith.constant 0 : index
      %135 = vector.load %arg10[%c0_54, %c0_55] : memref<8x32xbf16, #tpu.memory_space<vmem>>, vector<8x32xbf16>
      tpu.vector_store %arg10[%c0_54, %c0_55], %134 {strides = array<i32>} : memref<8x32xbf16, #tpu.memory_space<vmem>>, vector<8x32xbf16>,
      %c0_56 = arith.constant 0 : index
      %c64 = arith.constant 64 : index
      %136 = vector.load %arg4[%c0_56, %c64] : memref<32x96xbf16, #tpu.memory_space<vmem>>, vector<32x32xbf16>
      %cst_57 = arith.constant dense<0.000000e+00> : vector<8x32xf32>
      %137 = tpu.matmul %131, %136, %cst_57 {dimension_numbers = #tpu.dot_dimension_numbers<[1], [0], [0], [1], [0, 0, 1, 1], [], []>} : vector<8x32xbf16>, vector<32x32xbf16>, vector<8x32xf32> -> vector<8x32xf32>
      %138 = arith.truncf %137 : vector<8x32xf32> to vector<8x32xbf16>
      %c0_58 = arith.constant 0 : index
      %c0_59 = arith.constant 0 : index
      %139 = vector.load %arg11[%c0_58, %c0_59] : memref<8x32xbf16, #tpu.memory_space<vmem>>, vector<8x32xbf16>
      tpu.vector_store %arg11[%c0_58, %c0_59], %138 {strides = array<i32>} : memref<8x32xbf16, #tpu.memory_space<vmem>>, vector<8x32xbf16>,
    } else {
    }
    %c0 = arith.constant 0 : index
    %c0_1 = arith.constant 0 : index
    %c0_2 = arith.constant 0 : index
    %3 = vector.load %arg2[%c0, %c0_1, %c0_2] : memref<1x8x32xbf16, #tpu.memory_space<vmem>>, vector<1x8x32xbf16>
    %4 = vector.shape_cast %3 : vector<1x8x32xbf16> to vector<8x32xbf16>
    %5 = arith.extf %4 : vector<8x32xbf16> to vector<8x32xf32>
    %c0_3 = arith.constant 0 : index
    %c0_4 = arith.constant 0 : index
    %c0_5 = arith.constant 0 : index
    %6 = vector.load %arg2[%c0_3, %c0_4, %c0_5] : memref<1x8x32xbf16, #tpu.memory_space<vmem>>, vector<1x8x32xbf16>
    %7 = vector.shape_cast %6 : vector<1x8x32xbf16> to vector<8x32xbf16>
    %c0_6 = arith.constant 0 : index
    %c0_7 = arith.constant 0 : index
    %8 = vector.load %arg4[%c0_6, %c0_7] : memref<32x96xbf16, #tpu.memory_space<vmem>>, vector<32x32xbf16>
    %cst = arith.constant dense<0.000000e+00> : vector<8x32xf32>
    %9 = tpu.matmul %7, %8, %cst {dimension_numbers = #tpu.dot_dimension_numbers<[1], [0], [0], [1], [0, 0, 1, 1], [], []>} : vector<8x32xbf16>, vector<32x32xbf16>, vector<8x32xf32> -> vector<8x32xf32>
    %c0_8 = arith.constant 0 : index
    %c0_9 = arith.constant 0 : index
    %10 = vector.load %arg10[%c0_8, %c0_9] : memref<8x32xbf16, #tpu.memory_space<vmem>>, vector<8x32xbf16>
    %c0_10 = arith.constant 0 : index
    %c0_11 = arith.constant 0 : index
    %11 = vector.load %arg11[%c0_10, %c0_11] : memref<8x32xbf16, #tpu.memory_space<vmem>>, vector<8x32xbf16>
    %c8_i32 = arith.constant 8 : i32
    %12 = arith.muli %arg1, %c8_i32 : i32
    %13 = tpu.iota {dimensions = array<i32: 0>} : vector<8x8xi32>
    %14 = vector.broadcast %12 : i32 to vector<8x8xi32>
    %15 = arith.addi %14, %13 : vector<8x8xi32>
    %16 = tpu.iota {dimensions = array<i32: 1>} : vector<8x8xi32>
    %17 = arith.cmpi sgt, %16, %15 : vector<8x8xi32>
    %18 = vector.extract_strided_slice %9 {offsets = [0, 0], sizes = [8, 8], strides = [1, 1]} : vector<8x32xf32> to vector<8x8xf32>
    %19 = arith.truncf %18 : vector<8x8xf32> to vector<8x8xbf16>
    %20 = vector.extract_strided_slice %10 {offsets = [0, 0], sizes = [8, 8], strides = [1, 1]} : vector<8x32xbf16> to vector<8x8xbf16>
    %21 = vector.extract_strided_slice %11 {offsets = [0, 0], sizes = [8, 8], strides = [1, 1]} : vector<8x32xbf16> to vector<8x8xbf16>
    %cst_12 = arith.constant dense<0.000000e+00> : vector<8x8xf32>
    %22 = tpu.matmul %19, %20, %cst_12 {dimension_numbers = #tpu.dot_dimension_numbers<[1], [1], [0], [0], [0, 0, 1, 0], [], []>} : vector<8x8xbf16>, vector<8x8xbf16>, vector<8x8xf32> -> vector<8x8xf32>
    %cst_13 = arith.constant -1.000000e+20 : f32
    %23 = vector.broadcast %cst_13 : f32 to vector<8x8xf32>
    %24 = arith.select %17, %23, %22 : vector<8x8xi1>, vector<8x8xf32>
    %cst_14 = arith.constant dense<0xFF800000> : vector<8xf32>
    %25 = vector.multi_reduction <maximumf>, %24, %cst_14 [1] : vector<8x8xf32> to vector<8xf32>
    %26 = vector.shape_cast %25 : vector<8xf32> to vector<8x1xf32>
    %27 = vector.broadcast %26 : vector<8x1xf32> to vector<8x8xf32>
    %28 = arith.subf %24, %27 : vector<8x8xf32>
    %29 = math.exp %28 : vector<8x8xf32>
    %cst_15 = arith.constant dense<0.000000e+00> : vector<8xf32>
    %30 = vector.multi_reduction <add>, %29, %cst_15 [1] : vector<8x8xf32> to vector<8xf32>
    %31 = vector.shape_cast %30 : vector<8xf32> to vector<8x1xf32>
    %32 = tpu.reciprocal %31 {approx = true} : vector<8x1xf32> -> vector<8x1xf32>
    %33 = vector.broadcast %32 : vector<8x1xf32> to vector<8x8xf32>
    %34 = arith.mulf %29, %33 : vector<8x8xf32>
    %35 = arith.truncf %34 : vector<8x8xf32> to vector<8x8xbf16>
    %cst_16 = arith.constant dense<0.000000e+00> : vector<8x8xf32>
    %36 = tpu.matmul %35, %21, %cst_16 {dimension_numbers = #tpu.dot_dimension_numbers<[1], [0], [0], [1], [0, 0, 1, 1], [], []>} : vector<8x8xbf16>, vector<8x8xbf16>, vector<8x8xf32> -> vector<8x8xf32>
    %37 = vector.extract_strided_slice %9 {offsets = [0, 8], sizes = [8, 8], strides = [1, 1]} : vector<8x32xf32> to vector<8x8xf32>
    %38 = arith.truncf %37 : vector<8x8xf32> to vector<8x8xbf16>
    %39 = vector.extract_strided_slice %10 {offsets = [0, 8], sizes = [8, 8], strides = [1, 1]} : vector<8x32xbf16> to vector<8x8xbf16>
    %40 = vector.extract_strided_slice %11 {offsets = [0, 8], sizes = [8, 8], strides = [1, 1]} : vector<8x32xbf16> to vector<8x8xbf16>
    %cst_17 = arith.constant dense<0.000000e+00> : vector<8x8xf32>
    %41 = tpu.matmul %38, %39, %cst_17 {dimension_numbers = #tpu.dot_dimension_numbers<[1], [1], [0], [0], [0, 0, 1, 0], [], []>} : vector<8x8xbf16>, vector<8x8xbf16>, vector<8x8xf32> -> vector<8x8xf32>
    %cst_18 = arith.constant -1.000000e+20 : f32
    %42 = vector.broadcast %cst_18 : f32 to vector<8x8xf32>
    %43 = arith.select %17, %42, %41 : vector<8x8xi1>, vector<8x8xf32>
    %cst_19 = arith.constant dense<0xFF800000> : vector<8xf32>
    %44 = vector.multi_reduction <maximumf>, %43, %cst_19 [1] : vector<8x8xf32> to vector<8xf32>
    %45 = vector.shape_cast %44 : vector<8xf32> to vector<8x1xf32>
    %46 = vector.broadcast %45 : vector<8x1xf32> to vector<8x8xf32>
    %47 = arith.subf %43, %46 : vector<8x8xf32>
    %48 = math.exp %47 : vector<8x8xf32>
    %cst_20 = arith.constant dense<0.000000e+00> : vector<8xf32>
    %49 = vector.multi_reduction <add>, %48, %cst_20 [1] : vector<8x8xf32> to vector<8xf32>
    %50 = vector.shape_cast %49 : vector<8xf32> to vector<8x1xf32>
    %51 = tpu.reciprocal %50 {approx = true} : vector<8x1xf32> -> vector<8x1xf32>
    %52 = vector.broadcast %51 : vector<8x1xf32> to vector<8x8xf32>
    %53 = arith.mulf %48, %52 : vector<8x8xf32>
    %54 = arith.truncf %53 : vector<8x8xf32> to vector<8x8xbf16>
    %cst_21 = arith.constant dense<0.000000e+00> : vector<8x8xf32>
    %55 = tpu.matmul %54, %40, %cst_21 {dimension_numbers = #tpu.dot_dimension_numbers<[1], [0], [0], [1], [0, 0, 1, 1], [], []>} : vector<8x8xbf16>, vector<8x8xbf16>, vector<8x8xf32> -> vector<8x8xf32>
    %56 = vector.extract_strided_slice %9 {offsets = [0, 16], sizes = [8, 8], strides = [1, 1]} : vector<8x32xf32> to vector<8x8xf32>
    %57 = arith.truncf %56 : vector<8x8xf32> to vector<8x8xbf16>
    %58 = vector.extract_strided_slice %10 {offsets = [0, 16], sizes = [8, 8], strides = [1, 1]} : vector<8x32xbf16> to vector<8x8xbf16>
    %59 = vector.extract_strided_slice %11 {offsets = [0, 16], sizes = [8, 8], strides = [1, 1]} : vector<8x32xbf16> to vector<8x8xbf16>
    %cst_22 = arith.constant dense<0.000000e+00> : vector<8x8xf32>
    %60 = tpu.matmul %57, %58, %cst_22 {dimension_numbers = #tpu.dot_dimension_numbers<[1], [1], [0], [0], [0, 0, 1, 0], [], []>} : vector<8x8xbf16>, vector<8x8xbf16>, vector<8x8xf32> -> vector<8x8xf32>
    %cst_23 = arith.constant -1.000000e+20 : f32
    %61 = vector.broadcast %cst_23 : f32 to vector<8x8xf32>
    %62 = arith.select %17, %61, %60 : vector<8x8xi1>, vector<8x8xf32>
    %cst_24 = arith.constant dense<0xFF800000> : vector<8xf32>
    %63 = vector.multi_reduction <maximumf>, %62, %cst_24 [1] : vector<8x8xf32> to vector<8xf32>
    %64 = vector.shape_cast %63 : vector<8xf32> to vector<8x1xf32>
    %65 = vector.broadcast %64 : vector<8x1xf32> to vector<8x8xf32>
    %66 = arith.subf %62, %65 : vector<8x8xf32>
    %67 = math.exp %66 : vector<8x8xf32>
    %cst_25 = arith.constant dense<0.000000e+00> : vector<8xf32>
    %68 = vector.multi_reduction <add>, %67, %cst_25 [1] : vector<8x8xf32> to vector<8xf32>
    %69 = vector.shape_cast %68 : vector<8xf32> to vector<8x1xf32>
    %70 = tpu.reciprocal %69 {approx = true} : vector<8x1xf32> -> vector<8x1xf32>
    %71 = vector.broadcast %70 : vector<8x1xf32> to vector<8x8xf32>
    %72 = arith.mulf %67, %71 : vector<8x8xf32>
    %73 = arith.truncf %72 : vector<8x8xf32> to vector<8x8xbf16>
    %cst_26 = arith.constant dense<0.000000e+00> : vector<8x8xf32>
    %74 = tpu.matmul %73, %59, %cst_26 {dimension_numbers = #tpu.dot_dimension_numbers<[1], [0], [0], [1], [0, 0, 1, 1], [], []>} : vector<8x8xbf16>, vector<8x8xbf16>, vector<8x8xf32> -> vector<8x8xf32>
    %75 = vector.extract_strided_slice %9 {offsets = [0, 24], sizes = [8, 8], strides = [1, 1]} : vector<8x32xf32> to vector<8x8xf32>
    %76 = arith.truncf %75 : vector<8x8xf32> to vector<8x8xbf16>
    %77 = vector.extract_strided_slice %10 {offsets = [0, 24], sizes = [8, 8], strides = [1, 1]} : vector<8x32xbf16> to vector<8x8xbf16>
    %78 = vector.extract_strided_slice %11 {offsets = [0, 24], sizes = [8, 8], strides = [1, 1]} : vector<8x32xbf16> to vector<8x8xbf16>
    %cst_27 = arith.constant dense<0.000000e+00> : vector<8x8xf32>
    %79 = tpu.matmul %76, %77, %cst_27 {dimension_numbers = #tpu.dot_dimension_numbers<[1], [1], [0], [0], [0, 0, 1, 0], [], []>} : vector<8x8xbf16>, vector<8x8xbf16>, vector<8x8xf32> -> vector<8x8xf32>
    %cst_28 = arith.constant -1.000000e+20 : f32
    %80 = vector.broadcast %cst_28 : f32 to vector<8x8xf32>
    %81 = arith.select %17, %80, %79 : vector<8x8xi1>, vector<8x8xf32>
    %cst_29 = arith.constant dense<0xFF800000> : vector<8xf32>
    %82 = vector.multi_reduction <maximumf>, %81, %cst_29 [1] : vector<8x8xf32> to vector<8xf32>
    %83 = vector.shape_cast %82 : vector<8xf32> to vector<8x1xf32>
    %84 = vector.broadcast %83 : vector<8x1xf32> to vector<8x8xf32>
    %85 = arith.subf %81, %84 : vector<8x8xf32>
    %86 = math.exp %85 : vector<8x8xf32>
    %cst_30 = arith.constant dense<0.000000e+00> : vector<8xf32>
    %87 = vector.multi_reduction <add>, %86, %cst_30 [1] : vector<8x8xf32> to vector<8xf32>
    %88 = vector.shape_cast %87 : vector<8xf32> to vector<8x1xf32>
    %89 = tpu.reciprocal %88 {approx = true} : vector<8x1xf32> -> vector<8x1xf32>
    %90 = vector.broadcast %89 : vector<8x1xf32> to vector<8x8xf32>
    %91 = arith.mulf %86, %90 : vector<8x8xf32>
    %92 = arith.truncf %91 : vector<8x8xf32> to vector<8x8xbf16>
    %cst_31 = arith.constant dense<0.000000e+00> : vector<8x8xf32>
    %93 = tpu.matmul %92, %78, %cst_31 {dimension_numbers = #tpu.dot_dimension_numbers<[1], [0], [0], [1], [0, 0, 1, 1], [], []>} : vector<8x8xbf16>, vector<8x8xbf16>, vector<8x8xf32> -> vector<8x8xf32>
    %94 = tpu.concatenate %36, %55, %74, %93 in 1 : vector<8x8xf32>, vector<8x8xf32>, vector<8x8xf32>, vector<8x8xf32> -> vector<8x32xf32>
    %95 = arith.truncf %94 : vector<8x32xf32> to vector<8x32xbf16>
    %c0_32 = arith.constant 0 : index
    %c0_33 = arith.constant 0 : index
    %96 = vector.load %arg5[%c0_32, %c0_33] : memref<32x32xbf16, #tpu.memory_space<vmem>>, vector<32x32xbf16>
    %cst_34 = arith.constant dense<0.000000e+00> : vector<8x32xf32>
    %97 = tpu.matmul %95, %96, %cst_34 {dimension_numbers = #tpu.dot_dimension_numbers<[1], [0], [0], [1], [0, 0, 1, 1], [], []>} : vector<8x32xbf16>, vector<32x32xbf16>, vector<8x32xf32> -> vector<8x32xf32>
    %c0_35 = arith.constant 0 : index
    %c0_36 = arith.constant 0 : index
    %98 = vector.load %arg6[%c0_35, %c0_36] : memref<1x32xf32, #tpu.memory_space<vmem>>, vector<1x32xf32>
    %99 = vector.broadcast %98 : vector<1x32xf32> to vector<8x32xf32>
    %100 = arith.addf %97, %99 : vector<8x32xf32>
    %101 = arith.addf %100, %5 : vector<8x32xf32>
    %cst_37 = arith.constant dense<0.000000e+00> : vector<8xf32>
    %102 = vector.multi_reduction <add>, %101, %cst_37 [1] : vector<8x32xf32> to vector<8xf32>
    %103 = vector.shape_cast %102 : vector<8xf32> to vector<8x1xf32>
    %cst_38 = arith.constant 3.200000e+01 : f32
    %104 = vector.broadcast %cst_38 : f32 to vector<8x1xf32>
    %105 = arith.divf %103, %104 : vector<8x1xf32>
    %106 = vector.broadcast %105 : vector<8x1xf32> to vector<8x32xf32>
    %107 = arith.subf %101, %106 : vector<8x32xf32>
    %108 = arith.mulf %107, %107 : vector<8x32xf32>
    %cst_39 = arith.constant dense<0.000000e+00> : vector<8xf32>
    %109 = vector.multi_reduction <add>, %108, %cst_39 [1] : vector<8x32xf32> to vector<8xf32>
    %110 = vector.shape_cast %109 : vector<8xf32> to vector<8x1xf32>
    %cst_40 = arith.constant 3.200000e+01 : f32
    %111 = vector.broadcast %cst_40 : f32 to vector<8x1xf32>
    %112 = arith.divf %110, %111 : vector<8x1xf32>
    %113 = vector.broadcast %105 : vector<8x1xf32> to vector<8x32xf32>
    %114 = arith.subf %101, %113 : vector<8x32xf32>
    %cst_41 = arith.constant 9.99999974E-6 : f32
    %115 = vector.broadcast %cst_41 : f32 to vector<8x1xf32>
    %116 = arith.addf %112, %115 : vector<8x1xf32>
    %117 = math.rsqrt %116 : vector<8x1xf32>
    %118 = vector.broadcast %117 : vector<8x1xf32> to vector<8x32xf32>
    %119 = arith.mulf %114, %118 : vector<8x32xf32>
    %c0_42 = arith.constant 0 : index
    %c0_43 = arith.constant 0 : index
    %120 = vector.load %arg7[%c0_42, %c0_43] : memref<1x32xf32, #tpu.memory_space<vmem>>, vector<1x32xf32>
    %121 = vector.broadcast %120 : vector<1x32xf32> to vector<8x32xf32>
    %122 = arith.mulf %119, %121 : vector<8x32xf32>
    %c0_44 = arith.constant 0 : index
    %c0_45 = arith.constant 0 : index
    %123 = vector.load %arg8[%c0_44, %c0_45] : memref<1x32xf32, #tpu.memory_space<vmem>>, vector<1x32xf32>
    %124 = vector.broadcast %123 : vector<1x32xf32> to vector<8x32xf32>
    %125 = arith.addf %122, %124 : vector<8x32xf32>
    %126 = arith.truncf %125 : vector<8x32xf32> to vector<8x32xbf16>
    %c0_46 = arith.constant 0 : index
    %c0_47 = arith.constant 0 : index
    %c0_48 = arith.constant 0 : index
    %127 = vector.load %arg9[%c0_46, %c0_47, %c0_48] : memref<1x8x32xbf16, #tpu.memory_space<vmem>>, vector<1x8x32xbf16>
    %128 = vector.shape_cast %127 : vector<1x8x32xbf16> to vector<8x32xbf16>
    %129 = vector.shape_cast %126 : vector<8x32xbf16> to vector<1x8x32xbf16>
    tpu.vector_store %arg9[%c0_46, %c0_47, %c0_48], %129 {strides = array<i32>} : memref<1x8x32xbf16, #tpu.memory_space<vmem>>, vector<1x8x32xbf16>,
    return
  }
  func.func @transform_0(%arg0: i32, %arg1: i32) -> (i32, i32, i32) {
    %c0_i32 = arith.constant 0 : i32
    %c0_i32_0 = arith.constant 0 : i32
    return %arg0, %arg1, %c0_i32 : i32, i32, i32
  }
  func.func @transform_1(%arg0: i32, %arg1: i32) -> (i32, i32, i32) {
    %c0_i32 = arith.constant 0 : i32
    %c0_i32_0 = arith.constant 0 : i32
    %c0_i32_1 = arith.constant 0 : i32
    return %arg0, %c0_i32, %c0_i32_0 : i32, i32, i32
  }
  func.func @transform_2(%arg0: i32, %arg1: i32) -> (i32, i32) {
    %c0_i32 = arith.constant 0 : i32
    %c0_i32_0 = arith.constant 0 : i32
    %c0_i32_1 = arith.constant 0 : i32
    return %c0_i32, %c0_i32_0 : i32, i32
  }
  func.func @transform_3(%arg0: i32, %arg1: i32) -> (i32, i32) {
    %c0_i32 = arith.constant 0 : i32
    %c0_i32_0 = arith.constant 0 : i32
    %c0_i32_1 = arith.constant 0 : i32
    return %c0_i32, %c0_i32_0 : i32, i32
  }
  func.func @transform_4(%arg0: i32, %arg1: i32) -> (i32, i32) {
    %c0_i32 = arith.constant 0 : i32
    %c0_i32_0 = arith.constant 0 : i32
    %c0_i32_1 = arith.constant 0 : i32
    return %c0_i32, %c0_i32_0 : i32, i32
  }
  func.func @transform_5(%arg0: i32, %arg1: i32) -> (i32, i32) {
    %c0_i32 = arith.constant 0 : i32
    %c0_i32_0 = arith.constant 0 : i32
    %c0_i32_1 = arith.constant 0 : i32
    return %c0_i32, %c0_i32_0 : i32, i32
  }
  func.func @transform_6(%arg0: i32, %arg1: i32) -> (i32, i32) {
    %c0_i32 = arith.constant 0 : i32
    %c0_i32_0 = arith.constant 0 : i32
    %c0_i32_1 = arith.constant 0 : i32
    return %c0_i32, %c0_i32_0 : i32, i32
  }
  func.func @transform_7(%arg0: i32, %arg1: i32) -> (i32, i32, i32) {
    %c0_i32 = arith.constant 0 : i32
    %c0_i32_0 = arith.constant 0 : i32
    return %arg0, %arg1, %c0_i32 : i32, i32, i32
  }
}

module attributes {stable_mosaic.version = 11 : i64} {
  func.func @_ffn_ln_kernel(%arg0: i32, %arg1: memref<16x32xbf16, #tpu.memory_space<vmem>>, %arg2: memref<32x128xbf16, #tpu.memory_space<vmem>>, %arg3: memref<1x128xf32, #tpu.memory_space<vmem>>, %arg4: memref<128x32xbf16, #tpu.memory_space<vmem>>, %arg5: memref<1x32xf32, #tpu.memory_space<vmem>>, %arg6: memref<1x32xf32, #tpu.memory_space<vmem>>, %arg7: memref<1x32xf32, #tpu.memory_space<vmem>>, %arg8: memref<16x32xbf16, #tpu.memory_space<vmem>>) attributes {dimension_semantics = [#tpu.dimension_semantics<parallel>], iteration_bounds = array<i64: 1>, scalar_prefetch = 0 : i64, scratch_operands = 0 : i64, tpu.core_type = #tpu.core_type<tc>, window_params = [{transform_indices = @transform_0, window_bounds = array<i64: 16, 32>}, {pipeline_mode = #tpu.pipeline_mode<synchronous>, transform_indices = @transform_1, window_bounds = array<i64: 32, 128>}, {pipeline_mode = #tpu.pipeline_mode<synchronous>, transform_indices = @transform_2, window_bounds = array<i64: 1, 128>}, {pipeline_mode = #tpu.pipeline_mode<synchronous>, transform_indices = @transform_3, window_bounds = array<i64: 128, 32>}, {pipeline_mode = #tpu.pipeline_mode<synchronous>, transform_indices = @transform_4, window_bounds = array<i64: 1, 32>}, {pipeline_mode = #tpu.pipeline_mode<synchronous>, transform_indices = @transform_5, window_bounds = array<i64: 1, 32>}, {pipeline_mode = #tpu.pipeline_mode<synchronous>, transform_indices = @transform_6, window_bounds = array<i64: 1, 32>}, {transform_indices = @transform_7, window_bounds = array<i64: 16, 32>}]} {
    %c0 = arith.constant 0 : index
    %c0_0 = arith.constant 0 : index
    %0 = vector.load %arg1[%c0, %c0_0] : memref<16x32xbf16, #tpu.memory_space<vmem>>, vector<16x32xbf16>
    %1 = arith.extf %0 : vector<16x32xbf16> to vector<16x32xf32>
    %c0_1 = arith.constant 0 : index
    %c0_2 = arith.constant 0 : index
    %2 = vector.load %arg1[%c0_1, %c0_2] : memref<16x32xbf16, #tpu.memory_space<vmem>>, vector<16x32xbf16>
    %c0_3 = arith.constant 0 : index
    %c0_4 = arith.constant 0 : index
    %3 = vector.load %arg2[%c0_3, %c0_4] : memref<32x128xbf16, #tpu.memory_space<vmem>>, vector<32x128xbf16>
    %cst = arith.constant dense<0.000000e+00> : vector<16x128xf32>
    %4 = tpu.matmul %2, %3, %cst {dimension_numbers = #tpu.dot_dimension_numbers<[1], [0], [0], [1], [0, 0, 1, 1], [], []>} : vector<16x32xbf16>, vector<32x128xbf16>, vector<16x128xf32> -> vector<16x128xf32>
    %c0_5 = arith.constant 0 : index
    %c0_6 = arith.constant 0 : index
    %5 = vector.load %arg3[%c0_5, %c0_6] : memref<1x128xf32, #tpu.memory_space<vmem>>, vector<1x128xf32>
    %6 = vector.broadcast %5 : vector<1x128xf32> to vector<16x128xf32>
    %7 = arith.addf %4, %6 : vector<16x128xf32>
    %cst_7 = arith.constant 0.000000e+00 : f32
    %8 = vector.broadcast %cst_7 : f32 to vector<16x128xf32>
    %9 = arith.maximumf %7, %8 : vector<16x128xf32>
    %10 = arith.truncf %9 : vector<16x128xf32> to vector<16x128xbf16>
    %c0_8 = arith.constant 0 : index
    %c0_9 = arith.constant 0 : index
    %11 = vector.load %arg4[%c0_8, %c0_9] : memref<128x32xbf16, #tpu.memory_space<vmem>>, vector<128x32xbf16>
    %cst_10 = arith.constant dense<0.000000e+00> : vector<16x32xf32>
    %12 = tpu.matmul %10, %11, %cst_10 {dimension_numbers = #tpu.dot_dimension_numbers<[1], [0], [0], [1], [0, 0, 1, 1], [], []>} : vector<16x128xbf16>, vector<128x32xbf16>, vector<16x32xf32> -> vector<16x32xf32>
    %c0_11 = arith.constant 0 : index
    %c0_12 = arith.constant 0 : index
    %13 = vector.load %arg5[%c0_11, %c0_12] : memref<1x32xf32, #tpu.memory_space<vmem>>, vector<1x32xf32>
    %14 = vector.broadcast %13 : vector<1x32xf32> to vector<16x32xf32>
    %15 = arith.addf %12, %14 : vector<16x32xf32>
    %16 = arith.addf %15, %1 : vector<16x32xf32>
    %cst_13 = arith.constant dense<0.000000e+00> : vector<16xf32>
    %17 = vector.multi_reduction <add>, %16, %cst_13 [1] : vector<16x32xf32> to vector<16xf32>
    %18 = vector.shape_cast %17 : vector<16xf32> to vector<16x1xf32>
    %cst_14 = arith.constant 3.200000e+01 : f32
    %19 = vector.broadcast %cst_14 : f32 to vector<16x1xf32>
    %20 = arith.divf %18, %19 : vector<16x1xf32>
    %21 = vector.broadcast %20 : vector<16x1xf32> to vector<16x32xf32>
    %22 = arith.subf %16, %21 : vector<16x32xf32>
    %23 = arith.mulf %22, %22 : vector<16x32xf32>
    %cst_15 = arith.constant dense<0.000000e+00> : vector<16xf32>
    %24 = vector.multi_reduction <add>, %23, %cst_15 [1] : vector<16x32xf32> to vector<16xf32>
    %25 = vector.shape_cast %24 : vector<16xf32> to vector<16x1xf32>
    %cst_16 = arith.constant 3.200000e+01 : f32
    %26 = vector.broadcast %cst_16 : f32 to vector<16x1xf32>
    %27 = arith.divf %25, %26 : vector<16x1xf32>
    %28 = vector.broadcast %20 : vector<16x1xf32> to vector<16x32xf32>
    %29 = arith.subf %16, %28 : vector<16x32xf32>
    %cst_17 = arith.constant 9.99999974E-6 : f32
    %30 = vector.broadcast %cst_17 : f32 to vector<16x1xf32>
    %31 = arith.addf %27, %30 : vector<16x1xf32>
    %32 = math.rsqrt %31 : vector<16x1xf32>
    %33 = vector.broadcast %32 : vector<16x1xf32> to vector<16x32xf32>
    %34 = arith.mulf %29, %33 : vector<16x32xf32>
    %c0_18 = arith.constant 0 : index
    %c0_19 = arith.constant 0 : index
    %35 = vector.load %arg6[%c0_18, %c0_19] : memref<1x32xf32, #tpu.memory_space<vmem>>, vector<1x32xf32>
    %36 = vector.broadcast %35 : vector<1x32xf32> to vector<16x32xf32>
    %37 = arith.mulf %34, %36 : vector<16x32xf32>
    %c0_20 = arith.constant 0 : index
    %c0_21 = arith.constant 0 : index
    %38 = vector.load %arg7[%c0_20, %c0_21] : memref<1x32xf32, #tpu.memory_space<vmem>>, vector<1x32xf32>
    %39 = vector.broadcast %38 : vector<1x32xf32> to vector<16x32xf32>
    %40 = arith.addf %37, %39 : vector<16x32xf32>
    %41 = arith.truncf %40 : vector<16x32xf32> to vector<16x32xbf16>
    %c0_22 = arith.constant 0 : index
    %c0_23 = arith.constant 0 : index
    %42 = vector.load %arg8[%c0_22, %c0_23] : memref<16x32xbf16, #tpu.memory_space<vmem>>, vector<16x32xbf16>
    tpu.vector_store %arg8[%c0_22, %c0_23], %41 {strides = array<i32>} : memref<16x32xbf16, #tpu.memory_space<vmem>>, vector<16x32xbf16>,
    return
  }
  func.func @transform_0(%arg0: i32) -> (i32, i32) {
    %c0_i32 = arith.constant 0 : i32
    %c0_i32_0 = arith.constant 0 : i32
    return %arg0, %c0_i32 : i32, i32
  }
  func.func @transform_1(%arg0: i32) -> (i32, i32) {
    %c0_i32 = arith.constant 0 : i32
    %c0_i32_0 = arith.constant 0 : i32
    %c0_i32_1 = arith.constant 0 : i32
    return %c0_i32, %c0_i32_0 : i32, i32
  }
  func.func @transform_2(%arg0: i32) -> (i32, i32) {
    %c0_i32 = arith.constant 0 : i32
    %c0_i32_0 = arith.constant 0 : i32
    %c0_i32_1 = arith.constant 0 : i32
    return %c0_i32, %c0_i32_0 : i32, i32
  }
  func.func @transform_3(%arg0: i32) -> (i32, i32) {
    %c0_i32 = arith.constant 0 : i32
    %c0_i32_0 = arith.constant 0 : i32
    %c0_i32_1 = arith.constant 0 : i32
    return %c0_i32, %c0_i32_0 : i32, i32
  }
  func.func @transform_4(%arg0: i32) -> (i32, i32) {
    %c0_i32 = arith.constant 0 : i32
    %c0_i32_0 = arith.constant 0 : i32
    %c0_i32_1 = arith.constant 0 : i32
    return %c0_i32, %c0_i32_0 : i32, i32
  }
  func.func @transform_5(%arg0: i32) -> (i32, i32) {
    %c0_i32 = arith.constant 0 : i32
    %c0_i32_0 = arith.constant 0 : i32
    %c0_i32_1 = arith.constant 0 : i32
    return %c0_i32, %c0_i32_0 : i32, i32
  }
  func.func @transform_6(%arg0: i32) -> (i32, i32) {
    %c0_i32 = arith.constant 0 : i32
    %c0_i32_0 = arith.constant 0 : i32
    %c0_i32_1 = arith.constant 0 : i32
    return %c0_i32, %c0_i32_0 : i32, i32
  }
  func.func @transform_7(%arg0: i32) -> (i32, i32) {
    %c0_i32 = arith.constant 0 : i32
    %c0_i32_0 = arith.constant 0 : i32
    return %arg0, %c0_i32 : i32, i32
  }
}

module attributes {stable_mosaic.version = 11 : i64} {
  func.func @_mha_ln_kernel(%arg0: i32, %arg1: i32, %arg2: memref<1x8x32xbf16, #tpu.memory_space<vmem>>, %arg3: memref<1x8x32xbf16, #tpu.memory_space<vmem>>, %arg4: memref<1x1x8xi32, #tpu.memory_space<vmem>>, %arg5: memref<32x96xbf16, #tpu.memory_space<vmem>>, %arg6: memref<32x32xbf16, #tpu.memory_space<vmem>>, %arg7: memref<1x32xf32, #tpu.memory_space<vmem>>, %arg8: memref<1x32xf32, #tpu.memory_space<vmem>>, %arg9: memref<1x32xf32, #tpu.memory_space<vmem>>, %arg10: memref<1x8x32xbf16, #tpu.memory_space<vmem>>, %arg11: memref<8x32xbf16, #tpu.memory_space<vmem>>, %arg12: memref<8x32xbf16, #tpu.memory_space<vmem>>) attributes {dimension_semantics = [#tpu.dimension_semantics<parallel>, #tpu.dimension_semantics<arbitrary>], iteration_bounds = array<i64: 2, 1>, scalar_prefetch = 0 : i64, scratch_operands = 2 : i64, tpu.core_type = #tpu.core_type<tc>, window_params = [{transform_indices = @transform_0, window_bounds = array<i64: 1, 8, 32>}, {transform_indices = @transform_1, window_bounds = array<i64: 1, 8, 32>}, {transform_indices = @transform_2, window_bounds = array<i64: 1, 1, 8>}, {pipeline_mode = #tpu.pipeline_mode<synchronous>, transform_indices = @transform_3, window_bounds = array<i64: 32, 96>}, {pipeline_mode = #tpu.pipeline_mode<synchronous>, transform_indices = @transform_4, window_bounds = array<i64: 32, 32>}, {pipeline_mode = #tpu.pipeline_mode<synchronous>, transform_indices = @transform_5, window_bounds = array<i64: 1, 32>}, {pipeline_mode = #tpu.pipeline_mode<synchronous>, transform_indices = @transform_6, window_bounds = array<i64: 1, 32>}, {pipeline_mode = #tpu.pipeline_mode<synchronous>, transform_indices = @transform_7, window_bounds = array<i64: 1, 32>}, {transform_indices = @transform_8, window_bounds = array<i64: 1, 8, 32>}]} {
    %c0_i32 = arith.constant 0 : i32
    %0 = arith.cmpi eq, %arg1, %c0_i32 : i32
    %1 = arith.extui %0 : i1 to i32
    %c0_i32_0 = arith.constant 0 : i32
    %2 = arith.cmpi ne, %1, %c0_i32_0 : i32
    scf.if %2 {
      %c0_53 = arith.constant 0 : index
      %c0_54 = arith.constant 0 : index
      %c0_55 = arith.constant 0 : index
      %136 = vector.load %arg3[%c0_53, %c0_54, %c0_55] : memref<1x8x32xbf16, #tpu.memory_space<vmem>>, vector<1x8x32xbf16>
      %137 = vector.shape_cast %136 : vector<1x8x32xbf16> to vector<8x32xbf16>
      %c0_56 = arith.constant 0 : index
      %c32 = arith.constant 32 : index
      %138 = vector.load %arg5[%c0_56, %c32] : memref<32x96xbf16, #tpu.memory_space<vmem>>, vector<32x32xbf16>
      %cst_57 = arith.constant dense<0.000000e+00> : vector<8x32xf32>
      %139 = tpu.matmul %137, %138, %cst_57 {dimension_numbers = #tpu.dot_dimension_numbers<[1], [0], [0], [1], [0, 0, 1, 1], [], []>} : vector<8x32xbf16>, vector<32x32xbf16>, vector<8x32xf32> -> vector<8x32xf32>
      %140 = arith.truncf %139 : vector<8x32xf32> to vector<8x32xbf16>
      %c0_58 = arith.constant 0 : index
      %c0_59 = arith.constant 0 : index
      %141 = vector.load %arg11[%c0_58, %c0_59] : memref<8x32xbf16, #tpu.memory_space<vmem>>, vector<8x32xbf16>
      tpu.vector_store %arg11[%c0_58, %c0_59], %140 {strides = array<i32>} : memref<8x32xbf16, #tpu.memory_space<vmem>>, vector<8x32xbf16>,
      %c0_60 = arith.constant 0 : index
      %c64 = arith.constant 64 : index
      %142 = vector.load %arg5[%c0_60, %c64] : memref<32x96xbf16, #tpu.memory_space<vmem>>, vector<32x32xbf16>
      %cst_61 = arith.constant dense<0.000000e+00> : vector<8x32xf32>
      %143 = tpu.matmul %137, %142, %cst_61 {dimension_numbers = #tpu.dot_dimension_numbers<[1], [0], [0], [1], [0, 0, 1, 1], [], []>} : vector<8x32xbf16>, vector<32x32xbf16>, vector<8x32xf32> -> vector<8x32xf32>
      %144 = arith.truncf %143 : vector<8x32xf32> to vector<8x32xbf16>
      %c0_62 = arith.constant 0 : index
      %c0_63 = arith.constant 0 : index
      %145 = vector.load %arg12[%c0_62, %c0_63] : memref<8x32xbf16, #tpu.memory_space<vmem>>, vector<8x32xbf16>
      tpu.vector_store %arg12[%c0_62, %c0_63], %144 {strides = array<i32>} : memref<8x32xbf16, #tpu.memory_space<vmem>>, vector<8x32xbf16>,
    } else {
    }
    %c0 = arith.constant 0 : index
    %c0_1 = arith.constant 0 : index
    %c0_2 = arith.constant 0 : index
    %3 = vector.load %arg2[%c0, %c0_1, %c0_2] : memref<1x8x32xbf16, #tpu.memory_space<vmem>>, vector<1x8x32xbf16>
    %4 = vector.shape_cast %3 : vector<1x8x32xbf16> to vector<8x32xbf16>
    %5 = arith.extf %4 : vector<8x32xbf16> to vector<8x32xf32>
    %c0_3 = arith.constant 0 : index
    %c0_4 = arith.constant 0 : index
    %c0_5 = arith.constant 0 : index
    %6 = vector.load %arg2[%c0_3, %c0_4, %c0_5] : memref<1x8x32xbf16, #tpu.memory_space<vmem>>, vector<1x8x32xbf16>
    %7 = vector.shape_cast %6 : vector<1x8x32xbf16> to vector<8x32xbf16>
    %c0_6 = arith.constant 0 : index
    %c0_7 = arith.constant 0 : index
    %8 = vector.load %arg5[%c0_6, %c0_7] : memref<32x96xbf16, #tpu.memory_space<vmem>>, vector<32x32xbf16>
    %cst = arith.constant dense<0.000000e+00> : vector<8x32xf32>
    %9 = tpu.matmul %7, %8, %cst {dimension_numbers = #tpu.dot_dimension_numbers<[1], [0], [0], [1], [0, 0, 1, 1], [], []>} : vector<8x32xbf16>, vector<32x32xbf16>, vector<8x32xf32> -> vector<8x32xf32>
    %c0_8 = arith.constant 0 : index
    %c0_9 = arith.constant 0 : index
    %10 = vector.load %arg11[%c0_8, %c0_9] : memref<8x32xbf16, #tpu.memory_space<vmem>>, vector<8x32xbf16>
    %c0_10 = arith.constant 0 : index
    %c0_11 = arith.constant 0 : index
    %11 = vector.load %arg12[%c0_10, %c0_11] : memref<8x32xbf16, #tpu.memory_space<vmem>>, vector<8x32xbf16>
    %c0_12 = arith.constant 0 : index
    %c0_13 = arith.constant 0 : index
    %c0_14 = arith.constant 0 : index
    %12 = vector.load %arg4[%c0_12, %c0_13, %c0_14] : memref<1x1x8xi32, #tpu.memory_space<vmem>>, vector<1x1x8xi32>
    %13 = vector.shape_cast %12 : vector<1x1x8xi32> to vector<1x8xi32>
    %c0_i32_15 = arith.constant 0 : i32
    %14 = vector.broadcast %c0_i32_15 : i32 to vector<1x8xi32>
    %15 = arith.cmpi eq, %13, %14 : vector<1x8xi32>
    %16 = vector.extract_strided_slice %9 {offsets = [0, 0], sizes = [8, 8], strides = [1, 1]} : vector<8x32xf32> to vector<8x8xf32>
    %17 = arith.truncf %16 : vector<8x8xf32> to vector<8x8xbf16>
    %18 = vector.extract_strided_slice %10 {offsets = [0, 0], sizes = [8, 8], strides = [1, 1]} : vector<8x32xbf16> to vector<8x8xbf16>
    %19 = vector.extract_strided_slice %11 {offsets = [0, 0], sizes = [8, 8], strides = [1, 1]} : vector<8x32xbf16> to vector<8x8xbf16>
    %cst_16 = arith.constant dense<0.000000e+00> : vector<8x8xf32>
    %20 = tpu.matmul %17, %18, %cst_16 {dimension_numbers = #tpu.dot_dimension_numbers<[1], [1], [0], [0], [0, 0, 1, 0], [], []>} : vector<8x8xbf16>, vector<8x8xbf16>, vector<8x8xf32> -> vector<8x8xf32>
    %cst_17 = arith.constant -1.000000e+20 : f32
    %21 = vector.shape_cast %15 : vector<1x8xi1> to vector<1x8xi1>
    %22 = vector.broadcast %21 : vector<1x8xi1> to vector<8x8xi1>
    %23 = vector.broadcast %cst_17 : f32 to vector<8x8xf32>
    %24 = arith.select %22, %23, %20 : vector<8x8xi1>, vector<8x8xf32>
    %cst_18 = arith.constant dense<0xFF800000> : vector<8xf32>
    %25 = vector.multi_reduction <maximumf>, %24, %cst_18 [1] : vector<8x8xf32> to vector<8xf32>
    %26 = vector.shape_cast %25 : vector<8xf32> to vector<8x1xf32>
    %27 = vector.broadcast %26 : vector<8x1xf32> to vector<8x8xf32>
    %28 = arith.subf %24, %27 : vector<8x8xf32>
    %29 = math.exp %28 : vector<8x8xf32>
    %cst_19 = arith.constant dense<0.000000e+00> : vector<8xf32>
    %30 = vector.multi_reduction <add>, %29, %cst_19 [1] : vector<8x8xf32> to vector<8xf32>
    %31 = vector.shape_cast %30 : vector<8xf32> to vector<8x1xf32>
    %32 = tpu.reciprocal %31 {approx = true} : vector<8x1xf32> -> vector<8x1xf32>
    %33 = vector.broadcast %32 : vector<8x1xf32> to vector<8x8xf32>
    %34 = arith.mulf %29, %33 : vector<8x8xf32>
    %35 = arith.truncf %34 : vector<8x8xf32> to vector<8x8xbf16>
    %cst_20 = arith.constant dense<0.000000e+00> : vector<8x8xf32>
    %36 = tpu.matmul %35, %19, %cst_20 {dimension_numbers = #tpu.dot_dimension_numbers<[1], [0], [0], [1], [0, 0, 1, 1], [], []>} : vector<8x8xbf16>, vector<8x8xbf16>, vector<8x8xf32> -> vector<8x8xf32>
    %37 = vector.extract_strided_slice %9 {offsets = [0, 8], sizes = [8, 8], strides = [1, 1]} : vector<8x32xf32> to vector<8x8xf32>
    %38 = arith.truncf %37 : vector<8x8xf32> to vector<8x8xbf16>
    %39 = vector.extract_strided_slice %10 {offsets = [0, 8], sizes = [8, 8], strides = [1, 1]} : vector<8x32xbf16> to vector<8x8xbf16>
    %40 = vector.extract_strided_slice %11 {offsets = [0, 8], sizes = [8, 8], strides = [1, 1]} : vector<8x32xbf16> to vector<8x8xbf16>
    %cst_21 = arith.constant dense<0.000000e+00> : vector<8x8xf32>
    %41 = tpu.matmul %38, %39, %cst_21 {dimension_numbers = #tpu.dot_dimension_numbers<[1], [1], [0], [0], [0, 0, 1, 0], [], []>} : vector<8x8xbf16>, vector<8x8xbf16>, vector<8x8xf32> -> vector<8x8xf32>
    %cst_22 = arith.constant -1.000000e+20 : f32
    %42 = vector.shape_cast %15 : vector<1x8xi1> to vector<1x8xi1>
    %43 = vector.broadcast %42 : vector<1x8xi1> to vector<8x8xi1>
    %44 = vector.broadcast %cst_22 : f32 to vector<8x8xf32>
    %45 = arith.select %43, %44, %41 : vector<8x8xi1>, vector<8x8xf32>
    %cst_23 = arith.constant dense<0xFF800000> : vector<8xf32>
    %46 = vector.multi_reduction <maximumf>, %45, %cst_23 [1] : vector<8x8xf32> to vector<8xf32>
    %47 = vector.shape_cast %46 : vector<8xf32> to vector<8x1xf32>
    %48 = vector.broadcast %47 : vector<8x1xf32> to vector<8x8xf32>
    %49 = arith.subf %45, %48 : vector<8x8xf32>
    %50 = math.exp %49 : vector<8x8xf32>
    %cst_24 = arith.constant dense<0.000000e+00> : vector<8xf32>
    %51 = vector.multi_reduction <add>, %50, %cst_24 [1] : vector<8x8xf32> to vector<8xf32>
    %52 = vector.shape_cast %51 : vector<8xf32> to vector<8x1xf32>
    %53 = tpu.reciprocal %52 {approx = true} : vector<8x1xf32> -> vector<8x1xf32>
    %54 = vector.broadcast %53 : vector<8x1xf32> to vector<8x8xf32>
    %55 = arith.mulf %50, %54 : vector<8x8xf32>
    %56 = arith.truncf %55 : vector<8x8xf32> to vector<8x8xbf16>
    %cst_25 = arith.constant dense<0.000000e+00> : vector<8x8xf32>
    %57 = tpu.matmul %56, %40, %cst_25 {dimension_numbers = #tpu.dot_dimension_numbers<[1], [0], [0], [1], [0, 0, 1, 1], [], []>} : vector<8x8xbf16>, vector<8x8xbf16>, vector<8x8xf32> -> vector<8x8xf32>
    %58 = vector.extract_strided_slice %9 {offsets = [0, 16], sizes = [8, 8], strides = [1, 1]} : vector<8x32xf32> to vector<8x8xf32>
    %59 = arith.truncf %58 : vector<8x8xf32> to vector<8x8xbf16>
    %60 = vector.extract_strided_slice %10 {offsets = [0, 16], sizes = [8, 8], strides = [1, 1]} : vector<8x32xbf16> to vector<8x8xbf16>
    %61 = vector.extract_strided_slice %11 {offsets = [0, 16], sizes = [8, 8], strides = [1, 1]} : vector<8x32xbf16> to vector<8x8xbf16>
    %cst_26 = arith.constant dense<0.000000e+00> : vector<8x8xf32>
    %62 = tpu.matmul %59, %60, %cst_26 {dimension_numbers = #tpu.dot_dimension_numbers<[1], [1], [0], [0], [0, 0, 1, 0], [], []>} : vector<8x8xbf16>, vector<8x8xbf16>, vector<8x8xf32> -> vector<8x8xf32>
    %cst_27 = arith.constant -1.000000e+20 : f32
    %63 = vector.shape_cast %15 : vector<1x8xi1> to vector<1x8xi1>
    %64 = vector.broadcast %63 : vector<1x8xi1> to vector<8x8xi1>
    %65 = vector.broadcast %cst_27 : f32 to vector<8x8xf32>
    %66 = arith.select %64, %65, %62 : vector<8x8xi1>, vector<8x8xf32>
    %cst_28 = arith.constant dense<0xFF800000> : vector<8xf32>
    %67 = vector.multi_reduction <maximumf>, %66, %cst_28 [1] : vector<8x8xf32> to vector<8xf32>
    %68 = vector.shape_cast %67 : vector<8xf32> to vector<8x1xf32>
    %69 = vector.broadcast %68 : vector<8x1xf32> to vector<8x8xf32>
    %70 = arith.subf %66, %69 : vector<8x8xf32>
    %71 = math.exp %70 : vector<8x8xf32>
    %cst_29 = arith.constant dense<0.000000e+00> : vector<8xf32>
    %72 = vector.multi_reduction <add>, %71, %cst_29 [1] : vector<8x8xf32> to vector<8xf32>
    %73 = vector.shape_cast %72 : vector<8xf32> to vector<8x1xf32>
    %74 = tpu.reciprocal %73 {approx = true} : vector<8x1xf32> -> vector<8x1xf32>
    %75 = vector.broadcast %74 : vector<8x1xf32> to vector<8x8xf32>
    %76 = arith.mulf %71, %75 : vector<8x8xf32>
    %77 = arith.truncf %76 : vector<8x8xf32> to vector<8x8xbf16>
    %cst_30 = arith.constant dense<0.000000e+00> : vector<8x8xf32>
    %78 = tpu.matmul %77, %61, %cst_30 {dimension_numbers = #tpu.dot_dimension_numbers<[1], [0], [0], [1], [0, 0, 1, 1], [], []>} : vector<8x8xbf16>, vector<8x8xbf16>, vector<8x8xf32> -> vector<8x8xf32>
    %79 = vector.extract_strided_slice %9 {offsets = [0, 24], sizes = [8, 8], strides = [1, 1]} : vector<8x32xf32> to vector<8x8xf32>
    %80 = arith.truncf %79 : vector<8x8xf32> to vector<8x8xbf16>
    %81 = vector.extract_strided_slice %10 {offsets = [0, 24], sizes = [8, 8], strides = [1, 1]} : vector<8x32xbf16> to vector<8x8xbf16>
    %82 = vector.extract_strided_slice %11 {offsets = [0, 24], sizes = [8, 8], strides = [1, 1]} : vector<8x32xbf16> to vector<8x8xbf16>
    %cst_31 = arith.constant dense<0.000000e+00> : vector<8x8xf32>
    %83 = tpu.matmul %80, %81, %cst_31 {dimension_numbers = #tpu.dot_dimension_numbers<[1], [1], [0], [0], [0, 0, 1, 0], [], []>} : vector<8x8xbf16>, vector<8x8xbf16>, vector<8x8xf32> -> vector<8x8xf32>
    %cst_32 = arith.constant -1.000000e+20 : f32
    %84 = vector.shape_cast %15 : vector<1x8xi1> to vector<1x8xi1>
    %85 = vector.broadcast %84 : vector<1x8xi1> to vector<8x8xi1>
    %86 = vector.broadcast %cst_32 : f32 to vector<8x8xf32>
    %87 = arith.select %85, %86, %83 : vector<8x8xi1>, vector<8x8xf32>
    %cst_33 = arith.constant dense<0xFF800000> : vector<8xf32>
    %88 = vector.multi_reduction <maximumf>, %87, %cst_33 [1] : vector<8x8xf32> to vector<8xf32>
    %89 = vector.shape_cast %88 : vector<8xf32> to vector<8x1xf32>
    %90 = vector.broadcast %89 : vector<8x1xf32> to vector<8x8xf32>
    %91 = arith.subf %87, %90 : vector<8x8xf32>
    %92 = math.exp %91 : vector<8x8xf32>
    %cst_34 = arith.constant dense<0.000000e+00> : vector<8xf32>
    %93 = vector.multi_reduction <add>, %92, %cst_34 [1] : vector<8x8xf32> to vector<8xf32>
    %94 = vector.shape_cast %93 : vector<8xf32> to vector<8x1xf32>
    %95 = tpu.reciprocal %94 {approx = true} : vector<8x1xf32> -> vector<8x1xf32>
    %96 = vector.broadcast %95 : vector<8x1xf32> to vector<8x8xf32>
    %97 = arith.mulf %92, %96 : vector<8x8xf32>
    %98 = arith.truncf %97 : vector<8x8xf32> to vector<8x8xbf16>
    %cst_35 = arith.constant dense<0.000000e+00> : vector<8x8xf32>
    %99 = tpu.matmul %98, %82, %cst_35 {dimension_numbers = #tpu.dot_dimension_numbers<[1], [0], [0], [1], [0, 0, 1, 1], [], []>} : vector<8x8xbf16>, vector<8x8xbf16>, vector<8x8xf32> -> vector<8x8xf32>
    %100 = tpu.concatenate %36, %57, %78, %99 in 1 : vector<8x8xf32>, vector<8x8xf32>, vector<8x8xf32>, vector<8x8xf32> -> vector<8x32xf32>
    %101 = arith.truncf %100 : vector<8x32xf32> to vector<8x32xbf16>
    %c0_36 = arith.constant 0 : index
    %c0_37 = arith.constant 0 : index
    %102 = vector.load %arg6[%c0_36, %c0_37] : memref<32x32xbf16, #tpu.memory_space<vmem>>, vector<32x32xbf16>
    %cst_38 = arith.constant dense<0.000000e+00> : vector<8x32xf32>
    %103 = tpu.matmul %101, %102, %cst_38 {dimension_numbers = #tpu.dot_dimension_numbers<[1], [0], [0], [1], [0, 0, 1, 1], [], []>} : vector<8x32xbf16>, vector<32x32xbf16>, vector<8x32xf32> -> vector<8x32xf32>
    %c0_39 = arith.constant 0 : index
    %c0_40 = arith.constant 0 : index
    %104 = vector.load %arg7[%c0_39, %c0_40] : memref<1x32xf32, #tpu.memory_space<vmem>>, vector<1x32xf32>
    %105 = vector.broadcast %104 : vector<1x32xf32> to vector<8x32xf32>
    %106 = arith.addf %103, %105 : vector<8x32xf32>
    %107 = arith.addf %106, %5 : vector<8x32xf32>
    %cst_41 = arith.constant dense<0.000000e+00> : vector<8xf32>
    %108 = vector.multi_reduction <add>, %107, %cst_41 [1] : vector<8x32xf32> to vector<8xf32>
    %109 = vector.shape_cast %108 : vector<8xf32> to vector<8x1xf32>
    %cst_42 = arith.constant 3.200000e+01 : f32
    %110 = vector.broadcast %cst_42 : f32 to vector<8x1xf32>
    %111 = arith.divf %109, %110 : vector<8x1xf32>
    %112 = vector.broadcast %111 : vector<8x1xf32> to vector<8x32xf32>
    %113 = arith.subf %107, %112 : vector<8x32xf32>
    %114 = arith.mulf %113, %113 : vector<8x32xf32>
    %cst_43 = arith.constant dense<0.000000e+00> : vector<8xf32>
    %115 = vector.multi_reduction <add>, %114, %cst_43 [1] : vector<8x32xf32> to vector<8xf32>
    %116 = vector.shape_cast %115 : vector<8xf32> to vector<8x1xf32>
    %cst_44 = arith.constant 3.200000e+01 : f32
    %117 = vector.broadcast %cst_44 : f32 to vector<8x1xf32>
    %118 = arith.divf %116, %117 : vector<8x1xf32>
    %119 = vector.broadcast %111 : vector<8x1xf32> to vector<8x32xf32>
    %120 = arith.subf %107, %119 : vector<8x32xf32>
    %cst_45 = arith.constant 9.99999974E-6 : f32
    %121 = vector.broadcast %cst_45 : f32 to vector<8x1xf32>
    %122 = arith.addf %118, %121 : vector<8x1xf32>
    %123 = math.rsqrt %122 : vector<8x1xf32>
    %124 = vector.broadcast %123 : vector<8x1xf32> to vector<8x32xf32>
    %125 = arith.mulf %120, %124 : vector<8x32xf32>
    %c0_46 = arith.constant 0 : index
    %c0_47 = arith.constant 0 : index
    %126 = vector.load %arg8[%c0_46, %c0_47] : memref<1x32xf32, #tpu.memory_space<vmem>>, vector<1x32xf32>
    %127 = vector.broadcast %126 : vector<1x32xf32> to vector<8x32xf32>
    %128 = arith.mulf %125, %127 : vector<8x32xf32>
    %c0_48 = arith.constant 0 : index
    %c0_49 = arith.constant 0 : index
    %129 = vector.load %arg9[%c0_48, %c0_49] : memref<1x32xf32, #tpu.memory_space<vmem>>, vector<1x32xf32>
    %130 = vector.broadcast %129 : vector<1x32xf32> to vector<8x32xf32>
    %131 = arith.addf %128, %130 : vector<8x32xf32>
    %132 = arith.truncf %131 : vector<8x32xf32> to vector<8x32xbf16>
    %c0_50 = arith.constant 0 : index
    %c0_51 = arith.constant 0 : index
    %c0_52 = arith.constant 0 : index
    %133 = vector.load %arg10[%c0_50, %c0_51, %c0_52] : memref<1x8x32xbf16, #tpu.memory_space<vmem>>, vector<1x8x32xbf16>
    %134 = vector.shape_cast %133 : vector<1x8x32xbf16> to vector<8x32xbf16>
    %135 = vector.shape_cast %132 : vector<8x32xbf16> to vector<1x8x32xbf16>
    tpu.vector_store %arg10[%c0_50, %c0_51, %c0_52], %135 {strides = array<i32>} : memref<1x8x32xbf16, #tpu.memory_space<vmem>>, vector<1x8x32xbf16>,
    return
  }
  func.func @transform_0(%arg0: i32, %arg1: i32) -> (i32, i32, i32) {
    %c0_i32 = arith.constant 0 : i32
    %c0_i32_0 = arith.constant 0 : i32
    return %arg0, %arg1, %c0_i32 : i32, i32, i32
  }
  func.func @transform_1(%arg0: i32, %arg1: i32) -> (i32, i32, i32) {
    %c0_i32 = arith.constant 0 : i32
    %c0_i32_0 = arith.constant 0 : i32
    %c0_i32_1 = arith.constant 0 : i32
    return %arg0, %c0_i32, %c0_i32_0 : i32, i32, i32
  }
  func.func @transform_2(%arg0: i32, %arg1: i32) -> (i32, i32, i32) {
    %c0_i32 = arith.constant 0 : i32
    %c0_i32_0 = arith.constant 0 : i32
    %c0_i32_1 = arith.constant 0 : i32
    return %arg0, %c0_i32, %c0_i32_0 : i32, i32, i32
  }
  func.func @transform_3(%arg0: i32, %arg1: i32) -> (i32, i32) {
    %c0_i32 = arith.constant 0 : i32
    %c0_i32_0 = arith.constant 0 : i32
    %c0_i32_1 = arith.constant 0 : i32
    return %c0_i32, %c0_i32_0 : i32, i32
  }
  func.func @transform_4(%arg0: i32, %arg1: i32) -> (i32, i32) {
    %c0_i32 = arith.constant 0 : i32
    %c0_i32_0 = arith.constant 0 : i32
    %c0_i32_1 = arith.constant 0 : i32
    return %c0_i32, %c0_i32_0 : i32, i32
  }
  func.func @transform_5(%arg0: i32, %arg1: i32) -> (i32, i32) {
    %c0_i32 = arith.constant 0 : i32
    %c0_i32_0 = arith.constant 0 : i32
    %c0_i32_1 = arith.constant 0 : i32
    return %c0_i32, %c0_i32_0 : i32, i32
  }
  func.func @transform_6(%arg0: i32, %arg1: i32) -> (i32, i32) {
    %c0_i32 = arith.constant 0 : i32
    %c0_i32_0 = arith.constant 0 : i32
    %c0_i32_1 = arith.constant 0 : i32
    return %c0_i32, %c0_i32_0 : i32, i32
  }
  func.func @transform_7(%arg0: i32, %arg1: i32) -> (i32, i32) {
    %c0_i32 = arith.constant 0 : i32
    %c0_i32_0 = arith.constant 0 : i32
    %c0_i32_1 = arith.constant 0 : i32
    return %c0_i32, %c0_i32_0 : i32, i32
  }
  func.func @transform_8(%arg0: i32, %arg1: i32) -> (i32, i32, i32) {
    %c0_i32 = arith.constant 0 : i32
    %c0_i32_0 = arith.constant 0 : i32
    return %arg0, %arg1, %c0_i32 : i32, i32, i32
  }
}

</mosaic_0001>

<llo_original>
// kernel: tpu_custom_call.1
$region0: #{tpu_custom_call.1}
  #allocation0 [shape = 'u32[]', space=smem, size = 0x4, offset = 0x4, fixed_abs, tag = 'smem constant byte address 0x4 - core index']
  #allocation1 [shape = 'u32[144,128]{1,0:T(1,128)}', space=vmem, size = 0x12000, scoped, tag = 'internal scratch']
  %s0 = inlined_call_operand.hbm [shape: f32[8,128], index: 0, kind: input, shape index: {}]
  %s1 = inlined_call_operand.hbm [shape: f32[8,128], index: 1, kind: output, shape index: {}]
  %s2 = sld [smem:[#allocation0]]
  $region18: #{tpu_custom_call.1} parent=0
    _
  %s4 = ssub.s32 1, %s2
  %s5 = scalar_select 0, %s4, %s2
  $region1: #{tpu_custom_call.1} parent=0
    #allocation2 [shape = 'u8[4096]{0}', space=vmem, size = 0x1000, scoped, tag = 'input window, operand 0, single buffered']
    #allocation3 [shape = 's32[1]{0}', space=sflag, size = 0x4, scoped, tag = 'scoped memory for tpu_custom_call.1']
    #allocation4 [shape = 's32[1]{0}', space=sflag, size = 0x4, scoped, tag = 'scoped memory for tpu_custom_call.1']
    #allocation5 [shape = 'u8[4096]{0}', space=vmem, size = 0x1000, scoped, tag = 'output window, operand 0, single buffered']
    %6 = vsyncpa [#allocation3], 0
    %7 = vsyncpa [#allocation4], 0
    // Predicated region
    $region2: #{tpu_custom_call.1} parent=1 // pred_check
      _
    $region3: #{tpu_custom_call.1} parent=1 // pred_check_branch
      %9 = sbr.rel (0) target = $region5
    $region4: #{tpu_custom_call.1} parent=1 // pred_region
      %s11 = ssub.s32 128, 128
      %12 = vsyncadd [#allocation3], %s11
      %s14 = sshll.u32 [#allocation2], 4
      %s15 = int_to_ptr.vmem [resolvable:$true] %s14
      %17 = dma.hbm_to_vmem [thread:$0]  %s0, 128, %s15, [#allocation3]
    $region5: #{tpu_custom_call.1} parent=1 // pred_fallthru
      _
    // Predicated region
    $region6: #{tpu_custom_call.1} parent=1 // pred_check
      _
    $region7: #{tpu_custom_call.1} parent=1 // pred_check_branch
      %19 = sbr.rel (0) target = $region9
    $region8: #{tpu_custom_call.1} parent=1 // pred_region
      %20 = dma.done [#allocation3], 128
    $region9: #{tpu_custom_call.1} parent=1 // pred_fallthru
      _
    %v21 = vld [vmem:[#allocation2] sm:$0xff]
    %22 = vst [vmem:[#allocation5] sm:$0xff] %v21
    // Predicated region
    $region10: #{tpu_custom_call.1} parent=1 // pred_check
      _
    $region11: #{tpu_custom_call.1} parent=1 // pred_check_branch
      %24 = sbr.rel (0) target = $region13
    $region12: #{tpu_custom_call.1} parent=1 // pred_region
      %s26 = ssub.s32 128, 128
      %27 = vsyncadd [#allocation4], %s26
      %s29 = sshll.u32 [#allocation5], 4
      %s30 = int_to_ptr.vmem [resolvable:$true] %s29
      %32 = dma.vmem_to_hbm [thread:$0]  %s30, 128, %s1, [#allocation4]
    $region13: #{tpu_custom_call.1} parent=1 // pred_fallthru
      _
    // Predicated region
    $region14: #{tpu_custom_call.1} parent=1 // pred_check
      _
    $region15: #{tpu_custom_call.1} parent=1 // pred_check_branch
      %34 = sbr.rel (0) target = $region17
    $region16: #{tpu_custom_call.1} parent=1 // pred_region
      %35 = dma.done [#allocation4], 128
    $region17: #{tpu_custom_call.1} parent=1 // pred_fallthru
      _
    %36 = vsyncpa [#allocation3], 1
    %37 = vsyncpa [#allocation4], 1

// kernel: _lambda_.17
$region0: #{_lambda_.17}
  #allocation0 [shape = 'u32[]', space=smem, size = 0x4, offset = 0x4, fixed_abs, tag = 'smem constant byte address 0x4 - core index']
  #allocation1 [shape = 'u32[144,128]{1,0:T(1,128)}', space=vmem, size = 0x12000, scoped, tag = 'internal scratch']
  %s0 = inlined_call_operand.hbm [shape: bf16[16,32], index: 0, kind: input, shape index: {}]
  %s1 = inlined_call_operand.hbm [shape: bf16[32,128], index: 1, kind: input, shape index: {}]
  %s2 = inlined_call_operand.hbm [shape: f32[1,128], index: 2, kind: input, shape index: {}]
  %s3 = inlined_call_operand.hbm [shape: f32[16,128], index: 3, kind: output, shape index: {}]
  %s4 = sld [smem:[#allocation0]]
  $region34: #{_lambda_.17} parent=0
    _
  %s6 = ssub.s32 1, %s4
  %s7 = scalar_select 0, %s6, %s4
  $region1: #{_lambda_.17} parent=0
    #allocation2 [shape = 'u8[4096]{0}', space=vmem, size = 0x1000, scoped, tag = 'input window, operand 0, single buffered']
    #allocation3 [shape = 's32[1]{0}', space=sflag, size = 0x4, scoped, tag = 'scoped memory for _lambda_.17']
    #allocation4 [shape = 's32[1]{0}', space=sflag, size = 0x4, scoped, tag = 'scoped memory for _lambda_.17']
    #allocation5 [shape = 'u8[8192]{0}', space=vmem, size = 0x2000, scoped, tag = 'input window, operand 1, single buffered']
    #allocation6 [shape = 's32[1]{0}', space=sflag, size = 0x4, scoped, tag = 'scoped memory for _lambda_.17']
    #allocation7 [shape = 'u8[512]{0}', space=vmem, size = 0x400, scoped, tag = 'input window, operand 2, single buffered']
    #allocation8 [shape = 'u8[8192]{0}', space=vmem, size = 0x2000, scoped, tag = 'output window, operand 0, single buffered']
    %8 = vsyncpa [#allocation3], 0
    %9 = vsyncpa [#allocation6], 0
    %10 = vsyncpa [#allocation4], 0
    // Predicated region
    $region2: #{_lambda_.17} parent=1 // pred_check
      _
    $region3: #{_lambda_.17} parent=1 // pred_check_branch
      %12 = sbr.rel (0) target = $region5
    $region4: #{_lambda_.17} parent=1 // pred_region
      %s14 = ssub.s32 128, 128
      %15 = vsyncadd [#allocation3], %s14
      %s16 = sshll.u32 [#allocation2], 4
      %s17 = int_to_ptr.vmem [resolvable:$true] %s16
      %22 = dma.hbm_to_vmem [thread:$0]  %s0, 128, %s17, [#allocation3], 64, 64, 4
    $region5: #{_lambda_.17} parent=1 // pred_fallthru
      _
    // Predicated region
    $region6: #{_lambda_.17} parent=1 // pred_check
      _
    $region7: #{_lambda_.17} parent=1 // pred_check_branch
      %24 = sbr.rel (0) target = $region9
    $region8: #{_lambda_.17} parent=1 // pred_region
      %s26 = ssub.s32 256, 256
      %27 = vsyncadd [#allocation6], %s26
      %s28 = sshll.u32 [#allocation5], 4
      %s29 = int_to_ptr.vmem [resolvable:$true] %s28
      %34 = dma.hbm_to_vmem [thread:$0]  %s1, 256, %s29, [#allocation6], 64, 64, 4
    $region9: #{_lambda_.17} parent=1 // pred_fallthru
      _
    // Predicated region
    $region10: #{_lambda_.17} parent=1 // pred_check
      _
    $region11: #{_lambda_.17} parent=1 // pred_check_branch
      %36 = sbr.rel (0) target = $region13
    $region12: #{_lambda_.17} parent=1 // pred_region
      %s38 = ssub.s32 16, 16
      %39 = vsyncadd [#allocation6], %s38
      %s41 = sshll.u32 [#allocation7], 4
      %s42 = int_to_ptr.vmem [resolvable:$true] %s41
      %44 = dma.hbm_to_vmem [thread:$0]  %s2, 16, %s42, [#allocation6]
    $region13: #{_lambda_.17} parent=1 // pred_fallthru
      _
    // Predicated region
    $region14: #{_lambda_.17} parent=1 // pred_check
      _
    $region15: #{_lambda_.17} parent=1 // pred_check_branch
      %46 = sbr.rel (0) target = $region17
    $region16: #{_lambda_.17} parent=1 // pred_region
      %47 = dma.done [#allocation3], 128
    $region17: #{_lambda_.17} parent=1 // pred_fallthru
      _
    // Predicated region
    $region18: #{_lambda_.17} parent=1 // pred_check
      _
    $region19: #{_lambda_.17} parent=1 // pred_check_branch
      %49 = sbr.rel (0) target = $region21
    $region20: #{_lambda_.17} parent=1 // pred_region
      %50 = dma.done [#allocation6], 256
    $region21: #{_lambda_.17} parent=1 // pred_fallthru
      _
    // Predicated region
    $region22: #{_lambda_.17} parent=1 // pred_check
      _
    $region23: #{_lambda_.17} parent=1 // pred_check_branch
      %52 = sbr.rel (0) target = $region25
    $region24: #{_lambda_.17} parent=1 // pred_region
      %53 = dma.done [#allocation6], 16
    $region25: #{_lambda_.17} parent=1 // pred_fallthru
      _
    %v55 = vld [vmem:[#allocation2] sm:$0xf]
    %v56 = vld [vmem:[#allocation2 + $0x4] sm:$0xf]
    %v57 = vld [vmem:[#allocation5] sm:$0xf]
    %v58 = vld [vmem:[#allocation5 + $0x4] sm:$0xf]
    %v59 = vld [vmem:[#allocation5 + $0x8] sm:$0xf]
    %v60 = vld [vmem:[#allocation5 + $0xc] sm:$0xf]
    %v61 = vld [vmem:[#allocation7] sm:$0x1]
    %v63 = vlaneseq
    %v64 = vshrl.u32 %v63, 7
    %v65 = vsub.s32 0, %v64
    %v66 = vrot.slane %v61, %v65
    %v70 = vunpack.c.l.b16 %v55
    %v71 = vunpack.c.l.b16 %v56
    %v72 = vpack.c.b16 %v71, %v70
    %v77 = vunpack.c.l.b16 %v57
    %v78 = vunpack.c.l.b16 %v58
    %v79 = vunpack.c.l.b16 %v59
    %v80 = vunpack.c.l.b16 %v60
    %v81 = vpack.c.b16 %v78, %v77
    %v82 = vpack.c.b16 %v80, %v79
    %vm85 = vcmask 261120
    %v87 = vsel %vm85, %v72, 0
    %89 = vmatprep.subr.bf16.mxu0 0
    %90 = vmatpush1.bf16.msra.mxu0 %v81
    %91 = vmatprep.subr.bf16.mxu0 0
    %92 = vmatpush1.bf16.msra.mxu0 %v82
    %93 = vmatprep.subr.bf16.mxu0 0
    %94 = vmatpush1.bf16.msra.mxu0 0
    %95 = vmatprep.subr.bf16.mxu0 0
    %96 = vmatpush1.bf16.msra.mxu0 0
    %97 = vmatprep.subr.bf16.mxu0 0
    %98 = vmatpush1.bf16.msra.mxu0 0
    %99 = vmatprep.subr.bf16.mxu0 0
    %100 = vmatpush1.bf16.msra.mxu0 0
    %101 = vmatprep.subr.bf16.mxu0 0
    %102 = vmatpush1.bf16.msra.mxu0 0
    %103 = vmatprep.subr.bf16.mxu0 0
    %104 = vmatpush1.bf16.msra.mxu0 0
    %105 = vmatprep.subr.bf16.mxu0 0
    %106 = vmatpush1.bf16.msra.mxu0 0
    %107 = vmatprep.subr.bf16.mxu0 0
    %108 = vmatpush1.bf16.msra.mxu0 0
    %109 = vmatprep.subr.bf16.mxu0 0
    %110 = vmatpush1.bf16.msra.mxu0 0
    %111 = vmatprep.subr.bf16.mxu0 0
    %112 = vmatpush1.bf16.msra.mxu0 0
    %113 = vmatprep.subr.bf16.mxu0 0
    %114 = vmatpush1.bf16.msra.mxu0 0
    %115 = vmatprep.subr.bf16.mxu0 0
    %116 = vmatpush1.bf16.msra.mxu0 0
    %117 = vmatprep.subr.bf16.mxu0 0
    %118 = vmatpush1.bf16.msra.mxu0 0
    %119 = vmatprep.subr.bf16.mxu0 0
    %120 = vmatpush1.bf16.msra.mxu0 0
    %121 = vmatprep.mubr.bf16.mxu0 0
    %122 = vmatmul.mubr.bf16.gmra.mrb[0].mxu0 %v87
    %v123 = vpop.f32.mrb[0].mxu0
    %v124 = vadd.f32 %v66, %v123
    %v125 = vpop.f32.mrb[0].mxu0
    %v126 = vpop.f32.mrb[0].mxu0
    %v127 = vadd.f32 %v66, %v126
    %v128 = vpop.f32.mrb[0].mxu0
    %129 = vdwg.mxu0
    %130 = vst [vmem:[#allocation8] sm:$0xff] %v124
    %131 = vst [vmem:[#allocation8 + $0x8] sm:$0xff] %v127
    // Predicated region
    $region26: #{_lambda_.17} parent=1 // pred_check
      _
    $region27: #{_lambda_.17} parent=1 // pred_check_branch
      %133 = sbr.rel (0) target = $region29
    $region28: #{_lambda_.17} parent=1 // pred_region
      %s135 = ssub.s32 256, 256
      %136 = vsyncadd [#allocation4], %s135
      %s137 = sshll.u32 [#allocation8], 4
      %s138 = int_to_ptr.vmem [resolvable:$true] %s137
      %143 = dma.vmem_to_hbm [thread:$0]  %s138, 256, %s3, [#allocation4], 128, 128, 8
    $region29: #{_lambda_.17} parent=1 // pred_fallthru
      _
    // Predicated region
    $region30: #{_lambda_.17} parent=1 // pred_check
      _
    $region31: #{_lambda_.17} parent=1 // pred_check_branch
      %145 = sbr.rel (0) target = $region33
    $region32: #{_lambda_.17} parent=1 // pred_region
      %146 = dma.done [#allocation4], 256
    $region33: #{_lambda_.17} parent=1 // pred_fallthru
      _
    %147 = vsyncpa [#allocation3], 1
    %148 = vsyncpa [#allocation6], 1
    %149 = vsyncpa [#allocation4], 1

// kernel: _lambda_.10
$region0: #{_lambda_.10}
  #allocation0 [shape = 'u32[]', space=smem, size = 0x4, offset = 0x4, fixed_abs, tag = 'smem constant byte address 0x4 - core index']
  #allocation1 [shape = 'u32[144,128]{1,0:T(1,128)}', space=vmem, size = 0x12000, scoped, tag = 'internal scratch']
  %s0 = inlined_call_operand.hbm [shape: bf16[16,32], index: 0, kind: input, shape index: {}]
  %s1 = inlined_call_operand.hbm [shape: bf16[32,128], index: 1, kind: input, shape index: {}]
  %s2 = inlined_call_operand.hbm [shape: f32[1,128], index: 2, kind: input, shape index: {}]
  %s3 = inlined_call_operand.hbm [shape: bf16[128,32], index: 3, kind: input, shape index: {}]
  %s4 = inlined_call_operand.hbm [shape: f32[1,32], index: 4, kind: input, shape index: {}]
  %s5 = inlined_call_operand.hbm [shape: f32[1,32], index: 5, kind: input, shape index: {}]
  %s6 = inlined_call_operand.hbm [shape: f32[1,32], index: 6, kind: input, shape index: {}]
  %s7 = inlined_call_operand.hbm [shape: bf16[16,32], index: 7, kind: output, shape index: {}]
  %s8 = sld [smem:[#allocation0]]
  $region66: #{_lambda_.10} parent=0
    _
  %s10 = ssub.s32 1, %s8
  %s11 = scalar_select 0, %s10, %s8
  $region1: #{_lambda_.10} parent=0
    #allocation2 [shape = 'u8[4096]{0}', space=vmem, size = 0x1000, scoped, tag = 'input window, operand 0, single buffered']
    #allocation3 [shape = 's32[1]{0}', space=sflag, size = 0x4, scoped, tag = 'scoped memory for _lambda_.10']
    #allocation4 [shape = 's32[1]{0}', space=sflag, size = 0x4, scoped, tag = 'scoped memory for _lambda_.10']
    #allocation5 [shape = 'u8[8192]{0}', space=vmem, size = 0x2000, scoped, tag = 'input window, operand 1, single buffered']
    #allocation6 [shape = 's32[1]{0}', space=sflag, size = 0x4, scoped, tag = 'scoped memory for _lambda_.10']
    #allocation7 [shape = 'u8[512]{0}', space=vmem, size = 0x400, scoped, tag = 'input window, operand 2, single buffered']
    #allocation8 [shape = 'u8[32768]{0}', space=vmem, size = 0x8000, scoped, tag = 'input window, operand 3, single buffered']
    #allocation9 [shape = 's32[1]{0}', space=sflag, size = 0x4, scoped, tag = 'scoped memory for _lambda_.10']
    #allocation10 [shape = 'u8[512]{0}', space=vmem, size = 0x400, scoped, tag = 'input window, operand 4, single buffered']
    #allocation11 [shape = 'u8[512]{0}', space=vmem, size = 0x400, scoped, tag = 'input window, operand 5, single buffered']
    #allocation12 [shape = 's32[1]{0}', space=sflag, size = 0x4, scoped, tag = 'scoped memory for _lambda_.10']
    #allocation13 [shape = 'u8[512]{0}', space=vmem, size = 0x400, scoped, tag = 'input window, operand 6, single buffered']
    #allocation14 [shape = 'u8[4096]{0}', space=vmem, size = 0x1000, scoped, tag = 'output window, operand 0, single buffered']
    %12 = vsyncpa [#allocation3], 0
    %13 = vsyncpa [#allocation6], 0
    %14 = vsyncpa [#allocation9], 0
    %15 = vsyncpa [#allocation12], 0
    %16 = vsyncpa [#allocation4], 0
    // Predicated region
    $region2: #{_lambda_.10} parent=1 // pred_check
      _
    $region3: #{_lambda_.10} parent=1 // pred_check_branch
      %18 = sbr.rel (0) target = $region5
    $region4: #{_lambda_.10} parent=1 // pred_region
      %s20 = ssub.s32 128, 128
      %21 = vsyncadd [#allocation3], %s20
      %s22 = sshll.u32 [#allocation2], 4
      %s23 = int_to_ptr.vmem [resolvable:$true] %s22
      %28 = dma.hbm_to_vmem [thread:$0]  %s0, 128, %s23, [#allocation3], 64, 64, 4
    $region5: #{_lambda_.10} parent=1 // pred_fallthru
      _
    // Predicated region
    $region6: #{_lambda_.10} parent=1 // pred_check
      _
    $region7: #{_lambda_.10} parent=1 // pred_check_branch
      %30 = sbr.rel (0) target = $region9
    $region8: #{_lambda_.10} parent=1 // pred_region
      %s32 = ssub.s32 256, 256
      %33 = vsyncadd [#allocation6], %s32
      %s34 = sshll.u32 [#allocation5], 4
      %s35 = int_to_ptr.vmem [resolvable:$true] %s34
      %40 = dma.hbm_to_vmem [thread:$0]  %s1, 256, %s35, [#allocation6], 64, 64, 4
    $region9: #{_lambda_.10} parent=1 // pred_fallthru
      _
    // Predicated region
    $region10: #{_lambda_.10} parent=1 // pred_check
      _
    $region11: #{_lambda_.10} parent=1 // pred_check_branch
      %42 = sbr.rel (0) target = $region13
    $region12: #{_lambda_.10} parent=1 // pred_region
      %s44 = ssub.s32 16, 16
      %45 = vsyncadd [#allocation6], %s44
      %s47 = sshll.u32 [#allocation7], 4
      %s48 = int_to_ptr.vmem [resolvable:$true] %s47
      %50 = dma.hbm_to_vmem [thread:$0]  %s2, 16, %s48, [#allocation6]
    $region13: #{_lambda_.10} parent=1 // pred_fallthru
      _
    // Predicated region
    $region14: #{_lambda_.10} parent=1 // pred_check
      _
    $region15: #{_lambda_.10} parent=1 // pred_check_branch
      %52 = sbr.rel (0) target = $region17
    $region16: #{_lambda_.10} parent=1 // pred_region
      %s54 = ssub.s32 1024, 1024
      %55 = vsyncadd [#allocation9], %s54
      %s56 = sshll.u32 [#allocation8], 4
      %s57 = int_to_ptr.vmem [resolvable:$true] %s56
      %62 = dma.hbm_to_vmem [thread:$0]  %s3, 1024, %s57, [#allocation9], 64, 64, 4
    $region17: #{_lambda_.10} parent=1 // pred_fallthru
      _
    // Predicated region
    $region18: #{_lambda_.10} parent=1 // pred_check
      _
    $region19: #{_lambda_.10} parent=1 // pred_check_branch
      %64 = sbr.rel (0) target = $region21
    $region20: #{_lambda_.10} parent=1 // pred_region
      %s66 = ssub.s32 16, 16
      %67 = vsyncadd [#allocation9], %s66
      %s69 = sshll.u32 [#allocation10], 4
      %s70 = int_to_ptr.vmem [resolvable:$true] %s69
      %72 = dma.hbm_to_vmem [thread:$0]  %s4, 16, %s70, [#allocation9]
    $region21: #{_lambda_.10} parent=1 // pred_fallthru
      _
    // Predicated region
    $region22: #{_lambda_.10} parent=1 // pred_check
      _
    $region23: #{_lambda_.10} parent=1 // pred_check_branch
      %74 = sbr.rel (0) target = $region25
    $region24: #{_lambda_.10} parent=1 // pred_region
      %s76 = ssub.s32 16, 16
      %77 = vsyncadd [#allocation12], %s76
      %s79 = sshll.u32 [#allocation11], 4
      %s80 = int_to_ptr.vmem [resolvable:$true] %s79
      %82 = dma.hbm_to_vmem [thread:$0]  %s5, 16, %s80, [#allocation12]
    $region25: #{_lambda_.10} parent=1 // pred_fallthru
      _
    // Predicated region
    $region26: #{_lambda_.10} parent=1 // pred_check
      _
    $region27: #{_lambda_.10} parent=1 // pred_check_branch
      %84 = sbr.rel (0) target = $region29
    $region28: #{_lambda_.10} parent=1 // pred_region
      %s86 = ssub.s32 16, 16
      %87 = vsyncadd [#allocation12], %s86
      %s89 = sshll.u32 [#allocation13], 4
      %s90 = int_to_ptr.vmem [resolvable:$true] %s89
      %92 = dma.hbm_to_vmem [thread:$0]  %s6, 16, %s90, [#allocation12]
    $region29: #{_lambda_.10} parent=1 // pred_fallthru
      _
    // Predicated region
    $region30: #{_lambda_.10} parent=1 // pred_check
      _
    $region31: #{_lambda_.10} parent=1 // pred_check_branch
      %94 = sbr.rel (0) target = $region33
    $region32: #{_lambda_.10} parent=1 // pred_region
      %95 = dma.done [#allocation3], 128
    $region33: #{_lambda_.10} parent=1 // pred_fallthru
      _
    // Predicated region
    $region34: #{_lambda_.10} parent=1 // pred_check
      _
    $region35: #{_lambda_.10} parent=1 // pred_check_branch
      %97 = sbr.rel (0) target = $region37
    $region36: #{_lambda_.10} parent=1 // pred_region
      %98 = dma.done [#allocation6], 256
    $region37: #{_lambda_.10} parent=1 // pred_fallthru
      _
    // Predicated region
    $region38: #{_lambda_.10} parent=1 // pred_check
      _
    $region39: #{_lambda_.10} parent=1 // pred_check_branch
      %100 = sbr.rel (0) target = $region41
    $region40: #{_lambda_.10} parent=1 // pred_region
      %101 = dma.done [#allocation6], 16
    $region41: #{_lambda_.10} parent=1 // pred_fallthru
      _
    // Predicated region
    $region42: #{_lambda_.10} parent=1 // pred_check
      _
    $region43: #{_lambda_.10} parent=1 // pred_check_branch
      %103 = sbr.rel (0) target = $region45
    $region44: #{_lambda_.10} parent=1 // pred_region
      %104 = dma.done [#allocation9], 1024
    $region45: #{_lambda_.10} parent=1 // pred_fallthru
      _
    // Predicated region
    $region46: #{_lambda_.10} parent=1 // pred_check
      _
    $region47: #{_lambda_.10} parent=1 // pred_check_branch
      %106 = sbr.rel (0) target = $region49
    $region48: #{_lambda_.10} parent=1 // pred_region
      %107 = dma.done [#allocation9], 16
    $region49: #{_lambda_.10} parent=1 // pred_fallthru
      _
    // Predicated region
    $region50: #{_lambda_.10} parent=1 // pred_check
      _
    $region51: #{_lambda_.10} parent=1 // pred_check_branch
      %109 = sbr.rel (0) target = $region53
    $region52: #{_lambda_.10} parent=1 // pred_region
      %110 = dma.done [#allocation12], 16
    $region53: #{_lambda_.10} parent=1 // pred_fallthru
      _
    // Predicated region
    $region54: #{_lambda_.10} parent=1 // pred_check
      _
    $region55: #{_lambda_.10} parent=1 // pred_check_branch
      %112 = sbr.rel (0) target = $region57
    $region56: #{_lambda_.10} parent=1 // pred_region
      %113 = dma.done [#allocation12], 16
    $region57: #{_lambda_.10} parent=1 // pred_fallthru
      _
    %v115 = vld [vmem:[#allocation2] sm:$0xf]
    %v116 = vld [vmem:[#allocation2 + $0x4] sm:$0xf]
    %v117 = vunpack.c.l.bf16 %v115
    %v118 = vunpack.c.l.bf16 %v116
    %v119 = vld [vmem:[#allocation5] sm:$0xf]
    %v120 = vld [vmem:[#allocation5 + $0x4] sm:$0xf]
    %v121 = vld [vmem:[#allocation5 + $0x8] sm:$0xf]
    %v122 = vld [vmem:[#allocation5 + $0xc] sm:$0xf]
    %v123 = vld [vmem:[#allocation7] sm:$0x1]
    %v125 = vlaneseq
    %v126 = vshrl.u32 %v125, 7
    %v127 = vsub.s32 0, %v126
    %v128 = vrot.slane %v123, %v127
    %v132 = vunpack.c.l.b16 %v115
    %v133 = vunpack.c.l.b16 %v116
    %v134 = vpack.c.b16 %v133, %v132
    %v139 = vunpack.c.l.b16 %v119
    %v140 = vunpack.c.l.b16 %v120
    %v141 = vunpack.c.l.b16 %v121
    %v142 = vunpack.c.l.b16 %v122
    %v143 = vpack.c.b16 %v140, %v139
    %v144 = vpack.c.b16 %v142, %v141
    %vm147 = vcmask 261120
    %v149 = vsel %vm147, %v134, 0
    %151 = vmatprep.subr.bf16.mxu0 0
    %152 = vmatpush1.bf16.msra.mxu0 %v143
    %153 = vmatprep.subr.bf16.mxu0 0
    %154 = vmatpush1.bf16.msra.mxu0 %v144
    %155 = vmatprep.subr.bf16.mxu0 0
    %156 = vmatpush1.bf16.msra.mxu0 0
    %157 = vmatprep.subr.bf16.mxu0 0
    %158 = vmatpush1.bf16.msra.mxu0 0
    %159 = vmatprep.subr.bf16.mxu0 0
    %160 = vmatpush1.bf16.msra.mxu0 0
    %161 = vmatprep.subr.bf16.mxu0 0
    %162 = vmatpush1.bf16.msra.mxu0 0
    %163 = vmatprep.subr.bf16.mxu0 0
    %164 = vmatpush1.bf16.msra.mxu0 0
    %165 = vmatprep.subr.bf16.mxu0 0
    %166 = vmatpush1.bf16.msra.mxu0 0
    %167 = vmatprep.subr.bf16.mxu0 0
    %168 = vmatpush1.bf16.msra.mxu0 0
    %169 = vmatprep.subr.bf16.mxu0 0
    %170 = vmatpush1.bf16.msra.mxu0 0
    %171 = vmatprep.subr.bf16.mxu0 0
    %172 = vmatpush1.bf16.msra.mxu0 0
    %173 = vmatprep.subr.bf16.mxu0 0
    %174 = vmatpush1.bf16.msra.mxu0 0
    %175 = vmatprep.subr.bf16.mxu0 0
    %176 = vmatpush1.bf16.msra.mxu0 0
    %177 = vmatprep.subr.bf16.mxu0 0
    %178 = vmatpush1.bf16.msra.mxu0 0
    %179 = vmatprep.subr.bf16.mxu0 0
    %180 = vmatpush1.bf16.msra.mxu0 0
    %181 = vmatprep.subr.bf16.mxu0 0
    %182 = vmatpush1.bf16.msra.mxu0 0
    %183 = vmatprep.mubr.bf16.mxu0 0
    %184 = vmatmul.mubr.bf16.gmra.mrb[0].mxu0 %v149
    %v185 = vpop.f32.mrb[0].mxu0
    %v186 = vadd.f32 %v128, %v185
    %v187 = vpop.f32.mrb[0].mxu0
    %v188 = vpop.f32.mrb[0].mxu0
    %v189 = vadd.f32 %v128, %v188
    %v190 = vpop.f32.mrb[0].mxu0
    %191 = vdwg.mxu0
    %v192 = vmax.f32 %v186, 0.0
    %v193 = vmax.f32 %v189, 0.0
    %v194 = vpack.c.bf16 %v193, %v192
    %v195 = vld [vmem:[#allocation8] sm:$0xf]
    %v196 = vld [vmem:[#allocation8 + $0x4] sm:$0xf]
    %v197 = vld [vmem:[#allocation8 + $0x8] sm:$0xf]
    %v198 = vld [vmem:[#allocation8 + $0xc] sm:$0xf]
    %v199 = vld [vmem:[#allocation8 + $0x10] sm:$0xf]
    %v200 = vld [vmem:[#allocation8 + $0x14] sm:$0xf]
    %v201 = vld [vmem:[#allocation8 + $0x18] sm:$0xf]
    %v202 = vld [vmem:[#allocation8 + $0x1c] sm:$0xf]
    %v203 = vld [vmem:[#allocation8 + $0x20] sm:$0xf]
    %v204 = vld [vmem:[#allocation8 + $0x24] sm:$0xf]
    %v205 = vld [vmem:[#allocation8 + $0x28] sm:$0xf]
    %v206 = vld [vmem:[#allocation8 + $0x2c] sm:$0xf]
    %v207 = vld [vmem:[#allocation8 + $0x30] sm:$0xf]
    %v208 = vld [vmem:[#allocation8 + $0x34] sm:$0xf]
    %v209 = vld [vmem:[#allocation8 + $0x38] sm:$0xf]
    %v210 = vld [vmem:[#allocation8 + $0x3c] sm:$0xf]
    %v211 = vld [vmem:[#allocation10] sm:$0x1]
    %v213 = vlaneseq
    %v214 = vshrl.u32 %v213, 7
    %v215 = vsub.s32 0, %v214
    %v216 = vrot.slane %v211, %v215
    %v234 = vunpack.c.l.b16 %v195
    %v235 = vunpack.c.l.b16 %v196
    %v236 = vunpack.c.l.b16 %v197
    %v237 = vunpack.c.l.b16 %v198
    %v238 = vunpack.c.l.b16 %v199
    %v239 = vunpack.c.l.b16 %v200
    %v240 = vunpack.c.l.b16 %v201
    %v241 = vunpack.c.l.b16 %v202
    %v242 = vunpack.c.l.b16 %v203
    %v243 = vunpack.c.l.b16 %v204
    %v244 = vunpack.c.l.b16 %v205
    %v245 = vunpack.c.l.b16 %v206
    %v246 = vunpack.c.l.b16 %v207
    %v247 = vunpack.c.l.b16 %v208
    %v248 = vunpack.c.l.b16 %v209
    %v249 = vunpack.c.l.b16 %v210
    %v250 = vpack.c.b16 %v235, %v234
    %v251 = vpack.c.b16 %v237, %v236
    %v252 = vpack.c.b16 %v239, %v238
    %v253 = vpack.c.b16 %v241, %v240
    %v254 = vpack.c.b16 %v243, %v242
    %v255 = vpack.c.b16 %v245, %v244
    %v256 = vpack.c.b16 %v247, %v246
    %v257 = vpack.c.b16 %v249, %v248
    %266 = vmatprep.subr.bf16.mxu0 0
    %267 = vmatpush1.bf16.msra.mxu0 %v250
    %268 = vmatprep.subr.bf16.mxu0 0
    %269 = vmatpush1.bf16.msra.mxu0 %v251
    %270 = vmatprep.subr.bf16.mxu0 0
    %271 = vmatpush1.bf16.msra.mxu0 %v252
    %272 = vmatprep.subr.bf16.mxu0 0
    %273 = vmatpush1.bf16.msra.mxu0 %v253
    %274 = vmatprep.subr.bf16.mxu0 0
    %275 = vmatpush1.bf16.msra.mxu0 %v254
    %276 = vmatprep.subr.bf16.mxu0 0
    %277 = vmatpush1.bf16.msra.mxu0 %v255
    %278 = vmatprep.subr.bf16.mxu0 0
    %279 = vmatpush1.bf16.msra.mxu0 %v256
    %280 = vmatprep.subr.bf16.mxu0 0
    %281 = vmatpush1.bf16.msra.mxu0 %v257
    %282 = vmatprep.subr.bf16.mxu0 0
    %283 = vmatpush1.bf16.msra.mxu0 0
    %284 = vmatprep.subr.bf16.mxu0 0
    %285 = vmatpush1.bf16.msra.mxu0 0
    %286 = vmatprep.subr.bf16.mxu0 0
    %287 = vmatpush1.bf16.msra.mxu0 0
    %288 = vmatprep.subr.bf16.mxu0 0
    %289 = vmatpush1.bf16.msra.mxu0 0
    %290 = vmatprep.subr.bf16.mxu0 0
    %291 = vmatpush1.bf16.msra.mxu0 0
    %292 = vmatprep.subr.bf16.mxu0 0
    %293 = vmatpush1.bf16.msra.mxu0 0
    %294 = vmatprep.subr.bf16.mxu0 0
    %295 = vmatpush1.bf16.msra.mxu0 0
    %296 = vmatprep.subr.bf16.mxu0 0
    %297 = vmatpush1.bf16.msra.mxu0 0
    %298 = vmatprep.mubr.bf16.mxu0 0
    %299 = vmatmul.mubr.bf16.gmra.mrb[0].mxu0 %v194
    %v300 = vpop.f32.mrb[0].mxu0
    %v301 = vadd.f32 %v216, %v300
    %v302 = vpop.f32.mrb[0].mxu0
    %v303 = vpop.f32.mrb[0].mxu0
    %v304 = vadd.f32 %v216, %v303
    %v305 = vpop.f32.mrb[0].mxu0
    %306 = vdwg.mxu0
    %v307 = vadd.f32 %v301, %v117
    %v308 = vadd.f32 %v304, %v118
    %v309 = vsel %vm147, %v307, 0.0
    %310 = vadd.xlane.f32.xlu0 %v309
    %v311 = vpop.xlane.xlu0 %310
    %v312 = vsel %vm147, %v308, 0.0
    %313 = vadd.xlane.f32.xlu0 %v312
    %v314 = vpop.xlane.xlu0 %313
    %v315 = vrcp.pop 32.0
    %v316 = vmul.f32 %v311, %v315
    %v317 = vmul.f32 %v314, %v315
    %v318 = vsub.f32 %v307, %v316
    %v319 = vsub.f32 %v308, %v317
    %v320 = vmul.f32 %v318, %v318
    %v321 = vmul.f32 %v319, %v319
    %v322 = vsel %vm147, %v320, 0.0
    %323 = vadd.xlane.f32.xlu0 %v322
    %v324 = vpop.xlane.xlu0 %323
    %v325 = vsel %vm147, %v321, 0.0
    %326 = vadd.xlane.f32.xlu0 %v325
    %v327 = vpop.xlane.xlu0 %326
    %v328 = vmul.f32 %v324, %v315
    %v329 = vmul.f32 %v327, %v315
    %v330 = vadd.f32 %v328, 1e-05
    %v331 = vadd.f32 %v329, 1e-05
    %v332 = vrsqrt.pop %v330
    %v333 = vrsqrt.pop %v331
    %v334 = vmul.f32 %v318, %v332
    %v335 = vmul.f32 %v319, %v333
    %v336 = vld [vmem:[#allocation11] sm:$0x1]
    %v338 = vlaneseq
    %v339 = vshrl.u32 %v338, 7
    %v340 = vsub.s32 0, %v339
    %v341 = vrot.slane %v336, %v340
    %v343 = vmul.f32 %v334, %v341
    %v344 = vmul.f32 %v335, %v341
    %v345 = vld [vmem:[#allocation13] sm:$0x1]
    %v347 = vlaneseq
    %v348 = vshrl.u32 %v347, 7
    %v349 = vsub.s32 0, %v348
    %v350 = vrot.slane %v345, %v349
    %v352 = vadd.f32 %v343, %v350
    %v353 = vadd.f32 %v344, %v350
    %v354 = vpack.c.bf16 %v353, %v352
    %v356 = vunpack.c.l.b16 %v354
    %v357 = vunpack.c.h.b16 %v354
    %v358 = vpack.c.b16 %v356, %v356
    %v359 = vpack.c.b16 %v357, %v357
    %vm362 = vcmask 257024
    %363 = vst.msk [vmem:[#allocation14] sm:$0xf] %vm362, %v358
    %364 = vst.msk [vmem:[#allocation14 + $0x4] sm:$0xf] %vm362, %v359
    // Predicated region
    $region58: #{_lambda_.10} parent=1 // pred_check
      _
    $region59: #{_lambda_.10} parent=1 // pred_check_branch
      %366 = sbr.rel (0) target = $region61
    $region60: #{_lambda_.10} parent=1 // pred_region
      %s368 = ssub.s32 128, 128
      %369 = vsyncadd [#allocation4], %s368
      %s370 = sshll.u32 [#allocation14], 4
      %s371 = int_to_ptr.vmem [resolvable:$true] %s370
      %376 = dma.vmem_to_hbm [thread:$0]  %s371, 128, %s7, [#allocation4], 64, 64, 4
    $region61: #{_lambda_.10} parent=1 // pred_fallthru
      _
    // Predicated region
    $region62: #{_lambda_.10} parent=1 // pred_check
      _
    $region63: #{_lambda_.10} parent=1 // pred_check_branch
      %378 = sbr.rel (0) target = $region65
    $region64: #{_lambda_.10} parent=1 // pred_region
      %379 = dma.done [#allocation4], 128
    $region65: #{_lambda_.10} parent=1 // pred_fallthru
      _
    %380 = vsyncpa [#allocation3], 1
    %381 = vsyncpa [#allocation6], 1
    %382 = vsyncpa [#allocation9], 1
    %383 = vsyncpa [#allocation12], 1
    %384 = vsyncpa [#allocation4], 1

// kernel: _lambda_.11
$region0: #{_lambda_.11}
  #allocation0 [shape = 'u32[]', space=smem, size = 0x4, offset = 0x4, fixed_abs, tag = 'smem constant byte address 0x4 - core index']
  #allocation1 [shape = 'u32[144,128]{1,0:T(1,128)}', space=vmem, size = 0x12000, scoped, tag = 'internal scratch']
  #allocation2 [shape = 'bf16[8,32]{1,0:T(8,128)(2,1)}', space=vmem, size = 0x800, scoped, tag = 'scratch operand']
  #allocation3 [shape = 'bf16[8,32]{1,0:T(8,128)(2,1)}', space=vmem, size = 0x800, scoped, tag = 'scratch operand']
  %s0 = inlined_call_operand.hbm [shape: bf16[2,8,32], index: 0, kind: input, shape index: {}, may-alias: {0,1}]
  %s1 = inlined_call_operand.hbm [shape: bf16[2,8,32], index: 1, kind: input, shape index: {}, may-alias: {0,1}]
  %s2 = inlined_call_operand.hbm [shape: bf16[32,96], index: 2, kind: input, shape index: {}]
  %s3 = inlined_call_operand.hbm [shape: bf16[32,32], index: 3, kind: input, shape index: {}]
  %s4 = inlined_call_operand.hbm [shape: f32[1,32], index: 4, kind: input, shape index: {}]
  %s5 = inlined_call_operand.hbm [shape: f32[1,32], index: 5, kind: input, shape index: {}]
  %s6 = inlined_call_operand.hbm [shape: f32[1,32], index: 6, kind: input, shape index: {}]
  %s7 = inlined_call_operand.hbm [shape: bf16[2,8,32], index: 7, kind: output, shape index: {}]
  %s8 = sld [smem:[#allocation0]]
  $region93: #{_lambda_.11} parent=0
    _
  %s10 = ssub.s32 1, %s8
  %s11 = scalar_select 0, %s10, %s8
  $region1: #{_lambda_.11} parent=0
    #allocation4 [shape = 'u8[4096]{0}', space=vmem, size = 0x1000, scoped, tag = 'input window, operand 0']
    #allocation5 [shape = 's32[2]{0}', space=sflag, size = 0x8, scoped, tag = 'scoped memory for _lambda_.11']
    #allocation6 [shape = 's32[2]{0}', space=sflag, size = 0x8, scoped, tag = 'scoped memory for _lambda_.11']
    #allocation7 [shape = 'u8[4096]{0}', space=vmem, size = 0x1000, scoped, tag = 'input window, operand 1']
    #allocation8 [shape = 's32[2]{0}', space=sflag, size = 0x8, scoped, tag = 'scoped memory for _lambda_.11']
    #allocation9 [shape = 'u8[8192]{0}', space=vmem, size = 0x2000, scoped, tag = 'input window, operand 2, single buffered']
    #allocation10 [shape = 'u8[8192]{0}', space=vmem, size = 0x2000, scoped, tag = 'input window, operand 3, single buffered']
    #allocation11 [shape = 's32[1]{0}', space=sflag, size = 0x4, scoped, tag = 'scoped memory for _lambda_.11']
    #allocation12 [shape = 'u8[512]{0}', space=vmem, size = 0x400, scoped, tag = 'input window, operand 4, single buffered']
    #allocation13 [shape = 'u8[512]{0}', space=vmem, size = 0x400, scoped, tag = 'input window, operand 5, single buffered']
    #allocation14 [shape = 's32[1]{0}', space=sflag, size = 0x4, scoped, tag = 'scoped memory for _lambda_.11']
    #allocation15 [shape = 'u8[512]{0}', space=vmem, size = 0x400, scoped, tag = 'input window, operand 6, single buffered']
    #allocation16 [shape = 'u8[4096]{0}', space=vmem, size = 0x1000, scoped, tag = 'output window, operand 0']
    %12 = vsyncpa [#allocation5], 0
    %s13 = scalar_lea.sflag [#allocation5], 1
    %14 = vsyncpa %s13, 0
    %15 = vsyncpa [#allocation8], 0
    %s16 = scalar_lea.sflag [#allocation8], 1
    %17 = vsyncpa %s16, 0
    %18 = vsyncpa [#allocation11], 0
    %19 = vsyncpa [#allocation14], 0
    %20 = vsyncpa [#allocation6], 0
    %s21 = scalar_lea.sflag [#allocation6], 1
    %22 = vsyncpa %s21, 0
    loop: start=0, step=1, limit=4
    $region2: #{_lambda_.11} parent=1 // loop_pre_header
      _
    $region3: #{_lambda_.11} parent=1 // loop_header
      %s24 = sphi 0, %s28
      %p25 = scmp.ge.s32.totalorder %s24, 4
      %s31 = sphi 0, %s43
      %s32 = sphi 0, %s39
      %s33 = sphi 0, %s31
      %s34 = sphi 0, %s32
      %s35 = sphi 0, %s33
      %s36 = sphi 0, %s34
      %s48 = sphi 0, %s50
      %s51 = sphi 0, %s48
      %s52 = sphi 0, %s51
      %s68 = sphi 0, %s52
      %s74 = sphi 0, %s76
      %s77 = sphi 0, %s74
      %s78 = sphi 0, %s77
      %s94 = sphi 0, %s78
      %s98 = sphi 0, %s98
      %s100 = sphi 0, %s98
      %s101 = sphi 0, %s100
      %s115 = sphi 0, %s101
      %s119 = sphi 0, %s119
      %s121 = sphi 0, %s119
      %s122 = sphi 0, %s121
      %s136 = sphi 0, %s122
      %s140 = sphi 0, %s140
      %s142 = sphi 0, %s140
      %s143 = sphi 0, %s142
      %s157 = sphi 0, %s143
      %s161 = sphi 0, %s161
      %s163 = sphi 0, %s161
      %s164 = sphi 0, %s163
      %s178 = sphi 0, %s164
      %s182 = sphi 0, %s182
      %s184 = sphi 0, %s182
      %s185 = sphi 0, %s184
      %s199 = sphi 0, %s185
      %s207 = sphi 0, %s209
      %s210 = sphi 0, %s207
      %s211 = sphi 0, %s210
      %s227 = sphi 0, %s211
    $region4: #{_lambda_.11} parent=1 // loop_header_branch
      %27 = sbr.rel (%p25) target = $region8
    $region5: #{_lambda_.11} parent=1 // loop_body
      %s29 = ssub.s32 %s24, 1
      %s30 = ssub.s32 %s24, 2
      %s37 = sadd.s32 1, %s32
      %p38 = scmp.ge.s32.totalorder %s37, 1
      %s39 = scalar_select %p38, 0, %s37
      %s40 = sadd.s32 1, %s31
      %s41 = scalar_select %p38, %s40, %s31
      %p42 = scmp.ge.s32.totalorder %s41, 2
      %s43 = scalar_select %p42, 0, %s41
      %s44 = ssub.s32 %s31, %s43
      %s45 = ssub.s32 %s32, %s39
      %s46 = sor.u32 %s44, %s45
      %p47 = scmp.eq.s32.totalorder %s46, 0
      %s49 = sadd.s32 %s48, 1
      %s50 = scalar_select %p47, %s48, %s49
      %p53 = pneg %p47
      %p54 = scmp.eq.s32.totalorder %s24, 1
      %p55 = por %p53, %p54
      %p56 = scmp.ne.s32.totalorder %s48, %s51
      %p57 = scmp.eq.s32.totalorder %s24, 0
      %p58 = por %p56, %p57
      %p59 = scmp.ne.s32.totalorder %s48, %s51
      %p60 = scmp.eq.s32.totalorder %s29, 1
      %p61 = por %p59, %p60
      %p62 = scmp.ne.s32.totalorder %s51, %s52
      %p63 = scmp.eq.s32.totalorder %s29, 0
      %p64 = por %p62, %p63
      %p65 = scmp.ne.s32.totalorder %s51, %s52
      %p66 = scmp.eq.s32.totalorder %s30, 1
      %p67 = por %p65, %p66
      %p69 = scmp.ne.s32.totalorder %s52, %s68
      %p70 = scmp.eq.s32.totalorder %s30, 0
      %p71 = por %p69, %p70
      %s72 = ssub.s32 %s31, %s43
      %p73 = scmp.eq.s32.totalorder %s72, 0
      %s75 = sadd.s32 %s74, 1
      %s76 = scalar_select %p73, %s74, %s75
      %p79 = pneg %p73
      %p80 = scmp.eq.s32.totalorder %s24, 1
      %p81 = por %p79, %p80
      %p82 = scmp.ne.s32.totalorder %s74, %s77
      %p83 = scmp.eq.s32.totalorder %s24, 0
      %p84 = por %p82, %p83
      %p85 = scmp.ne.s32.totalorder %s74, %s77
      %p86 = scmp.eq.s32.totalorder %s29, 1
      %p87 = por %p85, %p86
      %p88 = scmp.ne.s32.totalorder %s77, %s78
      %p89 = scmp.eq.s32.totalorder %s29, 0
      %p90 = por %p88, %p89
      %p91 = scmp.ne.s32.totalorder %s77, %s78
      %p92 = scmp.eq.s32.totalorder %s30, 1
      %p93 = por %p91, %p92
      %p95 = scmp.ne.s32.totalorder %s78, %s94
      %p96 = scmp.eq.s32.totalorder %s30, 0
      %p97 = por %p95, %p96
      %s99 = sadd.s32 %s98, 1
      %p102 = scmp.eq.s32.totalorder %s24, 1
      %p103 = scmp.ne.s32.totalorder %s98, %s100
      %p104 = scmp.eq.s32.totalorder %s24, 0
      %p105 = por %p103, %p104
      %p106 = scmp.ne.s32.totalorder %s98, %s100
      %p107 = scmp.eq.s32.totalorder %s29, 1
      %p108 = por %p106, %p107
      %p109 = scmp.ne.s32.totalorder %s100, %s101
      %p110 = scmp.eq.s32.totalorder %s29, 0
      %p111 = por %p109, %p110
      %p112 = scmp.ne.s32.totalorder %s100, %s101
      %p113 = scmp.eq.s32.totalorder %s30, 1
      %p114 = por %p112, %p113
      %p116 = scmp.ne.s32.totalorder %s101, %s115
      %p117 = scmp.eq.s32.totalorder %s30, 0
      %p118 = por %p116, %p117
      %s120 = sadd.s32 %s119, 1
      %p123 = scmp.eq.s32.totalorder %s24, 1
      %p124 = scmp.ne.s32.totalorder %s119, %s121
      %p125 = scmp.eq.s32.totalorder %s24, 0
      %p126 = por %p124, %p125
      %p127 = scmp.ne.s32.totalorder %s119, %s121
      %p128 = scmp.eq.s32.totalorder %s29, 1
      %p129 = por %p127, %p128
      %p130 = scmp.ne.s32.totalorder %s121, %s122
      %p131 = scmp.eq.s32.totalorder %s29, 0
      %p132 = por %p130, %p131
      %p133 = scmp.ne.s32.totalorder %s121, %s122
      %p134 = scmp.eq.s32.totalorder %s30, 1
      %p135 = por %p133, %p134
      %p137 = scmp.ne.s32.totalorder %s122, %s136
      %p138 = scmp.eq.s32.totalorder %s30, 0
      %p139 = por %p137, %p138
      %s141 = sadd.s32 %s140, 1
      %p144 = scmp.eq.s32.totalorder %s24, 1
      %p145 = scmp.ne.s32.totalorder %s140, %s142
      %p146 = scmp.eq.s32.totalorder %s24, 0
      %p147 = por %p145, %p146
      %p148 = scmp.ne.s32.totalorder %s140, %s142
      %p149 = scmp.eq.s32.totalorder %s29, 1
      %p150 = por %p148, %p149
      %p151 = scmp.ne.s32.totalorder %s142, %s143
      %p152 = scmp.eq.s32.totalorder %s29, 0
      %p153 = por %p151, %p152
      %p154 = scmp.ne.s32.totalorder %s142, %s143
      %p155 = scmp.eq.s32.totalorder %s30, 1
      %p156 = por %p154, %p155
      %p158 = scmp.ne.s32.totalorder %s143, %s157
      %p159 = scmp.eq.s32.totalorder %s30, 0
      %p160 = por %p158, %p159
      %s162 = sadd.s32 %s161, 1
      %p165 = scmp.eq.s32.totalorder %s24, 1
      %p166 = scmp.ne.s32.totalorder %s161, %s163
      %p167 = scmp.eq.s32.totalorder %s24, 0
      %p168 = por %p166, %p167
      %p169 = scmp.ne.s32.totalorder %s161, %s163
      %p170 = scmp.eq.s32.totalorder %s29, 1
      %p171 = por %p169, %p170
      %p172 = scmp.ne.s32.totalorder %s163, %s164
      %p173 = scmp.eq.s32.totalorder %s29, 0
      %p174 = por %p172, %p173
      %p175 = scmp.ne.s32.totalorder %s163, %s164
      %p176 = scmp.eq.s32.totalorder %s30, 1
      %p177 = por %p175, %p176
      %p179 = scmp.ne.s32.totalorder %s164, %s178
      %p180 = scmp.eq.s32.totalorder %s30, 0
      %p181 = por %p179, %p180
      %s183 = sadd.s32 %s182, 1
      %p186 = scmp.eq.s32.totalorder %s24, 1
      %p187 = scmp.ne.s32.totalorder %s182, %s184
      %p188 = scmp.eq.s32.totalorder %s24, 0
      %p189 = por %p187, %p188
      %p190 = scmp.ne.s32.totalorder %s182, %s184
      %p191 = scmp.eq.s32.totalorder %s29, 1
      %p192 = por %p190, %p191
      %p193 = scmp.ne.s32.totalorder %s184, %s185
      %p194 = scmp.eq.s32.totalorder %s29, 0
      %p195 = por %p193, %p194
      %p196 = scmp.ne.s32.totalorder %s184, %s185
      %p197 = scmp.eq.s32.totalorder %s30, 1
      %p198 = por %p196, %p197
      %p200 = scmp.ne.s32.totalorder %s185, %s199
      %p201 = scmp.eq.s32.totalorder %s30, 0
      %p202 = por %p200, %p201
      %s203 = ssub.s32 %s31, %s43
      %s204 = ssub.s32 %s32, %s39
      %s205 = sor.u32 %s203, %s204
      %p206 = scmp.eq.s32.totalorder %s205, 0
      %s208 = sadd.s32 %s207, 1
      %s209 = scalar_select %p206, %s207, %s208
      %p212 = pneg %p206
      %p213 = scmp.eq.s32.totalorder %s24, 1
      %p214 = por %p212, %p213
      %p215 = scmp.ne.s32.totalorder %s207, %s210
      %p216 = scmp.eq.s32.totalorder %s24, 0
      %p217 = por %p215, %p216
      %p218 = scmp.ne.s32.totalorder %s207, %s210
      %p219 = scmp.eq.s32.totalorder %s29, 1
      %p220 = por %p218, %p219
      %p221 = scmp.ne.s32.totalorder %s210, %s211
      %p222 = scmp.eq.s32.totalorder %s29, 0
      %p223 = por %p221, %p222
      %p224 = scmp.ne.s32.totalorder %s210, %s211
      %p225 = scmp.eq.s32.totalorder %s30, 1
      %p226 = por %p224, %p225
      %p228 = scmp.ne.s32.totalorder %s211, %s227
      %p229 = scmp.eq.s32.totalorder %s30, 0
      %p230 = por %p228, %p229
      %p231 = scmp.le.s32.totalorder 1, %s24
      %p232 = scmp.lt.s32.totalorder %s24, 3
      %p233 = pnand %p231, %p232
      %p234 = pneg %p233
      // Predicated region
      $region9: #{_lambda_.11} parent=5 // pred_check
        _
      $region10: #{_lambda_.11} parent=5 // pred_check_branch
        %236 = sbr.rel (%p233) target = $region12
      $region11: #{_lambda_.11} parent=5 // pred_region
        %s237 = ssub.s32 %s24, 1
        // Predicated region
        $region13: #{_lambda_.11} parent=11 // pred_check
          %p238 = pneg %p111
        $region14: #{_lambda_.11} parent=11 // pred_check_branch
          %240 = sbr.rel (%p238) target = $region16
        $region15: #{_lambda_.11} parent=11 // pred_region
          %s242 = ssub.s32 256, 256
          %243 = vsyncadd [#allocation8], %s242
          %s244 = sshll.u32 [#allocation9], 4
          %s245 = int_to_ptr.vmem [resolvable:$true] %s244
          %250 = dma.hbm_to_vmem [thread:$0]  %s2, 256, %s245, [#allocation8], 64, 64, 4
        $region16: #{_lambda_.11} parent=11 // pred_fallthru
          _
        // Predicated region
        $region17: #{_lambda_.11} parent=11 // pred_check
          %p251 = pneg %p132
        $region18: #{_lambda_.11} parent=11 // pred_check_branch
          %253 = sbr.rel (%p251) target = $region20
        $region19: #{_lambda_.11} parent=11 // pred_region
          %s255 = ssub.s32 256, 256
          %256 = vsyncadd [#allocation11], %s255
          %s257 = sshll.u32 [#allocation10], 4
          %s258 = int_to_ptr.vmem [resolvable:$true] %s257
          %263 = dma.hbm_to_vmem [thread:$0]  %s3, 256, %s258, [#allocation11], 64, 64, 4
        $region20: #{_lambda_.11} parent=11 // pred_fallthru
          _
        // Predicated region
        $region21: #{_lambda_.11} parent=11 // pred_check
          %p264 = pneg %p153
        $region22: #{_lambda_.11} parent=11 // pred_check_branch
          %266 = sbr.rel (%p264) target = $region24
        $region23: #{_lambda_.11} parent=11 // pred_region
          %s268 = ssub.s32 16, 16
          %269 = vsyncadd [#allocation11], %s268
          %s271 = sshll.u32 [#allocation12], 4
          %s272 = int_to_ptr.vmem [resolvable:$true] %s271
          %274 = dma.hbm_to_vmem [thread:$0]  %s4, 16, %s272, [#allocation11]
        $region24: #{_lambda_.11} parent=11 // pred_fallthru
          _
        // Predicated region
        $region25: #{_lambda_.11} parent=11 // pred_check
          %p275 = pneg %p174
        $region26: #{_lambda_.11} parent=11 // pred_check_branch
          %277 = sbr.rel (%p275) target = $region28
        $region27: #{_lambda_.11} parent=11 // pred_region
          %s279 = ssub.s32 16, 16
          %280 = vsyncadd [#allocation14], %s279
          %s282 = sshll.u32 [#allocation13], 4
          %s283 = int_to_ptr.vmem [resolvable:$true] %s282
          %285 = dma.hbm_to_vmem [thread:$0]  %s5, 16, %s283, [#allocation14]
        $region28: #{_lambda_.11} parent=11 // pred_fallthru
          _
        // Predicated region
        $region29: #{_lambda_.11} parent=11 // pred_check
          %p286 = pneg %p195
        $region30: #{_lambda_.11} parent=11 // pred_check_branch
          %288 = sbr.rel (%p286) target = $region32
        $region31: #{_lambda_.11} parent=11 // pred_region
          %s290 = ssub.s32 16, 16
          %291 = vsyncadd [#allocation14], %s290
          %s293 = sshll.u32 [#allocation15], 4
          %s294 = int_to_ptr.vmem [resolvable:$true] %s293
          %296 = dma.hbm_to_vmem [thread:$0]  %s6, 16, %s294, [#allocation14]
        $region32: #{_lambda_.11} parent=11 // pred_fallthru
          _
      $region12: #{_lambda_.11} parent=5 // pred_fallthru
        _
      %p297 = scmp.lt.s32.totalorder %s24, 2
      // Predicated region
      $region33: #{_lambda_.11} parent=5 // pred_check
        %p298 = pneg %p297
      $region34: #{_lambda_.11} parent=5 // pred_check_branch
        %300 = sbr.rel (%p298) target = $region36
      $region35: #{_lambda_.11} parent=5 // pred_region
        // Predicated region
        $region37: #{_lambda_.11} parent=35 // pred_check
          %p301 = pneg %p58
        $region38: #{_lambda_.11} parent=35 // pred_check_branch
          %303 = sbr.rel (%p301) target = $region40
        $region39: #{_lambda_.11} parent=35 // pred_region
          %s304 = sand.u32 %s48, 1
          %s305 = scalar_lea.sflag [#allocation5], %s304
          %s306 = sand.u32 %s48, 1
          %s307 = smul.addr %s306, 4
          %s308 = scalar_lea.vmem [#allocation4], %s307
          %s310 = ssub.s32 64, 64
          %311 = vsyncadd %s305, %s310
          %s312 = sadd.s32 %s32, %s31
          %s313 = smul.addr %s312, 64
          %s314 = scalar_lea.hbm %s0, %s313
          %s316 = sshll.u32 %s308, 4
          %s317 = int_to_ptr.vmem [resolvable:$true] %s316
          %319 = dma.hbm_to_vmem [thread:$0]  %s314, 64, %s317, %s305
        $region40: #{_lambda_.11} parent=35 // pred_fallthru
          _
        // Predicated region
        $region41: #{_lambda_.11} parent=35 // pred_check
          %p320 = pneg %p84
        $region42: #{_lambda_.11} parent=35 // pred_check_branch
          %322 = sbr.rel (%p320) target = $region44
        $region43: #{_lambda_.11} parent=35 // pred_region
          %s323 = sand.u32 %s24, 1
          %s324 = scalar_lea.sflag [#allocation8], %s323
          %s325 = sand.u32 %s74, 1
          %s326 = smul.addr %s325, 4
          %s327 = scalar_lea.vmem [#allocation7], %s326
          %s329 = ssub.s32 64, 64
          %330 = vsyncadd %s324, %s329
          %s331 = smul.addr %s31, 64
          %s332 = scalar_lea.hbm %s1, %s331
          %s334 = sshll.u32 %s327, 4
          %s335 = int_to_ptr.vmem [resolvable:$true] %s334
          %337 = dma.hbm_to_vmem [thread:$0]  %s332, 64, %s335, %s324
        $region44: #{_lambda_.11} parent=35 // pred_fallthru
          _
      $region36: #{_lambda_.11} parent=5 // pred_fallthru
        _
      %p338 = scmp.le.s32.totalorder 1, %s24
      %p339 = scmp.lt.s32.totalorder %s24, 3
      %p340 = pnand %p338, %p339
      %p341 = pneg %p340
      // Predicated region
      $region45: #{_lambda_.11} parent=5 // pred_check
        _
      $region46: #{_lambda_.11} parent=5 // pred_check_branch
        %343 = sbr.rel (%p340) target = $region48
      $region47: #{_lambda_.11} parent=5 // pred_region
        %s344 = ssub.s32 %s24, 1
        %s345 = sand.u32 %s51, 1
        %s346 = scalar_lea.sflag [#allocation5], %s345
        %s347 = sand.u32 %s51, 1
        %s348 = smul.addr %s347, 4
        %s349 = scalar_lea.vmem [#allocation4], %s348
        // Predicated region
        $region49: #{_lambda_.11} parent=47 // pred_check
          %p350 = pneg %p64
        $region50: #{_lambda_.11} parent=47 // pred_check_branch
          %352 = sbr.rel (%p350) target = $region52
        $region51: #{_lambda_.11} parent=47 // pred_region
          %353 = dma.done %s346, 64
        $region52: #{_lambda_.11} parent=47 // pred_fallthru
          _
        %s354 = sand.u32 %s29, 1
        %s355 = scalar_lea.sflag [#allocation8], %s354
        %s356 = sand.u32 %s77, 1
        %s357 = smul.addr %s356, 4
        %s358 = scalar_lea.vmem [#allocation7], %s357
        // Predicated region
        $region53: #{_lambda_.11} parent=47 // pred_check
          %p359 = pneg %p90
        $region54: #{_lambda_.11} parent=47 // pred_check_branch
          %361 = sbr.rel (%p359) target = $region56
        $region55: #{_lambda_.11} parent=47 // pred_region
          %362 = dma.done %s355, 64
        $region56: #{_lambda_.11} parent=47 // pred_fallthru
          _
        // Predicated region
        $region57: #{_lambda_.11} parent=47 // pred_check
          %p363 = pneg %p111
        $region58: #{_lambda_.11} parent=47 // pred_check_branch
          %365 = sbr.rel (%p363) target = $region60
        $region59: #{_lambda_.11} parent=47 // pred_region
          %366 = dma.done [#allocation8], 256
        $region60: #{_lambda_.11} parent=47 // pred_fallthru
          _
        // Predicated region
        $region61: #{_lambda_.11} parent=47 // pred_check
          %p367 = pneg %p132
        $region62: #{_lambda_.11} parent=47 // pred_check_branch
          %369 = sbr.rel (%p367) target = $region64
        $region63: #{_lambda_.11} parent=47 // pred_region
          %370 = dma.done [#allocation11], 256
        $region64: #{_lambda_.11} parent=47 // pred_fallthru
          _
        // Predicated region
        $region65: #{_lambda_.11} parent=47 // pred_check
          %p371 = pneg %p153
        $region66: #{_lambda_.11} parent=47 // pred_check_branch
          %373 = sbr.rel (%p371) target = $region68
        $region67: #{_lambda_.11} parent=47 // pred_region
          %374 = dma.done [#allocation11], 16
        $region68: #{_lambda_.11} parent=47 // pred_fallthru
          _
        // Predicated region
        $region69: #{_lambda_.11} parent=47 // pred_check
          %p375 = pneg %p174
        $region70: #{_lambda_.11} parent=47 // pred_check_branch
          %377 = sbr.rel (%p375) target = $region72
        $region71: #{_lambda_.11} parent=47 // pred_region
          %378 = dma.done [#allocation14], 16
        $region72: #{_lambda_.11} parent=47 // pred_fallthru
          _
        // Predicated region
        $region73: #{_lambda_.11} parent=47 // pred_check
          %p379 = pneg %p195
        $region74: #{_lambda_.11} parent=47 // pred_check_branch
          %381 = sbr.rel (%p379) target = $region76
        $region75: #{_lambda_.11} parent=47 // pred_region
          %382 = dma.done [#allocation14], 16
        $region76: #{_lambda_.11} parent=47 // pred_fallthru
          _
        %s383 = sand.u32 %s51, 1
        %s384 = scalar_lea.sflag [#allocation5], %s383
        %s385 = sand.u32 %s51, 1
        %s386 = smul.addr %s385, 4
        %s387 = scalar_lea.vmem [#allocation4], %s386
        %p388 = pneg %p64
        %p389 = pneg %p61
        %s390 = sand.u32 %s29, 1
        %s391 = scalar_lea.sflag [#allocation8], %s390
        %s392 = sand.u32 %s77, 1
        %s393 = smul.addr %s392, 4
        %s394 = scalar_lea.vmem [#allocation7], %s393
        %p395 = pneg %p90
        %p396 = pneg %p87
        %p397 = pneg %p111
        %p398 = pneg %p108
        %p399 = pneg %p132
        %p400 = pneg %p129
        %p401 = pneg %p153
        %p402 = pneg %p150
        %p403 = pneg %p174
        %p404 = pneg %p171
        %p405 = pneg %p195
        %p406 = pneg %p192
        %p407 = pneg %p223
        %p408 = pneg %p220
        %s409 = sand.u32 %s210, 1
        %s410 = scalar_lea.sflag [#allocation6], %s409
        %s411 = sand.u32 %s210, 1
        %s412 = smul.addr %s411, 4
        %s413 = scalar_lea.vmem [#allocation16], %s412
        %p415 = scmp.eq.s32.totalorder %s34, 0
        // Predicated region
        $region77: #{_lambda_.11} parent=47 // pred_check
          %p416 = pneg %p415
        $region78: #{_lambda_.11} parent=47 // pred_check_branch
          %418 = sbr.rel (%p416) target = $region80
        $region79: #{_lambda_.11} parent=47 // pred_region
          %v419 = vld [vmem:[%s358] sm:$0xf]
          %v420 = vld [vmem:[#allocation9] sm:$0xf]
          %v421 = vld [vmem:[#allocation9 + $0x4] sm:$0xf]
          %v422 = vld [vmem:[#allocation9 + $0x8] sm:$0xf]
          %v423 = vld [vmem:[#allocation9 + $0xc] sm:$0xf]
          %v428 = vunpack.c.l.b16 %v420
          %v429 = vunpack.c.l.b16 %v421
          %v430 = vunpack.c.l.b16 %v422
          %v431 = vunpack.c.l.b16 %v423
          %v432 = vpack.c.b16 %v429, %v428
          %v433 = vpack.c.b16 %v431, %v430
          %434 = vrot.lane.b32.xlu0 %v432, 96
          %v435 = vpop.permute.xlu0 %434
          %436 = vrot.lane.b32.xlu0 %v433, 96
          %v437 = vpop.permute.xlu0 %436
          %vm440 = vcmask 261120
          %v442 = vsel %vm440, %v419, 0
          %444 = vmatprep.subr.bf16.mxu0 0
          %445 = vmatpush1.bf16.msra.mxu0 %v435
          %446 = vmatprep.subr.bf16.mxu0 0
          %447 = vmatpush1.bf16.msra.mxu0 %v437
          %448 = vmatprep.subr.bf16.mxu0 0
          %449 = vmatpush1.bf16.msra.mxu0 0
          %450 = vmatprep.subr.bf16.mxu0 0
          %451 = vmatpush1.bf16.msra.mxu0 0
          %452 = vmatprep.subr.bf16.mxu0 0
          %453 = vmatpush1.bf16.msra.mxu0 0
          %454 = vmatprep.subr.bf16.mxu0 0
          %455 = vmatpush1.bf16.msra.mxu0 0
          %456 = vmatprep.subr.bf16.mxu0 0
          %457 = vmatpush1.bf16.msra.mxu0 0
          %458 = vmatprep.subr.bf16.mxu0 0
          %459 = vmatpush1.bf16.msra.mxu0 0
          %460 = vmatprep.subr.bf16.mxu0 0
          %461 = vmatpush1.bf16.msra.mxu0 0
          %462 = vmatprep.subr.bf16.mxu0 0
          %463 = vmatpush1.bf16.msra.mxu0 0
          %464 = vmatprep.subr.bf16.mxu0 0
          %465 = vmatpush1.bf16.msra.mxu0 0
          %466 = vmatprep.subr.bf16.mxu0 0
          %467 = vmatpush1.bf16.msra.mxu0 0
          %468 = vmatprep.subr.bf16.mxu0 0
          %469 = vmatpush1.bf16.msra.mxu0 0
          %470 = vmatprep.subr.bf16.mxu0 0
          %471 = vmatpush1.bf16.msra.mxu0 0
          %472 = vmatprep.subr.bf16.mxu0 0
          %473 = vmatpush1.bf16.msra.mxu0 0
          %474 = vmatprep.subr.bf16.mxu0 0
          %475 = vmatpush1.bf16.msra.mxu0 0
          %476 = vmatprep.mubr.bf16.mxu0 0
          %477 = vmatmul.mubr.bf16.gmra.mrb[0].mxu0 %v442
          %v478 = vpop.f32.mrb[0].mxu0
          %v479 = vadd.f32 0.0, %v478
          %v480 = vpop.f32.mrb[0].mxu0
          %v481 = vpop.f32.mrb[0].mxu0
          %v482 = vpop.f32.mrb[0].mxu0
          %483 = vdwg.mxu0
          %v484 = vpack.c.bf16 %v479, %v479
          %vm485 = vcmask 257024
          %486 = vst.msk [vmem:[#allocation2] sm:$0xf] %vm485, %v484
          %v487 = vld [vmem:[#allocation9] sm:$0xf]
          %v488 = vld [vmem:[#allocation9 + $0x4] sm:$0xf]
          %v489 = vld [vmem:[#allocation9 + $0x8] sm:$0xf]
          %v490 = vld [vmem:[#allocation9 + $0xc] sm:$0xf]
          %v495 = vunpack.c.l.b16 %v487
          %v496 = vunpack.c.l.b16 %v488
          %v497 = vunpack.c.l.b16 %v489
          %v498 = vunpack.c.l.b16 %v490
          %v499 = vpack.c.b16 %v496, %v495
          %v500 = vpack.c.b16 %v498, %v497
          %501 = vrot.lane.b32.xlu0 %v499, 64
          %v502 = vpop.permute.xlu0 %501
          %503 = vrot.lane.b32.xlu0 %v500, 64
          %v504 = vpop.permute.xlu0 %503
          %507 = vmatprep.subr.bf16.mxu0 0
          %508 = vmatpush1.bf16.msra.mxu0 %v502
          %509 = vmatprep.subr.bf16.mxu0 0
          %510 = vmatpush1.bf16.msra.mxu0 %v504
          %511 = vmatprep.subr.bf16.mxu0 0
          %512 = vmatpush1.bf16.msra.mxu0 0
          %513 = vmatprep.subr.bf16.mxu0 0
          %514 = vmatpush1.bf16.msra.mxu0 0
          %515 = vmatprep.subr.bf16.mxu0 0
          %516 = vmatpush1.bf16.msra.mxu0 0
          %517 = vmatprep.subr.bf16.mxu0 0
          %518 = vmatpush1.bf16.msra.mxu0 0
          %519 = vmatprep.subr.bf16.mxu0 0
          %520 = vmatpush1.bf16.msra.mxu0 0
          %521 = vmatprep.subr.bf16.mxu0 0
          %522 = vmatpush1.bf16.msra.mxu0 0
          %523 = vmatprep.subr.bf16.mxu0 0
          %524 = vmatpush1.bf16.msra.mxu0 0
          %525 = vmatprep.subr.bf16.mxu0 0
          %526 = vmatpush1.bf16.msra.mxu0 0
          %527 = vmatprep.subr.bf16.mxu0 0
          %528 = vmatpush1.bf16.msra.mxu0 0
          %529 = vmatprep.subr.bf16.mxu0 0
          %530 = vmatpush1.bf16.msra.mxu0 0
          %531 = vmatprep.subr.bf16.mxu0 0
          %532 = vmatpush1.bf16.msra.mxu0 0
          %533 = vmatprep.subr.bf16.mxu0 0
          %534 = vmatpush1.bf16.msra.mxu0 0
          %535 = vmatprep.subr.bf16.mxu0 0
          %536 = vmatpush1.bf16.msra.mxu0 0
          %537 = vmatprep.subr.bf16.mxu0 0
          %538 = vmatpush1.bf16.msra.mxu0 0
          %539 = vmatprep.mubr.bf16.mxu0 0
          %540 = vmatmul.mubr.bf16.gmra.mrb[0].mxu0 %v442
          %v541 = vpop.f32.mrb[0].mxu0
          %v542 = vadd.f32 0.0, %v541
          %v543 = vpop.f32.mrb[0].mxu0
          %v544 = vpop.f32.mrb[0].mxu0
          %v545 = vpop.f32.mrb[0].mxu0
          %546 = vdwg.mxu0
          %v547 = vpack.c.bf16 %v542, %v542
          %548 = vst.msk [vmem:[#allocation3] sm:$0xf] %vm485, %v547
        $region80: #{_lambda_.11} parent=47 // pred_fallthru
          _
        %v549 = vld [vmem:[%s349] sm:$0xf]
        %v550 = vunpack.c.l.bf16 %v549
        %v551 = vld [vmem:[#allocation9] sm:$0xf]
        %v552 = vld [vmem:[#allocation9 + $0x4] sm:$0xf]
        %v553 = vld [vmem:[#allocation9 + $0x8] sm:$0xf]
        %v554 = vld [vmem:[#allocation9 + $0xc] sm:$0xf]
        %v559 = vunpack.c.l.b16 %v551
        %v560 = vunpack.c.l.b16 %v552
        %v561 = vunpack.c.l.b16 %v553
        %v562 = vunpack.c.l.b16 %v554
        %v563 = vpack.c.b16 %v560, %v559
        %v564 = vpack.c.b16 %v562, %v561
        %vm567 = vcmask 261120
        %v569 = vsel %vm567, %v549, 0
        %571 = vmatprep.subr.bf16.mxu0 0
        %572 = vmatpush1.bf16.msra.mxu0 %v563
        %573 = vmatprep.subr.bf16.mxu0 0
        %574 = vmatpush1.bf16.msra.mxu0 %v564
        %575 = vmatprep.subr.bf16.mxu0 0
        %576 = vmatpush1.bf16.msra.mxu0 0
        %577 = vmatprep.subr.bf16.mxu0 0
        %578 = vmatpush1.bf16.msra.mxu0 0
        %579 = vmatprep.subr.bf16.mxu0 0
        %580 = vmatpush1.bf16.msra.mxu0 0
        %581 = vmatprep.subr.bf16.mxu0 0
        %582 = vmatpush1.bf16.msra.mxu0 0
        %583 = vmatprep.subr.bf16.mxu0 0
        %584 = vmatpush1.bf16.msra.mxu0 0
        %585 = vmatprep.subr.bf16.mxu0 0
        %586 = vmatpush1.bf16.msra.mxu0 0
        %587 = vmatprep.subr.bf16.mxu0 0
        %588 = vmatpush1.bf16.msra.mxu0 0
        %589 = vmatprep.subr.bf16.mxu0 0
        %590 = vmatpush1.bf16.msra.mxu0 0
        %591 = vmatprep.subr.bf16.mxu0 0
        %592 = vmatpush1.bf16.msra.mxu0 0
        %593 = vmatprep.subr.bf16.mxu0 0
        %594 = vmatpush1.bf16.msra.mxu0 0
        %595 = vmatprep.subr.bf16.mxu0 0
        %596 = vmatpush1.bf16.msra.mxu0 0
        %597 = vmatprep.subr.bf16.mxu0 0
        %598 = vmatpush1.bf16.msra.mxu0 0
        %599 = vmatprep.subr.bf16.mxu0 0
        %600 = vmatpush1.bf16.msra.mxu0 0
        %601 = vmatprep.subr.bf16.mxu0 0
        %602 = vmatpush1.bf16.msra.mxu0 0
        %603 = vmatprep.mubr.bf16.mxu0 0
        %604 = vmatmul.mubr.bf16.gmra.mrb[0].mxu0 %v569
        %v605 = vpop.f32.mrb[0].mxu0
        %v606 = vadd.f32 0.0, %v605
        %v607 = vpop.f32.mrb[0].mxu0
        %v608 = vpop.f32.mrb[0].mxu0
        %v609 = vpop.f32.mrb[0].mxu0
        %610 = vdwg.mxu0
        %v611 = vld [vmem:[#allocation2] sm:$0xf]
        %v612 = vld [vmem:[#allocation3] sm:$0xf]
        %s613 = smul.u32 %s34, 8
        %v614 = vlaneseq
        %v615 = vshrl.u32 %v614, 7
        %v616 = vstv %s613
        %v617 = vadd.s32 %v616, %v615
        %v618 = vlaneseq
        %v619 = vand.u32 %v618, 127
        %vm620 = vcmp.gt.s32.totalorder %v619, %v617
        %v621 = vpack.c.bf16 %v606, %v606
        %vm622 = vcmask 64512
        %v624 = vsel %vm622, %v621, 0
        %v627 = vsel %vm622, %v611, 0
        %629 = vmatprep.subr.bf16.mxu0 0
        %630 = vmatpush1.bf16.xpose.msra.mxu0 %v627
        %631 = vmatprep.subr.bf16.mxu0 0
        %632 = vmatpush1.bf16.xpose.msra.mxu0 0
        %633 = vmatprep.subr.bf16.mxu0 0
        %634 = vmatpush1.bf16.xpose.msra.mxu0 0
        %635 = vmatprep.subr.bf16.mxu0 0
        %636 = vmatpush1.bf16.xpose.msra.mxu0 0
        %637 = vmatprep.subr.bf16.mxu0 0
        %638 = vmatpush1.bf16.xpose.msra.mxu0 0
        %639 = vmatprep.subr.bf16.mxu0 0
        %640 = vmatpush1.bf16.xpose.msra.mxu0 0
        %641 = vmatprep.subr.bf16.mxu0 0
        %642 = vmatpush1.bf16.xpose.msra.mxu0 0
        %643 = vmatprep.subr.bf16.mxu0 0
        %644 = vmatpush1.bf16.xpose.msra.mxu0 0
        %645 = vmatprep.subr.bf16.mxu0 0
        %646 = vmatpush1.bf16.xpose.msra.mxu0 0
        %647 = vmatprep.subr.bf16.mxu0 0
        %648 = vmatpush1.bf16.xpose.msra.mxu0 0
        %649 = vmatprep.subr.bf16.mxu0 0
        %650 = vmatpush1.bf16.xpose.msra.mxu0 0
        %651 = vmatprep.subr.bf16.mxu0 0
        %652 = vmatpush1.bf16.xpose.msra.mxu0 0
        %653 = vmatprep.subr.bf16.mxu0 0
        %654 = vmatpush1.bf16.xpose.msra.mxu0 0
        %655 = vmatprep.subr.bf16.mxu0 0
        %656 = vmatpush1.bf16.xpose.msra.mxu0 0
        %657 = vmatprep.subr.bf16.mxu0 0
        %658 = vmatpush1.bf16.xpose.msra.mxu0 0
        %659 = vmatprep.subr.bf16.mxu0 0
        %660 = vmatpush1.bf16.xpose.msra.mxu0 0
        %661 = vmatprep.mubr.bf16.mxu0 0
        %662 = vmatmul.mubr.bf16.gmra.mrb[0].mxu0 %v624
        %v663 = vpop.f32.mrb[0].mxu0
        %v664 = vadd.f32 0.0, %v663
        %v665 = vpop.f32.mrb[0].mxu0
        %v666 = vpop.f32.mrb[0].mxu0
        %v667 = vpop.f32.mrb[0].mxu0
        %668 = vdwg.mxu0
        %v669 = vsel %vm620, -1e+20, %v664
        %v670 = vsel %vm622, %v669, -inf
        %671 = vmax.xlane.f32.xlu0 %v670
        %v672 = vpop.xlane.xlu0 %671
        %v673 = vsub.f32 %v669, %v672
        %v674 = vmul.f32 %v673, 1.442695
        %v675 = vpow.pop %v674
        %v676 = vsel %vm622, %v675, 0.0
        %677 = vadd.xlane.f32.xlu0 %v676
        %v678 = vpop.xlane.xlu0 %677
        %v679 = vrcp.pop %v678
        %v680 = vmul.f32 %v675, %v679
        %v681 = vpack.c.bf16 %v680, %v680
        %v683 = vsel %vm622, %v681, 0
        %vm685 = vcmask 1043456
        %v687 = vsel %vm685, %v612, 0
        %689 = vmatprep.subr.bf16.mxu0 0
        %690 = vmatpush1.bf16.msra.mxu0 %v687
        %691 = vmatprep.subr.bf16.mxu0 0
        %692 = vmatpush1.bf16.msra.mxu0 0
        %693 = vmatprep.subr.bf16.mxu0 0
        %694 = vmatpush1.bf16.msra.mxu0 0
        %695 = vmatprep.subr.bf16.mxu0 0
        %696 = vmatpush1.bf16.msra.mxu0 0
        %697 = vmatprep.subr.bf16.mxu0 0
        %698 = vmatpush1.bf16.msra.mxu0 0
        %699 = vmatprep.subr.bf16.mxu0 0
        %700 = vmatpush1.bf16.msra.mxu0 0
        %701 = vmatprep.subr.bf16.mxu0 0
        %702 = vmatpush1.bf16.msra.mxu0 0
        %703 = vmatprep.subr.bf16.mxu0 0
        %704 = vmatpush1.bf16.msra.mxu0 0
        %705 = vmatprep.subr.bf16.mxu0 0
        %706 = vmatpush1.bf16.msra.mxu0 0
        %707 = vmatprep.subr.bf16.mxu0 0
        %708 = vmatpush1.bf16.msra.mxu0 0
        %709 = vmatprep.subr.bf16.mxu0 0
        %710 = vmatpush1.bf16.msra.mxu0 0
        %711 = vmatprep.subr.bf16.mxu0 0
        %712 = vmatpush1.bf16.msra.mxu0 0
        %713 = vmatprep.subr.bf16.mxu0 0
        %714 = vmatpush1.bf16.msra.mxu0 0
        %715 = vmatprep.subr.bf16.mxu0 0
        %716 = vmatpush1.bf16.msra.mxu0 0
        %717 = vmatprep.subr.bf16.mxu0 0
        %718 = vmatpush1.bf16.msra.mxu0 0
        %719 = vmatprep.subr.bf16.mxu0 0
        %720 = vmatpush1.bf16.msra.mxu0 0
        %721 = vmatprep.mubr.bf16.mxu0 0
        %722 = vmatmul.mubr.bf16.gmra.mrb[0].mxu0 %v683
        %v723 = vpop.f32.mrb[0].mxu0
        %v724 = vadd.f32 0.0, %v723
        %v725 = vpop.f32.mrb[0].mxu0
        %v726 = vpop.f32.mrb[0].mxu0
        %v727 = vpop.f32.mrb[0].mxu0
        %728 = vdwg.mxu0
        %730 = vrot.lane.b32.xlu0 %v621, 120
        %v731 = vpop.permute.xlu0 %730
        %v733 = vunpack.c.l.b16 %v611
        %v734 = vpack.c.b16 %v733, %v733
        %735 = vrot.lane.b32.xlu0 %v734, 120
        %v736 = vpop.permute.xlu0 %735
        %v738 = vsel %vm622, %v731, 0
        %v741 = vsel %vm622, %v736, 0
        %743 = vmatprep.subr.bf16.mxu0 0
        %744 = vmatpush1.bf16.xpose.msra.mxu0 %v741
        %745 = vmatprep.subr.bf16.mxu0 0
        %746 = vmatpush1.bf16.xpose.msra.mxu0 0
        %747 = vmatprep.subr.bf16.mxu0 0
        %748 = vmatpush1.bf16.xpose.msra.mxu0 0
        %749 = vmatprep.subr.bf16.mxu0 0
        %750 = vmatpush1.bf16.xpose.msra.mxu0 0
        %751 = vmatprep.subr.bf16.mxu0 0
        %752 = vmatpush1.bf16.xpose.msra.mxu0 0
        %753 = vmatprep.subr.bf16.mxu0 0
        %754 = vmatpush1.bf16.xpose.msra.mxu0 0
        %755 = vmatprep.subr.bf16.mxu0 0
        %756 = vmatpush1.bf16.xpose.msra.mxu0 0
        %757 = vmatprep.subr.bf16.mxu0 0
        %758 = vmatpush1.bf16.xpose.msra.mxu0 0
        %759 = vmatprep.subr.bf16.mxu0 0
        %760 = vmatpush1.bf16.xpose.msra.mxu0 0
        %761 = vmatprep.subr.bf16.mxu0 0
        %762 = vmatpush1.bf16.xpose.msra.mxu0 0
        %763 = vmatprep.subr.bf16.mxu0 0
        %764 = vmatpush1.bf16.xpose.msra.mxu0 0
        %765 = vmatprep.subr.bf16.mxu0 0
        %766 = vmatpush1.bf16.xpose.msra.mxu0 0
        %767 = vmatprep.subr.bf16.mxu0 0
        %768 = vmatpush1.bf16.xpose.msra.mxu0 0
        %769 = vmatprep.subr.bf16.mxu0 0
        %770 = vmatpush1.bf16.xpose.msra.mxu0 0
        %771 = vmatprep.subr.bf16.mxu0 0
        %772 = vmatpush1.bf16.xpose.msra.mxu0 0
        %773 = vmatprep.subr.bf16.mxu0 0
        %774 = vmatpush1.bf16.xpose.msra.mxu0 0
        %775 = vmatprep.mubr.bf16.mxu0 0
        %776 = vmatmul.mubr.bf16.gmra.mrb[0].mxu0 %v738
        %v777 = vpop.f32.mrb[0].mxu0
        %v778 = vadd.f32 0.0, %v777
        %v779 = vpop.f32.mrb[0].mxu0
        %v780 = vpop.f32.mrb[0].mxu0
        %v781 = vpop.f32.mrb[0].mxu0
        %782 = vdwg.mxu0
        %v783 = vsel %vm620, -1e+20, %v778
        %v784 = vsel %vm622, %v783, -inf
        %785 = vmax.xlane.f32.xlu0 %v784
        %v786 = vpop.xlane.xlu0 %785
        %v787 = vsub.f32 %v783, %v786
        %v788 = vmul.f32 %v787, 1.442695
        %v789 = vpow.pop %v788
        %v790 = vsel %vm622, %v789, 0.0
        %791 = vadd.xlane.f32.xlu0 %v790
        %v792 = vpop.xlane.xlu0 %791
        %v793 = vrcp.pop %v792
        %v794 = vmul.f32 %v789, %v793
        %v795 = vpack.c.bf16 %v794, %v794
        %v797 = vunpack.c.l.b16 %v612
        %v798 = vpack.c.b16 %v797, %v797
        %799 = vrot.lane.b32.xlu0 %v798, 120
        %v800 = vpop.permute.xlu0 %799
        %v802 = vsel %vm622, %v795, 0
        %v805 = vsel %vm685, %v800, 0
        %807 = vmatprep.subr.bf16.mxu0 0
        %808 = vmatpush1.bf16.msra.mxu0 %v805
        %809 = vmatprep.subr.bf16.mxu0 0
        %810 = vmatpush1.bf16.msra.mxu0 0
        %811 = vmatprep.subr.bf16.mxu0 0
        %812 = vmatpush1.bf16.msra.mxu0 0
        %813 = vmatprep.subr.bf16.mxu0 0
        %814 = vmatpush1.bf16.msra.mxu0 0
        %815 = vmatprep.subr.bf16.mxu0 0
        %816 = vmatpush1.bf16.msra.mxu0 0
        %817 = vmatprep.subr.bf16.mxu0 0
        %818 = vmatpush1.bf16.msra.mxu0 0
        %819 = vmatprep.subr.bf16.mxu0 0
        %820 = vmatpush1.bf16.msra.mxu0 0
        %821 = vmatprep.subr.bf16.mxu0 0
        %822 = vmatpush1.bf16.msra.mxu0 0
        %823 = vmatprep.subr.bf16.mxu0 0
        %824 = vmatpush1.bf16.msra.mxu0 0
        %825 = vmatprep.subr.bf16.mxu0 0
        %826 = vmatpush1.bf16.msra.mxu0 0
        %827 = vmatprep.subr.bf16.mxu0 0
        %828 = vmatpush1.bf16.msra.mxu0 0
        %829 = vmatprep.subr.bf16.mxu0 0
        %830 = vmatpush1.bf16.msra.mxu0 0
        %831 = vmatprep.subr.bf16.mxu0 0
        %832 = vmatpush1.bf16.msra.mxu0 0
        %833 = vmatprep.subr.bf16.mxu0 0
        %834 = vmatpush1.bf16.msra.mxu0 0
        %835 = vmatprep.subr.bf16.mxu0 0
        %836 = vmatpush1.bf16.msra.mxu0 0
        %837 = vmatprep.subr.bf16.mxu0 0
        %838 = vmatpush1.bf16.msra.mxu0 0
        %839 = vmatprep.mubr.bf16.mxu0 0
        %840 = vmatmul.mubr.bf16.gmra.mrb[0].mxu0 %v802
        %v841 = vpop.f32.mrb[0].mxu0
        %v842 = vadd.f32 0.0, %v841
        %v843 = vpop.f32.mrb[0].mxu0
        %v844 = vpop.f32.mrb[0].mxu0
        %v845 = vpop.f32.mrb[0].mxu0
        %846 = vdwg.mxu0
        %847 = vrot.lane.b32.xlu0 %v621, 112
        %v848 = vpop.permute.xlu0 %847
        %849 = vrot.lane.b32.xlu0 %v734, 112
        %v850 = vpop.permute.xlu0 %849
        %v852 = vsel %vm622, %v848, 0
        %v855 = vsel %vm622, %v850, 0
        %857 = vmatprep.subr.bf16.mxu0 0
        %858 = vmatpush1.bf16.xpose.msra.mxu0 %v855
        %859 = vmatprep.subr.bf16.mxu0 0
        %860 = vmatpush1.bf16.xpose.msra.mxu0 0
        %861 = vmatprep.subr.bf16.mxu0 0
        %862 = vmatpush1.bf16.xpose.msra.mxu0 0
        %863 = vmatprep.subr.bf16.mxu0 0
        %864 = vmatpush1.bf16.xpose.msra.mxu0 0
        %865 = vmatprep.subr.bf16.mxu0 0
        %866 = vmatpush1.bf16.xpose.msra.mxu0 0
        %867 = vmatprep.subr.bf16.mxu0 0
        %868 = vmatpush1.bf16.xpose.msra.mxu0 0
        %869 = vmatprep.subr.bf16.mxu0 0
        %870 = vmatpush1.bf16.xpose.msra.mxu0 0
        %871 = vmatprep.subr.bf16.mxu0 0
        %872 = vmatpush1.bf16.xpose.msra.mxu0 0
        %873 = vmatprep.subr.bf16.mxu0 0
        %874 = vmatpush1.bf16.xpose.msra.mxu0 0
        %875 = vmatprep.subr.bf16.mxu0 0
        %876 = vmatpush1.bf16.xpose.msra.mxu0 0
        %877 = vmatprep.subr.bf16.mxu0 0
        %878 = vmatpush1.bf16.xpose.msra.mxu0 0
        %879 = vmatprep.subr.bf16.mxu0 0
        %880 = vmatpush1.bf16.xpose.msra.mxu0 0
        %881 = vmatprep.subr.bf16.mxu0 0
        %882 = vmatpush1.bf16.xpose.msra.mxu0 0
        %883 = vmatprep.subr.bf16.mxu0 0
        %884 = vmatpush1.bf16.xpose.msra.mxu0 0
        %885 = vmatprep.subr.bf16.mxu0 0
        %886 = vmatpush1.bf16.xpose.msra.mxu0 0
        %887 = vmatprep.subr.bf16.mxu0 0
        %888 = vmatpush1.bf16.xpose.msra.mxu0 0
        %889 = vmatprep.mubr.bf16.mxu0 0
        %890 = vmatmul.mubr.bf16.gmra.mrb[0].mxu0 %v852
        %v891 = vpop.f32.mrb[0].mxu0
        %v892 = vadd.f32 0.0, %v891
        %v893 = vpop.f32.mrb[0].mxu0
        %v894 = vpop.f32.mrb[0].mxu0
        %v895 = vpop.f32.mrb[0].mxu0
        %896 = vdwg.mxu0
        %v897 = vsel %vm620, -1e+20, %v892
        %v898 = vsel %vm622, %v897, -inf
        %899 = vmax.xlane.f32.xlu0 %v898
        %v900 = vpop.xlane.xlu0 %899
        %v901 = vsub.f32 %v897, %v900
        %v902 = vmul.f32 %v901, 1.442695
        %v903 = vpow.pop %v902
        %v904 = vsel %vm622, %v903, 0.0
        %905 = vadd.xlane.f32.xlu0 %v904
        %v906 = vpop.xlane.xlu0 %905
        %v907 = vrcp.pop %v906
        %v908 = vmul.f32 %v903, %v907
        %v909 = vpack.c.bf16 %v908, %v908
        %910 = vrot.lane.b32.xlu0 %v798, 112
        %v911 = vpop.permute.xlu0 %910
        %v913 = vsel %vm622, %v909, 0
        %v916 = vsel %vm685, %v911, 0
        %918 = vmatprep.subr.bf16.mxu0 0
        %919 = vmatpush1.bf16.msra.mxu0 %v916
        %920 = vmatprep.subr.bf16.mxu0 0
        %921 = vmatpush1.bf16.msra.mxu0 0
        %922 = vmatprep.subr.bf16.mxu0 0
        %923 = vmatpush1.bf16.msra.mxu0 0
        %924 = vmatprep.subr.bf16.mxu0 0
        %925 = vmatpush1.bf16.msra.mxu0 0
        %926 = vmatprep.subr.bf16.mxu0 0
        %927 = vmatpush1.bf16.msra.mxu0 0
        %928 = vmatprep.subr.bf16.mxu0 0
        %929 = vmatpush1.bf16.msra.mxu0 0
        %930 = vmatprep.subr.bf16.mxu0 0
        %931 = vmatpush1.bf16.msra.mxu0 0
        %932 = vmatprep.subr.bf16.mxu0 0
        %933 = vmatpush1.bf16.msra.mxu0 0
        %934 = vmatprep.subr.bf16.mxu0 0
        %935 = vmatpush1.bf16.msra.mxu0 0
        %936 = vmatprep.subr.bf16.mxu0 0
        %937 = vmatpush1.bf16.msra.mxu0 0
        %938 = vmatprep.subr.bf16.mxu0 0
        %939 = vmatpush1.bf16.msra.mxu0 0
        %940 = vmatprep.subr.bf16.mxu0 0
        %941 = vmatpush1.bf16.msra.mxu0 0
        %942 = vmatprep.subr.bf16.mxu0 0
        %943 = vmatpush1.bf16.msra.mxu0 0
        %944 = vmatprep.subr.bf16.mxu0 0
        %945 = vmatpush1.bf16.msra.mxu0 0
        %946 = vmatprep.subr.bf16.mxu0 0
        %947 = vmatpush1.bf16.msra.mxu0 0
        %948 = vmatprep.subr.bf16.mxu0 0
        %949 = vmatpush1.bf16.msra.mxu0 0
        %950 = vmatprep.mubr.bf16.mxu0 0
        %951 = vmatmul.mubr.bf16.gmra.mrb[0].mxu0 %v913
        %v952 = vpop.f32.mrb[0].mxu0
        %v953 = vadd.f32 0.0, %v952
        %v954 = vpop.f32.mrb[0].mxu0
        %v955 = vpop.f32.mrb[0].mxu0
        %v956 = vpop.f32.mrb[0].mxu0
        %957 = vdwg.mxu0
        %958 = vrot.lane.b32.xlu0 %v621, 104
        %v959 = vpop.permute.xlu0 %958
        %960 = vrot.lane.b32.xlu0 %v734, 104
        %v961 = vpop.permute.xlu0 %960
        %v963 = vsel %vm622, %v959, 0
        %v966 = vsel %vm622, %v961, 0
        %968 = vmatprep.subr.bf16.mxu0 0
        %969 = vmatpush1.bf16.xpose.msra.mxu0 %v966
        %970 = vmatprep.subr.bf16.mxu0 0
        %971 = vmatpush1.bf16.xpose.msra.mxu0 0
        %972 = vmatprep.subr.bf16.mxu0 0
        %973 = vmatpush1.bf16.xpose.msra.mxu0 0
        %974 = vmatprep.subr.bf16.mxu0 0
        %975 = vmatpush1.bf16.xpose.msra.mxu0 0
        %976 = vmatprep.subr.bf16.mxu0 0
        %977 = vmatpush1.bf16.xpose.msra.mxu0 0
        %978 = vmatprep.subr.bf16.mxu0 0
        %979 = vmatpush1.bf16.xpose.msra.mxu0 0
        %980 = vmatprep.subr.bf16.mxu0 0
        %981 = vmatpush1.bf16.xpose.msra.mxu0 0
        %982 = vmatprep.subr.bf16.mxu0 0
        %983 = vmatpush1.bf16.xpose.msra.mxu0 0
        %984 = vmatprep.subr.bf16.mxu0 0
        %985 = vmatpush1.bf16.xpose.msra.mxu0 0
        %986 = vmatprep.subr.bf16.mxu0 0
        %987 = vmatpush1.bf16.xpose.msra.mxu0 0
        %988 = vmatprep.subr.bf16.mxu0 0
        %989 = vmatpush1.bf16.xpose.msra.mxu0 0
        %990 = vmatprep.subr.bf16.mxu0 0
        %991 = vmatpush1.bf16.xpose.msra.mxu0 0
        %992 = vmatprep.subr.bf16.mxu0 0
        %993 = vmatpush1.bf16.xpose.msra.mxu0 0
        %994 = vmatprep.subr.bf16.mxu0 0
        %995 = vmatpush1.bf16.xpose.msra.mxu0 0
        %996 = vmatprep.subr.bf16.mxu0 0
        %997 = vmatpush1.bf16.xpose.msra.mxu0 0
        %998 = vmatprep.subr.bf16.mxu0 0
        %999 = vmatpush1.bf16.xpose.msra.mxu0 0
        %1000 = vmatprep.mubr.bf16.mxu0 0
        %1001 = vmatmul.mubr.bf16.gmra.mrb[0].mxu0 %v963
        %v1002 = vpop.f32.mrb[0].mxu0
        %v1003 = vadd.f32 0.0, %v1002
        %v1004 = vpop.f32.mrb[0].mxu0
        %v1005 = vpop.f32.mrb[0].mxu0
        %v1006 = vpop.f32.mrb[0].mxu0
        %1007 = vdwg.mxu0
        %v1008 = vsel %vm620, -1e+20, %v1003
        %v1009 = vsel %vm622, %v1008, -inf
        %1010 = vmax.xlane.f32.xlu0 %v1009
        %v1011 = vpop.xlane.xlu0 %1010
        %v1012 = vsub.f32 %v1008, %v1011
        %v1013 = vmul.f32 %v1012, 1.442695
        %v1014 = vpow.pop %v1013
        %v1015 = vsel %vm622, %v1014, 0.0
        %1016 = vadd.xlane.f32.xlu0 %v1015
        %v1017 = vpop.xlane.xlu0 %1016
        %v1018 = vrcp.pop %v1017
        %v1019 = vmul.f32 %v1014, %v1018
        %v1020 = vpack.c.bf16 %v1019, %v1019
        %1021 = vrot.lane.b32.xlu0 %v798, 104
        %v1022 = vpop.permute.xlu0 %1021
        %v1024 = vsel %vm622, %v1020, 0
        %v1027 = vsel %vm685, %v1022, 0
        %1029 = vmatprep.subr.bf16.mxu0 0
        %1030 = vmatpush1.bf16.msra.mxu0 %v1027
        %1031 = vmatprep.subr.bf16.mxu0 0
        %1032 = vmatpush1.bf16.msra.mxu0 0
        %1033 = vmatprep.subr.bf16.mxu0 0
        %1034 = vmatpush1.bf16.msra.mxu0 0
        %1035 = vmatprep.subr.bf16.mxu0 0
        %1036 = vmatpush1.bf16.msra.mxu0 0
        %1037 = vmatprep.subr.bf16.mxu0 0
        %1038 = vmatpush1.bf16.msra.mxu0 0
        %1039 = vmatprep.subr.bf16.mxu0 0
        %1040 = vmatpush1.bf16.msra.mxu0 0
        %1041 = vmatprep.subr.bf16.mxu0 0
        %1042 = vmatpush1.bf16.msra.mxu0 0
        %1043 = vmatprep.subr.bf16.mxu0 0
        %1044 = vmatpush1.bf16.msra.mxu0 0
        %1045 = vmatprep.subr.bf16.mxu0 0
        %1046 = vmatpush1.bf16.msra.mxu0 0
        %1047 = vmatprep.subr.bf16.mxu0 0
        %1048 = vmatpush1.bf16.msra.mxu0 0
        %1049 = vmatprep.subr.bf16.mxu0 0
        %1050 = vmatpush1.bf16.msra.mxu0 0
        %1051 = vmatprep.subr.bf16.mxu0 0
        %1052 = vmatpush1.bf16.msra.mxu0 0
        %1053 = vmatprep.subr.bf16.mxu0 0
        %1054 = vmatpush1.bf16.msra.mxu0 0
        %1055 = vmatprep.subr.bf16.mxu0 0
        %1056 = vmatpush1.bf16.msra.mxu0 0
        %1057 = vmatprep.subr.bf16.mxu0 0
        %1058 = vmatpush1.bf16.msra.mxu0 0
        %1059 = vmatprep.subr.bf16.mxu0 0
        %1060 = vmatpush1.bf16.msra.mxu0 0
        %1061 = vmatprep.mubr.bf16.mxu0 0
        %1062 = vmatmul.mubr.bf16.gmra.mrb[0].mxu0 %v1024
        %v1063 = vpop.f32.mrb[0].mxu0
        %v1064 = vadd.f32 0.0, %v1063
        %v1065 = vpop.f32.mrb[0].mxu0
        %v1066 = vpop.f32.mrb[0].mxu0
        %v1067 = vpop.f32.mrb[0].mxu0
        %1068 = vdwg.mxu0
        %1070 = vrot.lane.b32.xlu0 %v842, 8
        %v1071 = vpop.permute.xlu0 %1070
        %1074 = vrot.lane.b32.xlu0 %v953, 16
        %v1075 = vpop.permute.xlu0 %1074
        %1078 = vrot.lane.b32.xlu0 %v1064, 24
        %v1079 = vpop.permute.xlu0 %1078
        %v1081 = vsel %vm622, %v724, %v1071
        %vm1082 = vcmask 130048
        %v1083 = vsel %vm1082, %v1081, %v1075
        %vm1084 = vcmask 195584
        %v1085 = vsel %vm1084, %v1083, %v1079
        %v1086 = vpack.c.bf16 %v1085, %v1085
        %v1087 = vld [vmem:[#allocation10] sm:$0xf]
        %v1088 = vld [vmem:[#allocation10 + $0x4] sm:$0xf]
        %v1089 = vld [vmem:[#allocation10 + $0x8] sm:$0xf]
        %v1090 = vld [vmem:[#allocation10 + $0xc] sm:$0xf]
        %v1091 = vld [vmem:[#allocation12] sm:$0x1]
        %v1093 = vlaneseq
        %v1094 = vshrl.u32 %v1093, 7
        %v1095 = vsub.s32 0, %v1094
        %v1096 = vrot.slane %v1091, %v1095
        %v1102 = vunpack.c.l.b16 %v1087
        %v1103 = vunpack.c.l.b16 %v1088
        %v1104 = vunpack.c.l.b16 %v1089
        %v1105 = vunpack.c.l.b16 %v1090
        %v1106 = vpack.c.b16 %v1103, %v1102
        %v1107 = vpack.c.b16 %v1105, %v1104
        %v1111 = vsel %vm567, %v1086, 0
        %1113 = vmatprep.subr.bf16.mxu0 0
        %1114 = vmatpush1.bf16.msra.mxu0 %v1106
        %1115 = vmatprep.subr.bf16.mxu0 0
        %1116 = vmatpush1.bf16.msra.mxu0 %v1107
        %1117 = vmatprep.subr.bf16.mxu0 0
        %1118 = vmatpush1.bf16.msra.mxu0 0
        %1119 = vmatprep.subr.bf16.mxu0 0
        %1120 = vmatpush1.bf16.msra.mxu0 0
        %1121 = vmatprep.subr.bf16.mxu0 0
        %1122 = vmatpush1.bf16.msra.mxu0 0
        %1123 = vmatprep.subr.bf16.mxu0 0
        %1124 = vmatpush1.bf16.msra.mxu0 0
        %1125 = vmatprep.subr.bf16.mxu0 0
        %1126 = vmatpush1.bf16.msra.mxu0 0
        %1127 = vmatprep.subr.bf16.mxu0 0
        %1128 = vmatpush1.bf16.msra.mxu0 0
        %1129 = vmatprep.subr.bf16.mxu0 0
        %1130 = vmatpush1.bf16.msra.mxu0 0
        %1131 = vmatprep.subr.bf16.mxu0 0
        %1132 = vmatpush1.bf16.msra.mxu0 0
        %1133 = vmatprep.subr.bf16.mxu0 0
        %1134 = vmatpush1.bf16.msra.mxu0 0
        %1135 = vmatprep.subr.bf16.mxu0 0
        %1136 = vmatpush1.bf16.msra.mxu0 0
        %1137 = vmatprep.subr.bf16.mxu0 0
        %1138 = vmatpush1.bf16.msra.mxu0 0
        %1139 = vmatprep.subr.bf16.mxu0 0
        %1140 = vmatpush1.bf16.msra.mxu0 0
        %1141 = vmatprep.subr.bf16.mxu0 0
        %1142 = vmatpush1.bf16.msra.mxu0 0
        %1143 = vmatprep.subr.bf16.mxu0 0
        %1144 = vmatpush1.bf16.msra.mxu0 0
        %1145 = vmatprep.mubr.bf16.mxu0 0
        %1146 = vmatmul.mubr.bf16.gmra.mrb[0].mxu0 %v1111
        %v1147 = vpop.f32.mrb[0].mxu0
        %v1148 = vadd.f32 %v1096, %v1147
        %v1149 = vpop.f32.mrb[0].mxu0
        %v1150 = vpop.f32.mrb[0].mxu0
        %v1151 = vpop.f32.mrb[0].mxu0
        %1152 = vdwg.mxu0
        %v1153 = vadd.f32 %v1148, %v550
        %v1154 = vsel %vm567, %v1153, 0.0
        %1155 = vadd.xlane.f32.xlu0 %v1154
        %v1156 = vpop.xlane.xlu0 %1155
        %v1157 = vrcp.pop 32.0
        %v1158 = vmul.f32 %v1156, %v1157
        %v1159 = vsub.f32 %v1153, %v1158
        %v1160 = vmul.f32 %v1159, %v1159
        %v1161 = vsel %vm567, %v1160, 0.0
        %1162 = vadd.xlane.f32.xlu0 %v1161
        %v1163 = vpop.xlane.xlu0 %1162
        %v1164 = vmul.f32 %v1163, %v1157
        %v1165 = vadd.f32 %v1164, 1e-05
        %v1166 = vrsqrt.pop %v1165
        %v1167 = vmul.f32 %v1159, %v1166
        %v1168 = vld [vmem:[#allocation13] sm:$0x1]
        %v1170 = vlaneseq
        %v1171 = vshrl.u32 %v1170, 7
        %v1172 = vsub.s32 0, %v1171
        %v1173 = vrot.slane %v1168, %v1172
        %v1175 = vmul.f32 %v1167, %v1173
        %v1176 = vld [vmem:[#allocation15] sm:$0x1]
        %v1178 = vlaneseq
        %v1179 = vshrl.u32 %v1178, 7
        %v1180 = vsub.s32 0, %v1179
        %v1181 = vrot.slane %v1176, %v1180
        %v1183 = vadd.f32 %v1175, %v1181
        %v1184 = vpack.c.bf16 %v1183, %v1183
        %vm1185 = vcmask 257024
        %1186 = vst.msk [vmem:[%s413] sm:$0xf] %vm1185, %v1184
        %s1187 = sand.u32 %s210, 1
        %s1188 = scalar_lea.sflag [#allocation6], %s1187
        %s1189 = sand.u32 %s210, 1
        %s1190 = smul.addr %s1189, 4
        %s1191 = scalar_lea.vmem [#allocation16], %s1190
        // Predicated region
        $region81: #{_lambda_.11} parent=47 // pred_check
          %p1192 = pneg %p220
        $region82: #{_lambda_.11} parent=47 // pred_check_branch
          %1194 = sbr.rel (%p1192) target = $region84
        $region83: #{_lambda_.11} parent=47 // pred_region
          %s1196 = ssub.s32 64, 64
          %1197 = vsyncadd %s1188, %s1196
          %s1198 = sadd.s32 %s34, %s33
          %s1199 = smul.addr %s1198, 64
          %s1200 = scalar_lea.hbm %s7, %s1199
          %s1202 = sshll.u32 %s1191, 4
          %s1203 = int_to_ptr.vmem [resolvable:$true] %s1202
          %1205 = dma.vmem_to_hbm [thread:$0]  %s1203, 64, %s1200, %s1188
        $region84: #{_lambda_.11} parent=47 // pred_fallthru
          _
      $region48: #{_lambda_.11} parent=5 // pred_fallthru
        _
      %p1206 = scmp.le.s32.totalorder 2, %s24
      // Predicated region
      $region85: #{_lambda_.11} parent=5 // pred_check
        %p1207 = pneg %p1206
      $region86: #{_lambda_.11} parent=5 // pred_check_branch
        %1209 = sbr.rel (%p1207) target = $region88
      $region87: #{_lambda_.11} parent=5 // pred_region
        %s1210 = ssub.s32 %s24, 2
        // Predicated region
        $region89: #{_lambda_.11} parent=87 // pred_check
          %p1211 = pneg %p226
        $region90: #{_lambda_.11} parent=87 // pred_check_branch
          %1213 = sbr.rel (%p1211) target = $region92
        $region91: #{_lambda_.11} parent=87 // pred_region
          %s1214 = sand.u32 %s211, 1
          %s1215 = scalar_lea.sflag [#allocation6], %s1214
          %s1216 = sand.u32 %s211, 1
          %s1217 = smul.addr %s1216, 4
          %s1218 = scalar_lea.vmem [#allocation16], %s1217
          %1219 = dma.done %s1215, 64
        $region92: #{_lambda_.11} parent=87 // pred_fallthru
          _
      $region88: #{_lambda_.11} parent=5 // pred_fallthru
        _
    $region6: #{_lambda_.11} parent=1 // loop_footer
      %s28 = sadd.s32 1, %s24
    $region7: #{_lambda_.11} parent=1 // loop_footer_branch
      %23 = sbr.rel target = $region3
    $region8: #{_lambda_.11} parent=1 // loop_exit
      _
    %1220 = vsyncpa [#allocation5], 1
    %s1221 = scalar_lea.sflag [#allocation5], 1
    %1222 = vsyncpa %s1221, 1
    %1223 = vsyncpa [#allocation8], 1
    %s1224 = scalar_lea.sflag [#allocation8], 1
    %1225 = vsyncpa %s1224, 1
    %1226 = vsyncpa [#allocation11], 1
    %1227 = vsyncpa [#allocation14], 1
    %1228 = vsyncpa [#allocation6], 1
    %s1229 = scalar_lea.sflag [#allocation6], 1
    %1230 = vsyncpa %s1229, 1

// kernel: _lambda_.9
$region0: #{_lambda_.9}
  #allocation0 [shape = 'u32[]', space=smem, size = 0x4, offset = 0x4, fixed_abs, tag = 'smem constant byte address 0x4 - core index']
  #allocation1 [shape = 'u32[144,128]{1,0:T(1,128)}', space=vmem, size = 0x12000, scoped, tag = 'internal scratch']
  #allocation2 [shape = 'bf16[8,32]{1,0:T(8,128)(2,1)}', space=vmem, size = 0x800, scoped, tag = 'scratch operand']
  #allocation3 [shape = 'bf16[8,32]{1,0:T(8,128)(2,1)}', space=vmem, size = 0x800, scoped, tag = 'scratch operand']
  %s0 = inlined_call_operand.hbm [shape: bf16[2,8,32], index: 0, kind: input, shape index: {}, may-alias: {0,1}]
  %s1 = inlined_call_operand.hbm [shape: bf16[2,8,32], index: 1, kind: input, shape index: {}, may-alias: {0,1}]
  %s2 = inlined_call_operand.hbm [shape: s32[2,1,8], index: 2, kind: input, shape index: {}]
  %s3 = inlined_call_operand.hbm [shape: bf16[32,96], index: 3, kind: input, shape index: {}]
  %s4 = inlined_call_operand.hbm [shape: bf16[32,32], index: 4, kind: input, shape index: {}]
  %s5 = inlined_call_operand.hbm [shape: f32[1,32], index: 5, kind: input, shape index: {}]
  %s6 = inlined_call_operand.hbm [shape: f32[1,32], index: 6, kind: input, shape index: {}]
  %s7 = inlined_call_operand.hbm [shape: f32[1,32], index: 7, kind: input, shape index: {}]
  %s8 = inlined_call_operand.hbm [shape: bf16[2,8,32], index: 8, kind: output, shape index: {}]
  %s9 = sld [smem:[#allocation0]]
  $region101: #{_lambda_.9} parent=0
    _
  %s11 = ssub.s32 1, %s9
  %s12 = scalar_select 0, %s11, %s9
  $region1: #{_lambda_.9} parent=0
    #allocation4 [shape = 'u8[4096]{0}', space=vmem, size = 0x1000, scoped, tag = 'input window, operand 0']
    #allocation5 [shape = 's32[2]{0}', space=sflag, size = 0x8, scoped, tag = 'scoped memory for _lambda_.9']
    #allocation6 [shape = 's32[2]{0}', space=sflag, size = 0x8, scoped, tag = 'scoped memory for _lambda_.9']
    #allocation7 [shape = 'u8[4096]{0}', space=vmem, size = 0x1000, scoped, tag = 'input window, operand 1']
    #allocation8 [shape = 's32[2]{0}', space=sflag, size = 0x8, scoped, tag = 'scoped memory for _lambda_.9']
    #allocation9 [shape = 'u8[1024]{0}', space=vmem, size = 0x400, scoped, tag = 'input window, operand 2']
    #allocation10 [shape = 'u8[8192]{0}', space=vmem, size = 0x2000, scoped, tag = 'input window, operand 3, single buffered']
    #allocation11 [shape = 's32[1]{0}', space=sflag, size = 0x4, scoped, tag = 'scoped memory for _lambda_.9']
    #allocation12 [shape = 'u8[8192]{0}', space=vmem, size = 0x2000, scoped, tag = 'input window, operand 4, single buffered']
    #allocation13 [shape = 'u8[512]{0}', space=vmem, size = 0x400, scoped, tag = 'input window, operand 5, single buffered']
    #allocation14 [shape = 's32[1]{0}', space=sflag, size = 0x4, scoped, tag = 'scoped memory for _lambda_.9']
    #allocation15 [shape = 'u8[512]{0}', space=vmem, size = 0x400, scoped, tag = 'input window, operand 6, single buffered']
    #allocation16 [shape = 'u8[512]{0}', space=vmem, size = 0x400, scoped, tag = 'input window, operand 7, single buffered']
    #allocation17 [shape = 's32[1]{0}', space=sflag, size = 0x4, scoped, tag = 'scoped memory for _lambda_.9']
    #allocation18 [shape = 'u8[4096]{0}', space=vmem, size = 0x1000, scoped, tag = 'output window, operand 0']
    %13 = vsyncpa [#allocation5], 0
    %s14 = scalar_lea.sflag [#allocation5], 1
    %15 = vsyncpa %s14, 0
    %16 = vsyncpa [#allocation8], 0
    %s17 = scalar_lea.sflag [#allocation8], 1
    %18 = vsyncpa %s17, 0
    %19 = vsyncpa [#allocation11], 0
    %20 = vsyncpa [#allocation14], 0
    %21 = vsyncpa [#allocation17], 0
    %22 = vsyncpa [#allocation6], 0
    %s23 = scalar_lea.sflag [#allocation6], 1
    %24 = vsyncpa %s23, 0
    loop: start=0, step=1, limit=4
    $region2: #{_lambda_.9} parent=1 // loop_pre_header
      _
    $region3: #{_lambda_.9} parent=1 // loop_header
      %s26 = sphi 0, %s30
      %p27 = scmp.ge.s32.totalorder %s26, 4
      %s33 = sphi 0, %s45
      %s34 = sphi 0, %s41
      %s35 = sphi 0, %s33
      %s36 = sphi 0, %s34
      %s37 = sphi 0, %s35
      %s38 = sphi 0, %s36
      %s50 = sphi 0, %s52
      %s53 = sphi 0, %s50
      %s54 = sphi 0, %s53
      %s70 = sphi 0, %s54
      %s76 = sphi 0, %s78
      %s79 = sphi 0, %s76
      %s80 = sphi 0, %s79
      %s96 = sphi 0, %s80
      %s102 = sphi 0, %s104
      %s105 = sphi 0, %s102
      %s106 = sphi 0, %s105
      %s122 = sphi 0, %s106
      %s126 = sphi 0, %s126
      %s128 = sphi 0, %s126
      %s129 = sphi 0, %s128
      %s143 = sphi 0, %s129
      %s147 = sphi 0, %s147
      %s149 = sphi 0, %s147
      %s150 = sphi 0, %s149
      %s164 = sphi 0, %s150
      %s168 = sphi 0, %s168
      %s170 = sphi 0, %s168
      %s171 = sphi 0, %s170
      %s185 = sphi 0, %s171
      %s189 = sphi 0, %s189
      %s191 = sphi 0, %s189
      %s192 = sphi 0, %s191
      %s206 = sphi 0, %s192
      %s210 = sphi 0, %s210
      %s212 = sphi 0, %s210
      %s213 = sphi 0, %s212
      %s227 = sphi 0, %s213
      %s235 = sphi 0, %s237
      %s238 = sphi 0, %s235
      %s239 = sphi 0, %s238
      %s255 = sphi 0, %s239
    $region4: #{_lambda_.9} parent=1 // loop_header_branch
      %29 = sbr.rel (%p27) target = $region8
    $region5: #{_lambda_.9} parent=1 // loop_body
      %s31 = ssub.s32 %s26, 1
      %s32 = ssub.s32 %s26, 2
      %s39 = sadd.s32 1, %s34
      %p40 = scmp.ge.s32.totalorder %s39, 1
      %s41 = scalar_select %p40, 0, %s39
      %s42 = sadd.s32 1, %s33
      %s43 = scalar_select %p40, %s42, %s33
      %p44 = scmp.ge.s32.totalorder %s43, 2
      %s45 = scalar_select %p44, 0, %s43
      %s46 = ssub.s32 %s33, %s45
      %s47 = ssub.s32 %s34, %s41
      %s48 = sor.u32 %s46, %s47
      %p49 = scmp.eq.s32.totalorder %s48, 0
      %s51 = sadd.s32 %s50, 1
      %s52 = scalar_select %p49, %s50, %s51
      %p55 = pneg %p49
      %p56 = scmp.eq.s32.totalorder %s26, 1
      %p57 = por %p55, %p56
      %p58 = scmp.ne.s32.totalorder %s50, %s53
      %p59 = scmp.eq.s32.totalorder %s26, 0
      %p60 = por %p58, %p59
      %p61 = scmp.ne.s32.totalorder %s50, %s53
      %p62 = scmp.eq.s32.totalorder %s31, 1
      %p63 = por %p61, %p62
      %p64 = scmp.ne.s32.totalorder %s53, %s54
      %p65 = scmp.eq.s32.totalorder %s31, 0
      %p66 = por %p64, %p65
      %p67 = scmp.ne.s32.totalorder %s53, %s54
      %p68 = scmp.eq.s32.totalorder %s32, 1
      %p69 = por %p67, %p68
      %p71 = scmp.ne.s32.totalorder %s54, %s70
      %p72 = scmp.eq.s32.totalorder %s32, 0
      %p73 = por %p71, %p72
      %s74 = ssub.s32 %s33, %s45
      %p75 = scmp.eq.s32.totalorder %s74, 0
      %s77 = sadd.s32 %s76, 1
      %s78 = scalar_select %p75, %s76, %s77
      %p81 = pneg %p75
      %p82 = scmp.eq.s32.totalorder %s26, 1
      %p83 = por %p81, %p82
      %p84 = scmp.ne.s32.totalorder %s76, %s79
      %p85 = scmp.eq.s32.totalorder %s26, 0
      %p86 = por %p84, %p85
      %p87 = scmp.ne.s32.totalorder %s76, %s79
      %p88 = scmp.eq.s32.totalorder %s31, 1
      %p89 = por %p87, %p88
      %p90 = scmp.ne.s32.totalorder %s79, %s80
      %p91 = scmp.eq.s32.totalorder %s31, 0
      %p92 = por %p90, %p91
      %p93 = scmp.ne.s32.totalorder %s79, %s80
      %p94 = scmp.eq.s32.totalorder %s32, 1
      %p95 = por %p93, %p94
      %p97 = scmp.ne.s32.totalorder %s80, %s96
      %p98 = scmp.eq.s32.totalorder %s32, 0
      %p99 = por %p97, %p98
      %s100 = ssub.s32 %s33, %s45
      %p101 = scmp.eq.s32.totalorder %s100, 0
      %s103 = sadd.s32 %s102, 1
      %s104 = scalar_select %p101, %s102, %s103
      %p107 = pneg %p101
      %p108 = scmp.eq.s32.totalorder %s26, 1
      %p109 = por %p107, %p108
      %p110 = scmp.ne.s32.totalorder %s102, %s105
      %p111 = scmp.eq.s32.totalorder %s26, 0
      %p112 = por %p110, %p111
      %p113 = scmp.ne.s32.totalorder %s102, %s105
      %p114 = scmp.eq.s32.totalorder %s31, 1
      %p115 = por %p113, %p114
      %p116 = scmp.ne.s32.totalorder %s105, %s106
      %p117 = scmp.eq.s32.totalorder %s31, 0
      %p118 = por %p116, %p117
      %p119 = scmp.ne.s32.totalorder %s105, %s106
      %p120 = scmp.eq.s32.totalorder %s32, 1
      %p121 = por %p119, %p120
      %p123 = scmp.ne.s32.totalorder %s106, %s122
      %p124 = scmp.eq.s32.totalorder %s32, 0
      %p125 = por %p123, %p124
      %s127 = sadd.s32 %s126, 1
      %p130 = scmp.eq.s32.totalorder %s26, 1
      %p131 = scmp.ne.s32.totalorder %s126, %s128
      %p132 = scmp.eq.s32.totalorder %s26, 0
      %p133 = por %p131, %p132
      %p134 = scmp.ne.s32.totalorder %s126, %s128
      %p135 = scmp.eq.s32.totalorder %s31, 1
      %p136 = por %p134, %p135
      %p137 = scmp.ne.s32.totalorder %s128, %s129
      %p138 = scmp.eq.s32.totalorder %s31, 0
      %p139 = por %p137, %p138
      %p140 = scmp.ne.s32.totalorder %s128, %s129
      %p141 = scmp.eq.s32.totalorder %s32, 1
      %p142 = por %p140, %p141
      %p144 = scmp.ne.s32.totalorder %s129, %s143
      %p145 = scmp.eq.s32.totalorder %s32, 0
      %p146 = por %p144, %p145
      %s148 = sadd.s32 %s147, 1
      %p151 = scmp.eq.s32.totalorder %s26, 1
      %p152 = scmp.ne.s32.totalorder %s147, %s149
      %p153 = scmp.eq.s32.totalorder %s26, 0
      %p154 = por %p152, %p153
      %p155 = scmp.ne.s32.totalorder %s147, %s149
      %p156 = scmp.eq.s32.totalorder %s31, 1
      %p157 = por %p155, %p156
      %p158 = scmp.ne.s32.totalorder %s149, %s150
      %p159 = scmp.eq.s32.totalorder %s31, 0
      %p160 = por %p158, %p159
      %p161 = scmp.ne.s32.totalorder %s149, %s150
      %p162 = scmp.eq.s32.totalorder %s32, 1
      %p163 = por %p161, %p162
      %p165 = scmp.ne.s32.totalorder %s150, %s164
      %p166 = scmp.eq.s32.totalorder %s32, 0
      %p167 = por %p165, %p166
      %s169 = sadd.s32 %s168, 1
      %p172 = scmp.eq.s32.totalorder %s26, 1
      %p173 = scmp.ne.s32.totalorder %s168, %s170
      %p174 = scmp.eq.s32.totalorder %s26, 0
      %p175 = por %p173, %p174
      %p176 = scmp.ne.s32.totalorder %s168, %s170
      %p177 = scmp.eq.s32.totalorder %s31, 1
      %p178 = por %p176, %p177
      %p179 = scmp.ne.s32.totalorder %s170, %s171
      %p180 = scmp.eq.s32.totalorder %s31, 0
      %p181 = por %p179, %p180
      %p182 = scmp.ne.s32.totalorder %s170, %s171
      %p183 = scmp.eq.s32.totalorder %s32, 1
      %p184 = por %p182, %p183
      %p186 = scmp.ne.s32.totalorder %s171, %s185
      %p187 = scmp.eq.s32.totalorder %s32, 0
      %p188 = por %p186, %p187
      %s190 = sadd.s32 %s189, 1
      %p193 = scmp.eq.s32.totalorder %s26, 1
      %p194 = scmp.ne.s32.totalorder %s189, %s191
      %p195 = scmp.eq.s32.totalorder %s26, 0
      %p196 = por %p194, %p195
      %p197 = scmp.ne.s32.totalorder %s189, %s191
      %p198 = scmp.eq.s32.totalorder %s31, 1
      %p199 = por %p197, %p198
      %p200 = scmp.ne.s32.totalorder %s191, %s192
      %p201 = scmp.eq.s32.totalorder %s31, 0
      %p202 = por %p200, %p201
      %p203 = scmp.ne.s32.totalorder %s191, %s192
      %p204 = scmp.eq.s32.totalorder %s32, 1
      %p205 = por %p203, %p204
      %p207 = scmp.ne.s32.totalorder %s192, %s206
      %p208 = scmp.eq.s32.totalorder %s32, 0
      %p209 = por %p207, %p208
      %s211 = sadd.s32 %s210, 1
      %p214 = scmp.eq.s32.totalorder %s26, 1
      %p215 = scmp.ne.s32.totalorder %s210, %s212
      %p216 = scmp.eq.s32.totalorder %s26, 0
      %p217 = por %p215, %p216
      %p218 = scmp.ne.s32.totalorder %s210, %s212
      %p219 = scmp.eq.s32.totalorder %s31, 1
      %p220 = por %p218, %p219
      %p221 = scmp.ne.s32.totalorder %s212, %s213
      %p222 = scmp.eq.s32.totalorder %s31, 0
      %p223 = por %p221, %p222
      %p224 = scmp.ne.s32.totalorder %s212, %s213
      %p225 = scmp.eq.s32.totalorder %s32, 1
      %p226 = por %p224, %p225
      %p228 = scmp.ne.s32.totalorder %s213, %s227
      %p229 = scmp.eq.s32.totalorder %s32, 0
      %p230 = por %p228, %p229
      %s231 = ssub.s32 %s33, %s45
      %s232 = ssub.s32 %s34, %s41
      %s233 = sor.u32 %s231, %s232
      %p234 = scmp.eq.s32.totalorder %s233, 0
      %s236 = sadd.s32 %s235, 1
      %s237 = scalar_select %p234, %s235, %s236
      %p240 = pneg %p234
      %p241 = scmp.eq.s32.totalorder %s26, 1
      %p242 = por %p240, %p241
      %p243 = scmp.ne.s32.totalorder %s235, %s238
      %p244 = scmp.eq.s32.totalorder %s26, 0
      %p245 = por %p243, %p244
      %p246 = scmp.ne.s32.totalorder %s235, %s238
      %p247 = scmp.eq.s32.totalorder %s31, 1
      %p248 = por %p246, %p247
      %p249 = scmp.ne.s32.totalorder %s238, %s239
      %p250 = scmp.eq.s32.totalorder %s31, 0
      %p251 = por %p249, %p250
      %p252 = scmp.ne.s32.totalorder %s238, %s239
      %p253 = scmp.eq.s32.totalorder %s32, 1
      %p254 = por %p252, %p253
      %p256 = scmp.ne.s32.totalorder %s239, %s255
      %p257 = scmp.eq.s32.totalorder %s32, 0
      %p258 = por %p256, %p257
      %p259 = scmp.le.s32.totalorder 1, %s26
      %p260 = scmp.lt.s32.totalorder %s26, 3
      %p261 = pnand %p259, %p260
      %p262 = pneg %p261
      // Predicated region
      $region9: #{_lambda_.9} parent=5 // pred_check
        _
      $region10: #{_lambda_.9} parent=5 // pred_check_branch
        %264 = sbr.rel (%p261) target = $region12
      $region11: #{_lambda_.9} parent=5 // pred_region
        %s265 = ssub.s32 %s26, 1
        // Predicated region
        $region13: #{_lambda_.9} parent=11 // pred_check
          %p266 = pneg %p139
        $region14: #{_lambda_.9} parent=11 // pred_check_branch
          %268 = sbr.rel (%p266) target = $region16
        $region15: #{_lambda_.9} parent=11 // pred_region
          %s270 = ssub.s32 256, 256
          %271 = vsyncadd [#allocation11], %s270
          %s272 = sshll.u32 [#allocation10], 4
          %s273 = int_to_ptr.vmem [resolvable:$true] %s272
          %278 = dma.hbm_to_vmem [thread:$0]  %s3, 256, %s273, [#allocation11], 64, 64, 4
        $region16: #{_lambda_.9} parent=11 // pred_fallthru
          _
        // Predicated region
        $region17: #{_lambda_.9} parent=11 // pred_check
          %p279 = pneg %p160
        $region18: #{_lambda_.9} parent=11 // pred_check_branch
          %281 = sbr.rel (%p279) target = $region20
        $region19: #{_lambda_.9} parent=11 // pred_region
          %s283 = ssub.s32 256, 256
          %284 = vsyncadd [#allocation11], %s283
          %s285 = sshll.u32 [#allocation12], 4
          %s286 = int_to_ptr.vmem [resolvable:$true] %s285
          %291 = dma.hbm_to_vmem [thread:$0]  %s4, 256, %s286, [#allocation11], 64, 64, 4
        $region20: #{_lambda_.9} parent=11 // pred_fallthru
          _
        // Predicated region
        $region21: #{_lambda_.9} parent=11 // pred_check
          %p292 = pneg %p181
        $region22: #{_lambda_.9} parent=11 // pred_check_branch
          %294 = sbr.rel (%p292) target = $region24
        $region23: #{_lambda_.9} parent=11 // pred_region
          %s296 = ssub.s32 16, 16
          %297 = vsyncadd [#allocation14], %s296
          %s299 = sshll.u32 [#allocation13], 4
          %s300 = int_to_ptr.vmem [resolvable:$true] %s299
          %302 = dma.hbm_to_vmem [thread:$0]  %s5, 16, %s300, [#allocation14]
        $region24: #{_lambda_.9} parent=11 // pred_fallthru
          _
        // Predicated region
        $region25: #{_lambda_.9} parent=11 // pred_check
          %p303 = pneg %p202
        $region26: #{_lambda_.9} parent=11 // pred_check_branch
          %305 = sbr.rel (%p303) target = $region28
        $region27: #{_lambda_.9} parent=11 // pred_region
          %s307 = ssub.s32 16, 16
          %308 = vsyncadd [#allocation14], %s307
          %s310 = sshll.u32 [#allocation15], 4
          %s311 = int_to_ptr.vmem [resolvable:$true] %s310
          %313 = dma.hbm_to_vmem [thread:$0]  %s6, 16, %s311, [#allocation14]
        $region28: #{_lambda_.9} parent=11 // pred_fallthru
          _
        // Predicated region
        $region29: #{_lambda_.9} parent=11 // pred_check
          %p314 = pneg %p223
        $region30: #{_lambda_.9} parent=11 // pred_check_branch
          %316 = sbr.rel (%p314) target = $region32
        $region31: #{_lambda_.9} parent=11 // pred_region
          %s318 = ssub.s32 16, 16
          %319 = vsyncadd [#allocation17], %s318
          %s321 = sshll.u32 [#allocation16], 4
          %s322 = int_to_ptr.vmem [resolvable:$true] %s321
          %324 = dma.hbm_to_vmem [thread:$0]  %s7, 16, %s322, [#allocation17]
        $region32: #{_lambda_.9} parent=11 // pred_fallthru
          _
      $region12: #{_lambda_.9} parent=5 // pred_fallthru
        _
      %p325 = scmp.lt.s32.totalorder %s26, 2
      // Predicated region
      $region33: #{_lambda_.9} parent=5 // pred_check
        %p326 = pneg %p325
      $region34: #{_lambda_.9} parent=5 // pred_check_branch
        %328 = sbr.rel (%p326) target = $region36
      $region35: #{_lambda_.9} parent=5 // pred_region
        // Predicated region
        $region37: #{_lambda_.9} parent=35 // pred_check
          %p329 = pneg %p60
        $region38: #{_lambda_.9} parent=35 // pred_check_branch
          %331 = sbr.rel (%p329) target = $region40
        $region39: #{_lambda_.9} parent=35 // pred_region
          %s332 = sand.u32 %s50, 1
          %s333 = scalar_lea.sflag [#allocation5], %s332
          %s334 = sand.u32 %s50, 1
          %s335 = smul.addr %s334, 4
          %s336 = scalar_lea.vmem [#allocation4], %s335
          %s338 = ssub.s32 64, 64
          %339 = vsyncadd %s333, %s338
          %s340 = sadd.s32 %s34, %s33
          %s341 = smul.addr %s340, 64
          %s342 = scalar_lea.hbm %s0, %s341
          %s344 = sshll.u32 %s336, 4
          %s345 = int_to_ptr.vmem [resolvable:$true] %s344
          %347 = dma.hbm_to_vmem [thread:$0]  %s342, 64, %s345, %s333
        $region40: #{_lambda_.9} parent=35 // pred_fallthru
          _
        // Predicated region
        $region41: #{_lambda_.9} parent=35 // pred_check
          %p348 = pneg %p86
        $region42: #{_lambda_.9} parent=35 // pred_check_branch
          %350 = sbr.rel (%p348) target = $region44
        $region43: #{_lambda_.9} parent=35 // pred_region
          %s351 = sand.u32 %s26, 1
          %s352 = scalar_lea.sflag [#allocation8], %s351
          %s353 = sand.u32 %s76, 1
          %s354 = smul.addr %s353, 4
          %s355 = scalar_lea.vmem [#allocation7], %s354
          %s357 = ssub.s32 64, 64
          %358 = vsyncadd %s352, %s357
          %s359 = smul.addr %s33, 64
          %s360 = scalar_lea.hbm %s1, %s359
          %s362 = sshll.u32 %s355, 4
          %s363 = int_to_ptr.vmem [resolvable:$true] %s362
          %365 = dma.hbm_to_vmem [thread:$0]  %s360, 64, %s363, %s352
        $region44: #{_lambda_.9} parent=35 // pred_fallthru
          _
        // Predicated region
        $region45: #{_lambda_.9} parent=35 // pred_check
          %p366 = pneg %p112
        $region46: #{_lambda_.9} parent=35 // pred_check_branch
          %368 = sbr.rel (%p366) target = $region48
        $region47: #{_lambda_.9} parent=35 // pred_region
          %s369 = sand.u32 %s26, 1
          %s370 = scalar_lea.sflag [#allocation8], %s369
          %s371 = sand.u32 %s102, 1
          %s372 = scalar_lea.vmem [#allocation9], %s371
          %s374 = ssub.s32 16, 16
          %375 = vsyncadd %s370, %s374
          %s376 = smul.addr %s33, 16
          %s377 = scalar_lea.hbm %s2, %s376
          %s379 = sshll.u32 %s372, 4
          %s380 = int_to_ptr.vmem [resolvable:$true] %s379
          %382 = dma.hbm_to_vmem [thread:$0]  %s377, 16, %s380, %s370
        $region48: #{_lambda_.9} parent=35 // pred_fallthru
          _
      $region36: #{_lambda_.9} parent=5 // pred_fallthru
        _
      %p383 = scmp.le.s32.totalorder 1, %s26
      %p384 = scmp.lt.s32.totalorder %s26, 3
      %p385 = pnand %p383, %p384
      %p386 = pneg %p385
      // Predicated region
      $region49: #{_lambda_.9} parent=5 // pred_check
        _
      $region50: #{_lambda_.9} parent=5 // pred_check_branch
        %388 = sbr.rel (%p385) target = $region52
      $region51: #{_lambda_.9} parent=5 // pred_region
        %s389 = ssub.s32 %s26, 1
        %s390 = sand.u32 %s53, 1
        %s391 = scalar_lea.sflag [#allocation5], %s390
        %s392 = sand.u32 %s53, 1
        %s393 = smul.addr %s392, 4
        %s394 = scalar_lea.vmem [#allocation4], %s393
        // Predicated region
        $region53: #{_lambda_.9} parent=51 // pred_check
          %p395 = pneg %p66
        $region54: #{_lambda_.9} parent=51 // pred_check_branch
          %397 = sbr.rel (%p395) target = $region56
        $region55: #{_lambda_.9} parent=51 // pred_region
          %398 = dma.done %s391, 64
        $region56: #{_lambda_.9} parent=51 // pred_fallthru
          _
        %s399 = sand.u32 %s31, 1
        %s400 = scalar_lea.sflag [#allocation8], %s399
        %s401 = sand.u32 %s79, 1
        %s402 = smul.addr %s401, 4
        %s403 = scalar_lea.vmem [#allocation7], %s402
        // Predicated region
        $region57: #{_lambda_.9} parent=51 // pred_check
          %p404 = pneg %p92
        $region58: #{_lambda_.9} parent=51 // pred_check_branch
          %406 = sbr.rel (%p404) target = $region60
        $region59: #{_lambda_.9} parent=51 // pred_region
          %407 = dma.done %s400, 64
        $region60: #{_lambda_.9} parent=51 // pred_fallthru
          _
        %s408 = sand.u32 %s31, 1
        %s409 = scalar_lea.sflag [#allocation8], %s408
        %s410 = sand.u32 %s105, 1
        %s411 = scalar_lea.vmem [#allocation9], %s410
        // Predicated region
        $region61: #{_lambda_.9} parent=51 // pred_check
          %p412 = pneg %p118
        $region62: #{_lambda_.9} parent=51 // pred_check_branch
          %414 = sbr.rel (%p412) target = $region64
        $region63: #{_lambda_.9} parent=51 // pred_region
          %415 = dma.done %s409, 16
        $region64: #{_lambda_.9} parent=51 // pred_fallthru
          _
        // Predicated region
        $region65: #{_lambda_.9} parent=51 // pred_check
          %p416 = pneg %p139
        $region66: #{_lambda_.9} parent=51 // pred_check_branch
          %418 = sbr.rel (%p416) target = $region68
        $region67: #{_lambda_.9} parent=51 // pred_region
          %419 = dma.done [#allocation11], 256
        $region68: #{_lambda_.9} parent=51 // pred_fallthru
          _
        // Predicated region
        $region69: #{_lambda_.9} parent=51 // pred_check
          %p420 = pneg %p160
        $region70: #{_lambda_.9} parent=51 // pred_check_branch
          %422 = sbr.rel (%p420) target = $region72
        $region71: #{_lambda_.9} parent=51 // pred_region
          %423 = dma.done [#allocation11], 256
        $region72: #{_lambda_.9} parent=51 // pred_fallthru
          _
        // Predicated region
        $region73: #{_lambda_.9} parent=51 // pred_check
          %p424 = pneg %p181
        $region74: #{_lambda_.9} parent=51 // pred_check_branch
          %426 = sbr.rel (%p424) target = $region76
        $region75: #{_lambda_.9} parent=51 // pred_region
          %427 = dma.done [#allocation14], 16
        $region76: #{_lambda_.9} parent=51 // pred_fallthru
          _
        // Predicated region
        $region77: #{_lambda_.9} parent=51 // pred_check
          %p428 = pneg %p202
        $region78: #{_lambda_.9} parent=51 // pred_check_branch
          %430 = sbr.rel (%p428) target = $region80
        $region79: #{_lambda_.9} parent=51 // pred_region
          %431 = dma.done [#allocation14], 16
        $region80: #{_lambda_.9} parent=51 // pred_fallthru
          _
        // Predicated region
        $region81: #{_lambda_.9} parent=51 // pred_check
          %p432 = pneg %p223
        $region82: #{_lambda_.9} parent=51 // pred_check_branch
          %434 = sbr.rel (%p432) target = $region84
        $region83: #{_lambda_.9} parent=51 // pred_region
          %435 = dma.done [#allocation17], 16
        $region84: #{_lambda_.9} parent=51 // pred_fallthru
          _
        %s436 = sand.u32 %s53, 1
        %s437 = scalar_lea.sflag [#allocation5], %s436
        %s438 = sand.u32 %s53, 1
        %s439 = smul.addr %s438, 4
        %s440 = scalar_lea.vmem [#allocation4], %s439
        %p441 = pneg %p66
        %p442 = pneg %p63
        %s443 = sand.u32 %s31, 1
        %s444 = scalar_lea.sflag [#allocation8], %s443
        %s445 = sand.u32 %s79, 1
        %s446 = smul.addr %s445, 4
        %s447 = scalar_lea.vmem [#allocation7], %s446
        %p448 = pneg %p92
        %p449 = pneg %p89
        %s450 = sand.u32 %s31, 1
        %s451 = scalar_lea.sflag [#allocation8], %s450
        %s452 = sand.u32 %s105, 1
        %s453 = scalar_lea.vmem [#allocation9], %s452
        %p454 = pneg %p118
        %p455 = pneg %p115
        %p456 = pneg %p139
        %p457 = pneg %p136
        %p458 = pneg %p160
        %p459 = pneg %p157
        %p460 = pneg %p181
        %p461 = pneg %p178
        %p462 = pneg %p202
        %p463 = pneg %p199
        %p464 = pneg %p223
        %p465 = pneg %p220
        %p466 = pneg %p251
        %p467 = pneg %p248
        %s468 = sand.u32 %s238, 1
        %s469 = scalar_lea.sflag [#allocation6], %s468
        %s470 = sand.u32 %s238, 1
        %s471 = smul.addr %s470, 4
        %s472 = scalar_lea.vmem [#allocation18], %s471
        %p474 = scmp.eq.s32.totalorder %s36, 0
        // Predicated region
        $region85: #{_lambda_.9} parent=51 // pred_check
          %p475 = pneg %p474
        $region86: #{_lambda_.9} parent=51 // pred_check_branch
          %477 = sbr.rel (%p475) target = $region88
        $region87: #{_lambda_.9} parent=51 // pred_region
          %v478 = vld [vmem:[%s403] sm:$0xf]
          %v479 = vld [vmem:[#allocation10] sm:$0xf]
          %v480 = vld [vmem:[#allocation10 + $0x4] sm:$0xf]
          %v481 = vld [vmem:[#allocation10 + $0x8] sm:$0xf]
          %v482 = vld [vmem:[#allocation10 + $0xc] sm:$0xf]
          %v487 = vunpack.c.l.b16 %v479
          %v488 = vunpack.c.l.b16 %v480
          %v489 = vunpack.c.l.b16 %v481
          %v490 = vunpack.c.l.b16 %v482
          %v491 = vpack.c.b16 %v488, %v487
          %v492 = vpack.c.b16 %v490, %v489
          %493 = vrot.lane.b32.xlu0 %v491, 96
          %v494 = vpop.permute.xlu0 %493
          %495 = vrot.lane.b32.xlu0 %v492, 96
          %v496 = vpop.permute.xlu0 %495
          %vm499 = vcmask 261120
          %v501 = vsel %vm499, %v478, 0
          %503 = vmatprep.subr.bf16.mxu0 0
          %504 = vmatpush1.bf16.msra.mxu0 %v494
          %505 = vmatprep.subr.bf16.mxu0 0
          %506 = vmatpush1.bf16.msra.mxu0 %v496
          %507 = vmatprep.subr.bf16.mxu0 0
          %508 = vmatpush1.bf16.msra.mxu0 0
          %509 = vmatprep.subr.bf16.mxu0 0
          %510 = vmatpush1.bf16.msra.mxu0 0
          %511 = vmatprep.subr.bf16.mxu0 0
          %512 = vmatpush1.bf16.msra.mxu0 0
          %513 = vmatprep.subr.bf16.mxu0 0
          %514 = vmatpush1.bf16.msra.mxu0 0
          %515 = vmatprep.subr.bf16.mxu0 0
          %516 = vmatpush1.bf16.msra.mxu0 0
          %517 = vmatprep.subr.bf16.mxu0 0
          %518 = vmatpush1.bf16.msra.mxu0 0
          %519 = vmatprep.subr.bf16.mxu0 0
          %520 = vmatpush1.bf16.msra.mxu0 0
          %521 = vmatprep.subr.bf16.mxu0 0
          %522 = vmatpush1.bf16.msra.mxu0 0
          %523 = vmatprep.subr.bf16.mxu0 0
          %524 = vmatpush1.bf16.msra.mxu0 0
          %525 = vmatprep.subr.bf16.mxu0 0
          %526 = vmatpush1.bf16.msra.mxu0 0
          %527 = vmatprep.subr.bf16.mxu0 0
          %528 = vmatpush1.bf16.msra.mxu0 0
          %529 = vmatprep.subr.bf16.mxu0 0
          %530 = vmatpush1.bf16.msra.mxu0 0
          %531 = vmatprep.subr.bf16.mxu0 0
          %532 = vmatpush1.bf16.msra.mxu0 0
          %533 = vmatprep.subr.bf16.mxu0 0
          %534 = vmatpush1.bf16.msra.mxu0 0
          %535 = vmatprep.mubr.bf16.mxu0 0
          %536 = vmatmul.mubr.bf16.gmra.mrb[0].mxu0 %v501
          %v537 = vpop.f32.mrb[0].mxu0
          %v538 = vadd.f32 0.0, %v537
          %v539 = vpop.f32.mrb[0].mxu0
          %v540 = vpop.f32.mrb[0].mxu0
          %v541 = vpop.f32.mrb[0].mxu0
          %542 = vdwg.mxu0
          %v543 = vpack.c.bf16 %v538, %v538
          %vm544 = vcmask 257024
          %545 = vst.msk [vmem:[#allocation2] sm:$0xf] %vm544, %v543
          %v546 = vld [vmem:[#allocation10] sm:$0xf]
          %v547 = vld [vmem:[#allocation10 + $0x4] sm:$0xf]
          %v548 = vld [vmem:[#allocation10 + $0x8] sm:$0xf]
          %v549 = vld [vmem:[#allocation10 + $0xc] sm:$0xf]
          %v554 = vunpack.c.l.b16 %v546
          %v555 = vunpack.c.l.b16 %v547
          %v556 = vunpack.c.l.b16 %v548
          %v557 = vunpack.c.l.b16 %v549
          %v558 = vpack.c.b16 %v555, %v554
          %v559 = vpack.c.b16 %v557, %v556
          %560 = vrot.lane.b32.xlu0 %v558, 64
          %v561 = vpop.permute.xlu0 %560
          %562 = vrot.lane.b32.xlu0 %v559, 64
          %v563 = vpop.permute.xlu0 %562
          %566 = vmatprep.subr.bf16.mxu0 0
          %567 = vmatpush1.bf16.msra.mxu0 %v561
          %568 = vmatprep.subr.bf16.mxu0 0
          %569 = vmatpush1.bf16.msra.mxu0 %v563
          %570 = vmatprep.subr.bf16.mxu0 0
          %571 = vmatpush1.bf16.msra.mxu0 0
          %572 = vmatprep.subr.bf16.mxu0 0
          %573 = vmatpush1.bf16.msra.mxu0 0
          %574 = vmatprep.subr.bf16.mxu0 0
          %575 = vmatpush1.bf16.msra.mxu0 0
          %576 = vmatprep.subr.bf16.mxu0 0
          %577 = vmatpush1.bf16.msra.mxu0 0
          %578 = vmatprep.subr.bf16.mxu0 0
          %579 = vmatpush1.bf16.msra.mxu0 0
          %580 = vmatprep.subr.bf16.mxu0 0
          %581 = vmatpush1.bf16.msra.mxu0 0
          %582 = vmatprep.subr.bf16.mxu0 0
          %583 = vmatpush1.bf16.msra.mxu0 0
          %584 = vmatprep.subr.bf16.mxu0 0
          %585 = vmatpush1.bf16.msra.mxu0 0
          %586 = vmatprep.subr.bf16.mxu0 0
          %587 = vmatpush1.bf16.msra.mxu0 0
          %588 = vmatprep.subr.bf16.mxu0 0
          %589 = vmatpush1.bf16.msra.mxu0 0
          %590 = vmatprep.subr.bf16.mxu0 0
          %591 = vmatpush1.bf16.msra.mxu0 0
          %592 = vmatprep.subr.bf16.mxu0 0
          %593 = vmatpush1.bf16.msra.mxu0 0
          %594 = vmatprep.subr.bf16.mxu0 0
          %595 = vmatpush1.bf16.msra.mxu0 0
          %596 = vmatprep.subr.bf16.mxu0 0
          %597 = vmatpush1.bf16.msra.mxu0 0
          %598 = vmatprep.mubr.bf16.mxu0 0
          %599 = vmatmul.mubr.bf16.gmra.mrb[0].mxu0 %v501
          %v600 = vpop.f32.mrb[0].mxu0
          %v601 = vadd.f32 0.0, %v600
          %v602 = vpop.f32.mrb[0].mxu0
          %v603 = vpop.f32.mrb[0].mxu0
          %v604 = vpop.f32.mrb[0].mxu0
          %605 = vdwg.mxu0
          %v606 = vpack.c.bf16 %v601, %v601
          %607 = vst.msk [vmem:[#allocation3] sm:$0xf] %vm544, %v606
        $region88: #{_lambda_.9} parent=51 // pred_fallthru
          _
        %v608 = vld [vmem:[%s394] sm:$0xf]
        %v609 = vunpack.c.l.bf16 %v608
        %v610 = vld [vmem:[#allocation10] sm:$0xf]
        %v611 = vld [vmem:[#allocation10 + $0x4] sm:$0xf]
        %v612 = vld [vmem:[#allocation10 + $0x8] sm:$0xf]
        %v613 = vld [vmem:[#allocation10 + $0xc] sm:$0xf]
        %v618 = vunpack.c.l.b16 %v610
        %v619 = vunpack.c.l.b16 %v611
        %v620 = vunpack.c.l.b16 %v612
        %v621 = vunpack.c.l.b16 %v613
        %v622 = vpack.c.b16 %v619, %v618
        %v623 = vpack.c.b16 %v621, %v620
        %vm626 = vcmask 261120
        %v628 = vsel %vm626, %v608, 0
        %630 = vmatprep.subr.bf16.mxu0 0
        %631 = vmatpush1.bf16.msra.mxu0 %v622
        %632 = vmatprep.subr.bf16.mxu0 0
        %633 = vmatpush1.bf16.msra.mxu0 %v623
        %634 = vmatprep.subr.bf16.mxu0 0
        %635 = vmatpush1.bf16.msra.mxu0 0
        %636 = vmatprep.subr.bf16.mxu0 0
        %637 = vmatpush1.bf16.msra.mxu0 0
        %638 = vmatprep.subr.bf16.mxu0 0
        %639 = vmatpush1.bf16.msra.mxu0 0
        %640 = vmatprep.subr.bf16.mxu0 0
        %641 = vmatpush1.bf16.msra.mxu0 0
        %642 = vmatprep.subr.bf16.mxu0 0
        %643 = vmatpush1.bf16.msra.mxu0 0
        %644 = vmatprep.subr.bf16.mxu0 0
        %645 = vmatpush1.bf16.msra.mxu0 0
        %646 = vmatprep.subr.bf16.mxu0 0
        %647 = vmatpush1.bf16.msra.mxu0 0
        %648 = vmatprep.subr.bf16.mxu0 0
        %649 = vmatpush1.bf16.msra.mxu0 0
        %650 = vmatprep.subr.bf16.mxu0 0
        %651 = vmatpush1.bf16.msra.mxu0 0
        %652 = vmatprep.subr.bf16.mxu0 0
        %653 = vmatpush1.bf16.msra.mxu0 0
        %654 = vmatprep.subr.bf16.mxu0 0
        %655 = vmatpush1.bf16.msra.mxu0 0
        %656 = vmatprep.subr.bf16.mxu0 0
        %657 = vmatpush1.bf16.msra.mxu0 0
        %658 = vmatprep.subr.bf16.mxu0 0
        %659 = vmatpush1.bf16.msra.mxu0 0
        %660 = vmatprep.subr.bf16.mxu0 0
        %661 = vmatpush1.bf16.msra.mxu0 0
        %662 = vmatprep.mubr.bf16.mxu0 0
        %663 = vmatmul.mubr.bf16.gmra.mrb[0].mxu0 %v628
        %v664 = vpop.f32.mrb[0].mxu0
        %v665 = vadd.f32 0.0, %v664
        %v666 = vpop.f32.mrb[0].mxu0
        %v667 = vpop.f32.mrb[0].mxu0
        %v668 = vpop.f32.mrb[0].mxu0
        %669 = vdwg.mxu0
        %v670 = vld [vmem:[#allocation2] sm:$0xf]
        %v671 = vld [vmem:[#allocation3] sm:$0xf]
        %v672 = vld [vmem:[%s411] sm:$0x1]
        %vm673 = vcmp.eq.s32.totalorder %v672, 0
        %v674 = vpack.c.bf16 %v665, %v665
        %vm675 = vcmask 64512
        %v677 = vsel %vm675, %v674, 0
        %v680 = vsel %vm675, %v670, 0
        %682 = vmatprep.subr.bf16.mxu0 0
        %683 = vmatpush1.bf16.xpose.msra.mxu0 %v680
        %684 = vmatprep.subr.bf16.mxu0 0
        %685 = vmatpush1.bf16.xpose.msra.mxu0 0
        %686 = vmatprep.subr.bf16.mxu0 0
        %687 = vmatpush1.bf16.xpose.msra.mxu0 0
        %688 = vmatprep.subr.bf16.mxu0 0
        %689 = vmatpush1.bf16.xpose.msra.mxu0 0
        %690 = vmatprep.subr.bf16.mxu0 0
        %691 = vmatpush1.bf16.xpose.msra.mxu0 0
        %692 = vmatprep.subr.bf16.mxu0 0
        %693 = vmatpush1.bf16.xpose.msra.mxu0 0
        %694 = vmatprep.subr.bf16.mxu0 0
        %695 = vmatpush1.bf16.xpose.msra.mxu0 0
        %696 = vmatprep.subr.bf16.mxu0 0
        %697 = vmatpush1.bf16.xpose.msra.mxu0 0
        %698 = vmatprep.subr.bf16.mxu0 0
        %699 = vmatpush1.bf16.xpose.msra.mxu0 0
        %700 = vmatprep.subr.bf16.mxu0 0
        %701 = vmatpush1.bf16.xpose.msra.mxu0 0
        %702 = vmatprep.subr.bf16.mxu0 0
        %703 = vmatpush1.bf16.xpose.msra.mxu0 0
        %704 = vmatprep.subr.bf16.mxu0 0
        %705 = vmatpush1.bf16.xpose.msra.mxu0 0
        %706 = vmatprep.subr.bf16.mxu0 0
        %707 = vmatpush1.bf16.xpose.msra.mxu0 0
        %708 = vmatprep.subr.bf16.mxu0 0
        %709 = vmatpush1.bf16.xpose.msra.mxu0 0
        %710 = vmatprep.subr.bf16.mxu0 0
        %711 = vmatpush1.bf16.xpose.msra.mxu0 0
        %712 = vmatprep.subr.bf16.mxu0 0
        %713 = vmatpush1.bf16.xpose.msra.mxu0 0
        %714 = vmatprep.mubr.bf16.mxu0 0
        %715 = vmatmul.mubr.bf16.gmra.mrb[0].mxu0 %v677
        %v716 = vpop.f32.mrb[0].mxu0
        %v717 = vadd.f32 0.0, %v716
        %v718 = vpop.f32.mrb[0].mxu0
        %v719 = vpop.f32.mrb[0].mxu0
        %v720 = vpop.f32.mrb[0].mxu0
        %721 = vdwg.mxu0
        %v722 = vsel %vm673, 1, 0
        %v723 = vlaneseq
        %v724 = vshrl.u32 %v723, 7
        %v725 = vsub.s32 0, %v724
        %v726 = vrot.slane %v722, %v725
        %vm727 = vcmp.eq.s32.totalorder %v726, 1
        %v728 = vsel %vm727, -1e+20, %v717
        %v729 = vsel %vm675, %v728, -inf
        %730 = vmax.xlane.f32.xlu0 %v729
        %v731 = vpop.xlane.xlu0 %730
        %v732 = vsub.f32 %v728, %v731
        %v733 = vmul.f32 %v732, 1.442695
        %v734 = vpow.pop %v733
        %v735 = vsel %vm675, %v734, 0.0
        %736 = vadd.xlane.f32.xlu0 %v735
        %v737 = vpop.xlane.xlu0 %736
        %v738 = vrcp.pop %v737
        %v739 = vmul.f32 %v734, %v738
        %v740 = vpack.c.bf16 %v739, %v739
        %v742 = vsel %vm675, %v740, 0
        %vm744 = vcmask 1043456
        %v746 = vsel %vm744, %v671, 0
        %748 = vmatprep.subr.bf16.mxu0 0
        %749 = vmatpush1.bf16.msra.mxu0 %v746
        %750 = vmatprep.subr.bf16.mxu0 0
        %751 = vmatpush1.bf16.msra.mxu0 0
        %752 = vmatprep.subr.bf16.mxu0 0
        %753 = vmatpush1.bf16.msra.mxu0 0
        %754 = vmatprep.subr.bf16.mxu0 0
        %755 = vmatpush1.bf16.msra.mxu0 0
        %756 = vmatprep.subr.bf16.mxu0 0
        %757 = vmatpush1.bf16.msra.mxu0 0
        %758 = vmatprep.subr.bf16.mxu0 0
        %759 = vmatpush1.bf16.msra.mxu0 0
        %760 = vmatprep.subr.bf16.mxu0 0
        %761 = vmatpush1.bf16.msra.mxu0 0
        %762 = vmatprep.subr.bf16.mxu0 0
        %763 = vmatpush1.bf16.msra.mxu0 0
        %764 = vmatprep.subr.bf16.mxu0 0
        %765 = vmatpush1.bf16.msra.mxu0 0
        %766 = vmatprep.subr.bf16.mxu0 0
        %767 = vmatpush1.bf16.msra.mxu0 0
        %768 = vmatprep.subr.bf16.mxu0 0
        %769 = vmatpush1.bf16.msra.mxu0 0
        %770 = vmatprep.subr.bf16.mxu0 0
        %771 = vmatpush1.bf16.msra.mxu0 0
        %772 = vmatprep.subr.bf16.mxu0 0
        %773 = vmatpush1.bf16.msra.mxu0 0
        %774 = vmatprep.subr.bf16.mxu0 0
        %775 = vmatpush1.bf16.msra.mxu0 0
        %776 = vmatprep.subr.bf16.mxu0 0
        %777 = vmatpush1.bf16.msra.mxu0 0
        %778 = vmatprep.subr.bf16.mxu0 0
        %779 = vmatpush1.bf16.msra.mxu0 0
        %780 = vmatprep.mubr.bf16.mxu0 0
        %781 = vmatmul.mubr.bf16.gmra.mrb[0].mxu0 %v742
        %v782 = vpop.f32.mrb[0].mxu0
        %v783 = vadd.f32 0.0, %v782
        %v784 = vpop.f32.mrb[0].mxu0
        %v785 = vpop.f32.mrb[0].mxu0
        %v786 = vpop.f32.mrb[0].mxu0
        %787 = vdwg.mxu0
        %789 = vrot.lane.b32.xlu0 %v674, 120
        %v790 = vpop.permute.xlu0 %789
        %v792 = vunpack.c.l.b16 %v670
        %v793 = vpack.c.b16 %v792, %v792
        %794 = vrot.lane.b32.xlu0 %v793, 120
        %v795 = vpop.permute.xlu0 %794
        %v797 = vsel %vm675, %v790, 0
        %v800 = vsel %vm675, %v795, 0
        %802 = vmatprep.subr.bf16.mxu0 0
        %803 = vmatpush1.bf16.xpose.msra.mxu0 %v800
        %804 = vmatprep.subr.bf16.mxu0 0
        %805 = vmatpush1.bf16.xpose.msra.mxu0 0
        %806 = vmatprep.subr.bf16.mxu0 0
        %807 = vmatpush1.bf16.xpose.msra.mxu0 0
        %808 = vmatprep.subr.bf16.mxu0 0
        %809 = vmatpush1.bf16.xpose.msra.mxu0 0
        %810 = vmatprep.subr.bf16.mxu0 0
        %811 = vmatpush1.bf16.xpose.msra.mxu0 0
        %812 = vmatprep.subr.bf16.mxu0 0
        %813 = vmatpush1.bf16.xpose.msra.mxu0 0
        %814 = vmatprep.subr.bf16.mxu0 0
        %815 = vmatpush1.bf16.xpose.msra.mxu0 0
        %816 = vmatprep.subr.bf16.mxu0 0
        %817 = vmatpush1.bf16.xpose.msra.mxu0 0
        %818 = vmatprep.subr.bf16.mxu0 0
        %819 = vmatpush1.bf16.xpose.msra.mxu0 0
        %820 = vmatprep.subr.bf16.mxu0 0
        %821 = vmatpush1.bf16.xpose.msra.mxu0 0
        %822 = vmatprep.subr.bf16.mxu0 0
        %823 = vmatpush1.bf16.xpose.msra.mxu0 0
        %824 = vmatprep.subr.bf16.mxu0 0
        %825 = vmatpush1.bf16.xpose.msra.mxu0 0
        %826 = vmatprep.subr.bf16.mxu0 0
        %827 = vmatpush1.bf16.xpose.msra.mxu0 0
        %828 = vmatprep.subr.bf16.mxu0 0
        %829 = vmatpush1.bf16.xpose.msra.mxu0 0
        %830 = vmatprep.subr.bf16.mxu0 0
        %831 = vmatpush1.bf16.xpose.msra.mxu0 0
        %832 = vmatprep.subr.bf16.mxu0 0
        %833 = vmatpush1.bf16.xpose.msra.mxu0 0
        %834 = vmatprep.mubr.bf16.mxu0 0
        %835 = vmatmul.mubr.bf16.gmra.mrb[0].mxu0 %v797
        %v836 = vpop.f32.mrb[0].mxu0
        %v837 = vadd.f32 0.0, %v836
        %v838 = vpop.f32.mrb[0].mxu0
        %v839 = vpop.f32.mrb[0].mxu0
        %v840 = vpop.f32.mrb[0].mxu0
        %841 = vdwg.mxu0
        %v842 = vsel %vm727, -1e+20, %v837
        %v843 = vsel %vm675, %v842, -inf
        %844 = vmax.xlane.f32.xlu0 %v843
        %v845 = vpop.xlane.xlu0 %844
        %v846 = vsub.f32 %v842, %v845
        %v847 = vmul.f32 %v846, 1.442695
        %v848 = vpow.pop %v847
        %v849 = vsel %vm675, %v848, 0.0
        %850 = vadd.xlane.f32.xlu0 %v849
        %v851 = vpop.xlane.xlu0 %850
        %v852 = vrcp.pop %v851
        %v853 = vmul.f32 %v848, %v852
        %v854 = vpack.c.bf16 %v853, %v853
        %v856 = vunpack.c.l.b16 %v671
        %v857 = vpack.c.b16 %v856, %v856
        %858 = vrot.lane.b32.xlu0 %v857, 120
        %v859 = vpop.permute.xlu0 %858
        %v861 = vsel %vm675, %v854, 0
        %v864 = vsel %vm744, %v859, 0
        %866 = vmatprep.subr.bf16.mxu0 0
        %867 = vmatpush1.bf16.msra.mxu0 %v864
        %868 = vmatprep.subr.bf16.mxu0 0
        %869 = vmatpush1.bf16.msra.mxu0 0
        %870 = vmatprep.subr.bf16.mxu0 0
        %871 = vmatpush1.bf16.msra.mxu0 0
        %872 = vmatprep.subr.bf16.mxu0 0
        %873 = vmatpush1.bf16.msra.mxu0 0
        %874 = vmatprep.subr.bf16.mxu0 0
        %875 = vmatpush1.bf16.msra.mxu0 0
        %876 = vmatprep.subr.bf16.mxu0 0
        %877 = vmatpush1.bf16.msra.mxu0 0
        %878 = vmatprep.subr.bf16.mxu0 0
        %879 = vmatpush1.bf16.msra.mxu0 0
        %880 = vmatprep.subr.bf16.mxu0 0
        %881 = vmatpush1.bf16.msra.mxu0 0
        %882 = vmatprep.subr.bf16.mxu0 0
        %883 = vmatpush1.bf16.msra.mxu0 0
        %884 = vmatprep.subr.bf16.mxu0 0
        %885 = vmatpush1.bf16.msra.mxu0 0
        %886 = vmatprep.subr.bf16.mxu0 0
        %887 = vmatpush1.bf16.msra.mxu0 0
        %888 = vmatprep.subr.bf16.mxu0 0
        %889 = vmatpush1.bf16.msra.mxu0 0
        %890 = vmatprep.subr.bf16.mxu0 0
        %891 = vmatpush1.bf16.msra.mxu0 0
        %892 = vmatprep.subr.bf16.mxu0 0
        %893 = vmatpush1.bf16.msra.mxu0 0
        %894 = vmatprep.subr.bf16.mxu0 0
        %895 = vmatpush1.bf16.msra.mxu0 0
        %896 = vmatprep.subr.bf16.mxu0 0
        %897 = vmatpush1.bf16.msra.mxu0 0
        %898 = vmatprep.mubr.bf16.mxu0 0
        %899 = vmatmul.mubr.bf16.gmra.mrb[0].mxu0 %v861
        %v900 = vpop.f32.mrb[0].mxu0
        %v901 = vadd.f32 0.0, %v900
        %v902 = vpop.f32.mrb[0].mxu0
        %v903 = vpop.f32.mrb[0].mxu0
        %v904 = vpop.f32.mrb[0].mxu0
        %905 = vdwg.mxu0
        %906 = vrot.lane.b32.xlu0 %v674, 112
        %v907 = vpop.permute.xlu0 %906
        %908 = vrot.lane.b32.xlu0 %v793, 112
        %v909 = vpop.permute.xlu0 %908
        %v911 = vsel %vm675, %v907, 0
        %v914 = vsel %vm675, %v909, 0
        %916 = vmatprep.subr.bf16.mxu0 0
        %917 = vmatpush1.bf16.xpose.msra.mxu0 %v914
        %918 = vmatprep.subr.bf16.mxu0 0
        %919 = vmatpush1.bf16.xpose.msra.mxu0 0
        %920 = vmatprep.subr.bf16.mxu0 0
        %921 = vmatpush1.bf16.xpose.msra.mxu0 0
        %922 = vmatprep.subr.bf16.mxu0 0
        %923 = vmatpush1.bf16.xpose.msra.mxu0 0
        %924 = vmatprep.subr.bf16.mxu0 0
        %925 = vmatpush1.bf16.xpose.msra.mxu0 0
        %926 = vmatprep.subr.bf16.mxu0 0
        %927 = vmatpush1.bf16.xpose.msra.mxu0 0
        %928 = vmatprep.subr.bf16.mxu0 0
        %929 = vmatpush1.bf16.xpose.msra.mxu0 0
        %930 = vmatprep.subr.bf16.mxu0 0
        %931 = vmatpush1.bf16.xpose.msra.mxu0 0
        %932 = vmatprep.subr.bf16.mxu0 0
        %933 = vmatpush1.bf16.xpose.msra.mxu0 0
        %934 = vmatprep.subr.bf16.mxu0 0
        %935 = vmatpush1.bf16.xpose.msra.mxu0 0
        %936 = vmatprep.subr.bf16.mxu0 0
        %937 = vmatpush1.bf16.xpose.msra.mxu0 0
        %938 = vmatprep.subr.bf16.mxu0 0
        %939 = vmatpush1.bf16.xpose.msra.mxu0 0
        %940 = vmatprep.subr.bf16.mxu0 0
        %941 = vmatpush1.bf16.xpose.msra.mxu0 0
        %942 = vmatprep.subr.bf16.mxu0 0
        %943 = vmatpush1.bf16.xpose.msra.mxu0 0
        %944 = vmatprep.subr.bf16.mxu0 0
        %945 = vmatpush1.bf16.xpose.msra.mxu0 0
        %946 = vmatprep.subr.bf16.mxu0 0
        %947 = vmatpush1.bf16.xpose.msra.mxu0 0
        %948 = vmatprep.mubr.bf16.mxu0 0
        %949 = vmatmul.mubr.bf16.gmra.mrb[0].mxu0 %v911
        %v950 = vpop.f32.mrb[0].mxu0
        %v951 = vadd.f32 0.0, %v950
        %v952 = vpop.f32.mrb[0].mxu0
        %v953 = vpop.f32.mrb[0].mxu0
        %v954 = vpop.f32.mrb[0].mxu0
        %955 = vdwg.mxu0
        %v956 = vsel %vm727, -1e+20, %v951
        %v957 = vsel %vm675, %v956, -inf
        %958 = vmax.xlane.f32.xlu0 %v957
        %v959 = vpop.xlane.xlu0 %958
        %v960 = vsub.f32 %v956, %v959
        %v961 = vmul.f32 %v960, 1.442695
        %v962 = vpow.pop %v961
        %v963 = vsel %vm675, %v962, 0.0
        %964 = vadd.xlane.f32.xlu0 %v963
        %v965 = vpop.xlane.xlu0 %964
        %v966 = vrcp.pop %v965
        %v967 = vmul.f32 %v962, %v966
        %v968 = vpack.c.bf16 %v967, %v967
        %969 = vrot.lane.b32.xlu0 %v857, 112
        %v970 = vpop.permute.xlu0 %969
        %v972 = vsel %vm675, %v968, 0
        %v975 = vsel %vm744, %v970, 0
        %977 = vmatprep.subr.bf16.mxu0 0
        %978 = vmatpush1.bf16.msra.mxu0 %v975
        %979 = vmatprep.subr.bf16.mxu0 0
        %980 = vmatpush1.bf16.msra.mxu0 0
        %981 = vmatprep.subr.bf16.mxu0 0
        %982 = vmatpush1.bf16.msra.mxu0 0
        %983 = vmatprep.subr.bf16.mxu0 0
        %984 = vmatpush1.bf16.msra.mxu0 0
        %985 = vmatprep.subr.bf16.mxu0 0
        %986 = vmatpush1.bf16.msra.mxu0 0
        %987 = vmatprep.subr.bf16.mxu0 0
        %988 = vmatpush1.bf16.msra.mxu0 0
        %989 = vmatprep.subr.bf16.mxu0 0
        %990 = vmatpush1.bf16.msra.mxu0 0
        %991 = vmatprep.subr.bf16.mxu0 0
        %992 = vmatpush1.bf16.msra.mxu0 0
        %993 = vmatprep.subr.bf16.mxu0 0
        %994 = vmatpush1.bf16.msra.mxu0 0
        %995 = vmatprep.subr.bf16.mxu0 0
        %996 = vmatpush1.bf16.msra.mxu0 0
        %997 = vmatprep.subr.bf16.mxu0 0
        %998 = vmatpush1.bf16.msra.mxu0 0
        %999 = vmatprep.subr.bf16.mxu0 0
        %1000 = vmatpush1.bf16.msra.mxu0 0
        %1001 = vmatprep.subr.bf16.mxu0 0
        %1002 = vmatpush1.bf16.msra.mxu0 0
        %1003 = vmatprep.subr.bf16.mxu0 0
        %1004 = vmatpush1.bf16.msra.mxu0 0
        %1005 = vmatprep.subr.bf16.mxu0 0
        %1006 = vmatpush1.bf16.msra.mxu0 0
        %1007 = vmatprep.subr.bf16.mxu0 0
        %1008 = vmatpush1.bf16.msra.mxu0 0
        %1009 = vmatprep.mubr.bf16.mxu0 0
        %1010 = vmatmul.mubr.bf16.gmra.mrb[0].mxu0 %v972
        %v1011 = vpop.f32.mrb[0].mxu0
        %v1012 = vadd.f32 0.0, %v1011
        %v1013 = vpop.f32.mrb[0].mxu0
        %v1014 = vpop.f32.mrb[0].mxu0
        %v1015 = vpop.f32.mrb[0].mxu0
        %1016 = vdwg.mxu0
        %1017 = vrot.lane.b32.xlu0 %v674, 104
        %v1018 = vpop.permute.xlu0 %1017
        %1019 = vrot.lane.b32.xlu0 %v793, 104
        %v1020 = vpop.permute.xlu0 %1019
        %v1022 = vsel %vm675, %v1018, 0
        %v1025 = vsel %vm675, %v1020, 0
        %1027 = vmatprep.subr.bf16.mxu0 0
        %1028 = vmatpush1.bf16.xpose.msra.mxu0 %v1025
        %1029 = vmatprep.subr.bf16.mxu0 0
        %1030 = vmatpush1.bf16.xpose.msra.mxu0 0
        %1031 = vmatprep.subr.bf16.mxu0 0
        %1032 = vmatpush1.bf16.xpose.msra.mxu0 0
        %1033 = vmatprep.subr.bf16.mxu0 0
        %1034 = vmatpush1.bf16.xpose.msra.mxu0 0
        %1035 = vmatprep.subr.bf16.mxu0 0
        %1036 = vmatpush1.bf16.xpose.msra.mxu0 0
        %1037 = vmatprep.subr.bf16.mxu0 0
        %1038 = vmatpush1.bf16.xpose.msra.mxu0 0
        %1039 = vmatprep.subr.bf16.mxu0 0
        %1040 = vmatpush1.bf16.xpose.msra.mxu0 0
        %1041 = vmatprep.subr.bf16.mxu0 0
        %1042 = vmatpush1.bf16.xpose.msra.mxu0 0
        %1043 = vmatprep.subr.bf16.mxu0 0
        %1044 = vmatpush1.bf16.xpose.msra.mxu0 0
        %1045 = vmatprep.subr.bf16.mxu0 0
        %1046 = vmatpush1.bf16.xpose.msra.mxu0 0
        %1047 = vmatprep.subr.bf16.mxu0 0
        %1048 = vmatpush1.bf16.xpose.msra.mxu0 0
        %1049 = vmatprep.subr.bf16.mxu0 0
        %1050 = vmatpush1.bf16.xpose.msra.mxu0 0
        %1051 = vmatprep.subr.bf16.mxu0 0
        %1052 = vmatpush1.bf16.xpose.msra.mxu0 0
        %1053 = vmatprep.subr.bf16.mxu0 0
        %1054 = vmatpush1.bf16.xpose.msra.mxu0 0
        %1055 = vmatprep.subr.bf16.mxu0 0
        %1056 = vmatpush1.bf16.xpose.msra.mxu0 0
        %1057 = vmatprep.subr.bf16.mxu0 0
        %1058 = vmatpush1.bf16.xpose.msra.mxu0 0
        %1059 = vmatprep.mubr.bf16.mxu0 0
        %1060 = vmatmul.mubr.bf16.gmra.mrb[0].mxu0 %v1022
        %v1061 = vpop.f32.mrb[0].mxu0
        %v1062 = vadd.f32 0.0, %v1061
        %v1063 = vpop.f32.mrb[0].mxu0
        %v1064 = vpop.f32.mrb[0].mxu0
        %v1065 = vpop.f32.mrb[0].mxu0
        %1066 = vdwg.mxu0
        %v1067 = vsel %vm727, -1e+20, %v1062
        %v1068 = vsel %vm675, %v1067, -inf
        %1069 = vmax.xlane.f32.xlu0 %v1068
        %v1070 = vpop.xlane.xlu0 %1069
        %v1071 = vsub.f32 %v1067, %v1070
        %v1072 = vmul.f32 %v1071, 1.442695
        %v1073 = vpow.pop %v1072
        %v1074 = vsel %vm675, %v1073, 0.0
        %1075 = vadd.xlane.f32.xlu0 %v1074
        %v1076 = vpop.xlane.xlu0 %1075
        %v1077 = vrcp.pop %v1076
        %v1078 = vmul.f32 %v1073, %v1077
        %v1079 = vpack.c.bf16 %v1078, %v1078
        %1080 = vrot.lane.b32.xlu0 %v857, 104
        %v1081 = vpop.permute.xlu0 %1080
        %v1083 = vsel %vm675, %v1079, 0
        %v1086 = vsel %vm744, %v1081, 0
        %1088 = vmatprep.subr.bf16.mxu0 0
        %1089 = vmatpush1.bf16.msra.mxu0 %v1086
        %1090 = vmatprep.subr.bf16.mxu0 0
        %1091 = vmatpush1.bf16.msra.mxu0 0
        %1092 = vmatprep.subr.bf16.mxu0 0
        %1093 = vmatpush1.bf16.msra.mxu0 0
        %1094 = vmatprep.subr.bf16.mxu0 0
        %1095 = vmatpush1.bf16.msra.mxu0 0
        %1096 = vmatprep.subr.bf16.mxu0 0
        %1097 = vmatpush1.bf16.msra.mxu0 0
        %1098 = vmatprep.subr.bf16.mxu0 0
        %1099 = vmatpush1.bf16.msra.mxu0 0
        %1100 = vmatprep.subr.bf16.mxu0 0
        %1101 = vmatpush1.bf16.msra.mxu0 0
        %1102 = vmatprep.subr.bf16.mxu0 0
        %1103 = vmatpush1.bf16.msra.mxu0 0
        %1104 = vmatprep.subr.bf16.mxu0 0
        %1105 = vmatpush1.bf16.msra.mxu0 0
        %1106 = vmatprep.subr.bf16.mxu0 0
        %1107 = vmatpush1.bf16.msra.mxu0 0
        %1108 = vmatprep.subr.bf16.mxu0 0
        %1109 = vmatpush1.bf16.msra.mxu0 0
        %1110 = vmatprep.subr.bf16.mxu0 0
        %1111 = vmatpush1.bf16.msra.mxu0 0
        %1112 = vmatprep.subr.bf16.mxu0 0
        %1113 = vmatpush1.bf16.msra.mxu0 0
        %1114 = vmatprep.subr.bf16.mxu0 0
        %1115 = vmatpush1.bf16.msra.mxu0 0
        %1116 = vmatprep.subr.bf16.mxu0 0
        %1117 = vmatpush1.bf16.msra.mxu0 0
        %1118 = vmatprep.subr.bf16.mxu0 0
        %1119 = vmatpush1.bf16.msra.mxu0 0
        %1120 = vmatprep.mubr.bf16.mxu0 0
        %1121 = vmatmul.mubr.bf16.gmra.mrb[0].mxu0 %v1083
        %v1122 = vpop.f32.mrb[0].mxu0
        %v1123 = vadd.f32 0.0, %v1122
        %v1124 = vpop.f32.mrb[0].mxu0
        %v1125 = vpop.f32.mrb[0].mxu0
        %v1126 = vpop.f32.mrb[0].mxu0
        %1127 = vdwg.mxu0
        %1129 = vrot.lane.b32.xlu0 %v901, 8
        %v1130 = vpop.permute.xlu0 %1129
        %1133 = vrot.lane.b32.xlu0 %v1012, 16
        %v1134 = vpop.permute.xlu0 %1133
        %1137 = vrot.lane.b32.xlu0 %v1123, 24
        %v1138 = vpop.permute.xlu0 %1137
        %v1140 = vsel %vm675, %v783, %v1130
        %vm1141 = vcmask 130048
        %v1142 = vsel %vm1141, %v1140, %v1134
        %vm1143 = vcmask 195584
        %v1144 = vsel %vm1143, %v1142, %v1138
        %v1145 = vpack.c.bf16 %v1144, %v1144
        %v1146 = vld [vmem:[#allocation12] sm:$0xf]
        %v1147 = vld [vmem:[#allocation12 + $0x4] sm:$0xf]
        %v1148 = vld [vmem:[#allocation12 + $0x8] sm:$0xf]
        %v1149 = vld [vmem:[#allocation12 + $0xc] sm:$0xf]
        %v1150 = vld [vmem:[#allocation13] sm:$0x1]
        %v1152 = vlaneseq
        %v1153 = vshrl.u32 %v1152, 7
        %v1154 = vsub.s32 0, %v1153
        %v1155 = vrot.slane %v1150, %v1154
        %v1161 = vunpack.c.l.b16 %v1146
        %v1162 = vunpack.c.l.b16 %v1147
        %v1163 = vunpack.c.l.b16 %v1148
        %v1164 = vunpack.c.l.b16 %v1149
        %v1165 = vpack.c.b16 %v1162, %v1161
        %v1166 = vpack.c.b16 %v1164, %v1163
        %v1170 = vsel %vm626, %v1145, 0
        %1172 = vmatprep.subr.bf16.mxu0 0
        %1173 = vmatpush1.bf16.msra.mxu0 %v1165
        %1174 = vmatprep.subr.bf16.mxu0 0
        %1175 = vmatpush1.bf16.msra.mxu0 %v1166
        %1176 = vmatprep.subr.bf16.mxu0 0
        %1177 = vmatpush1.bf16.msra.mxu0 0
        %1178 = vmatprep.subr.bf16.mxu0 0
        %1179 = vmatpush1.bf16.msra.mxu0 0
        %1180 = vmatprep.subr.bf16.mxu0 0
        %1181 = vmatpush1.bf16.msra.mxu0 0
        %1182 = vmatprep.subr.bf16.mxu0 0
        %1183 = vmatpush1.bf16.msra.mxu0 0
        %1184 = vmatprep.subr.bf16.mxu0 0
        %1185 = vmatpush1.bf16.msra.mxu0 0
        %1186 = vmatprep.subr.bf16.mxu0 0
        %1187 = vmatpush1.bf16.msra.mxu0 0
        %1188 = vmatprep.subr.bf16.mxu0 0
        %1189 = vmatpush1.bf16.msra.mxu0 0
        %1190 = vmatprep.subr.bf16.mxu0 0
        %1191 = vmatpush1.bf16.msra.mxu0 0
        %1192 = vmatprep.subr.bf16.mxu0 0
        %1193 = vmatpush1.bf16.msra.mxu0 0
        %1194 = vmatprep.subr.bf16.mxu0 0
        %1195 = vmatpush1.bf16.msra.mxu0 0
        %1196 = vmatprep.subr.bf16.mxu0 0
        %1197 = vmatpush1.bf16.msra.mxu0 0
        %1198 = vmatprep.subr.bf16.mxu0 0
        %1199 = vmatpush1.bf16.msra.mxu0 0
        %1200 = vmatprep.subr.bf16.mxu0 0
        %1201 = vmatpush1.bf16.msra.mxu0 0
        %1202 = vmatprep.subr.bf16.mxu0 0
        %1203 = vmatpush1.bf16.msra.mxu0 0
        %1204 = vmatprep.mubr.bf16.mxu0 0
        %1205 = vmatmul.mubr.bf16.gmra.mrb[0].mxu0 %v1170
        %v1206 = vpop.f32.mrb[0].mxu0
        %v1207 = vadd.f32 %v1155, %v1206
        %v1208 = vpop.f32.mrb[0].mxu0
        %v1209 = vpop.f32.mrb[0].mxu0
        %v1210 = vpop.f32.mrb[0].mxu0
        %1211 = vdwg.mxu0
        %v1212 = vadd.f32 %v1207, %v609
        %v1213 = vsel %vm626, %v1212, 0.0
        %1214 = vadd.xlane.f32.xlu0 %v1213
        %v1215 = vpop.xlane.xlu0 %1214
        %v1216 = vrcp.pop 32.0
        %v1217 = vmul.f32 %v1215, %v1216
        %v1218 = vsub.f32 %v1212, %v1217
        %v1219 = vmul.f32 %v1218, %v1218
        %v1220 = vsel %vm626, %v1219, 0.0
        %1221 = vadd.xlane.f32.xlu0 %v1220
        %v1222 = vpop.xlane.xlu0 %1221
        %v1223 = vmul.f32 %v1222, %v1216
        %v1224 = vadd.f32 %v1223, 1e-05
        %v1225 = vrsqrt.pop %v1224
        %v1226 = vmul.f32 %v1218, %v1225
        %v1227 = vld [vmem:[#allocation15] sm:$0x1]
        %v1229 = vlaneseq
        %v1230 = vshrl.u32 %v1229, 7
        %v1231 = vsub.s32 0, %v1230
        %v1232 = vrot.slane %v1227, %v1231
        %v1234 = vmul.f32 %v1226, %v1232
        %v1235 = vld [vmem:[#allocation16] sm:$0x1]
        %v1237 = vlaneseq
        %v1238 = vshrl.u32 %v1237, 7
        %v1239 = vsub.s32 0, %v1238
        %v1240 = vrot.slane %v1235, %v1239
        %v1242 = vadd.f32 %v1234, %v1240
        %v1243 = vpack.c.bf16 %v1242, %v1242
        %vm1244 = vcmask 257024
        %1245 = vst.msk [vmem:[%s472] sm:$0xf] %vm1244, %v1243
        %s1246 = sand.u32 %s238, 1
        %s1247 = scalar_lea.sflag [#allocation6], %s1246
        %s1248 = sand.u32 %s238, 1
        %s1249 = smul.addr %s1248, 4
        %s1250 = scalar_lea.vmem [#allocation18], %s1249
        // Predicated region
        $region89: #{_lambda_.9} parent=51 // pred_check
          %p1251 = pneg %p248
        $region90: #{_lambda_.9} parent=51 // pred_check_branch
          %1253 = sbr.rel (%p1251) target = $region92
        $region91: #{_lambda_.9} parent=51 // pred_region
          %s1255 = ssub.s32 64, 64
          %1256 = vsyncadd %s1247, %s1255
          %s1257 = sadd.s32 %s36, %s35
          %s1258 = smul.addr %s1257, 64
          %s1259 = scalar_lea.hbm %s8, %s1258
          %s1261 = sshll.u32 %s1250, 4
          %s1262 = int_to_ptr.vmem [resolvable:$true] %s1261
          %1264 = dma.vmem_to_hbm [thread:$0]  %s1262, 64, %s1259, %s1247
        $region92: #{_lambda_.9} parent=51 // pred_fallthru
          _
      $region52: #{_lambda_.9} parent=5 // pred_fallthru
        _
      %p1265 = scmp.le.s32.totalorder 2, %s26
      // Predicated region
      $region93: #{_lambda_.9} parent=5 // pred_check
        %p1266 = pneg %p1265
      $region94: #{_lambda_.9} parent=5 // pred_check_branch
        %1268 = sbr.rel (%p1266) target = $region96
      $region95: #{_lambda_.9} parent=5 // pred_region
        %s1269 = ssub.s32 %s26, 2
        // Predicated region
        $region97: #{_lambda_.9} parent=95 // pred_check
          %p1270 = pneg %p254
        $region98: #{_lambda_.9} parent=95 // pred_check_branch
          %1272 = sbr.rel (%p1270) target = $region100
        $region99: #{_lambda_.9} parent=95 // pred_region
          %s1273 = sand.u32 %s239, 1
          %s1274 = scalar_lea.sflag [#allocation6], %s1273
          %s1275 = sand.u32 %s239, 1
          %s1276 = smul.addr %s1275, 4
          %s1277 = scalar_lea.vmem [#allocation18], %s1276
          %1278 = dma.done %s1274, 64
        $region100: #{_lambda_.9} parent=95 // pred_fallthru
          _
      $region96: #{_lambda_.9} parent=5 // pred_fallthru
        _
    $region6: #{_lambda_.9} parent=1 // loop_footer
      %s30 = sadd.s32 1, %s26
    $region7: #{_lambda_.9} parent=1 // loop_footer_branch
      %25 = sbr.rel target = $region3
    $region8: #{_lambda_.9} parent=1 // loop_exit
      _
    %1279 = vsyncpa [#allocation5], 1
    %s1280 = scalar_lea.sflag [#allocation5], 1
    %1281 = vsyncpa %s1280, 1
    %1282 = vsyncpa [#allocation8], 1
    %s1283 = scalar_lea.sflag [#allocation8], 1
    %1284 = vsyncpa %s1283, 1
    %1285 = vsyncpa [#allocation11], 1
    %1286 = vsyncpa [#allocation14], 1
    %1287 = vsyncpa [#allocation17], 1
    %1288 = vsyncpa [#allocation6], 1
    %s1289 = scalar_lea.sflag [#allocation6], 1
    %1290 = vsyncpa %s1289, 1

</llo_original>
